<compile_context>
chip_gen: v6e
topology: v6e:2x2x1
jax: 0.10.0
libtpu: 0.0.40
codegen_flags: <defaults>
</compile_context>

<pallas_src>
import math
import jax
import jax.numpy as jnp
from jax.experimental import pallas as pl
from jax.experimental.pallas import tpu as pltpu

# ---------------- model dimensions (small, consistent with the module) -------
B = 2        # batch
S = 8        # max sequence length
D = 32       # embedding_dim == input_raw_embedding_dim
H = 4        # num_heads
DH = D // H  # head dim
F = 64       # dim_feedforward
L = 2        # num_layers
VOCAB = 100  # tokenizer.vocab_size
BS = B * S   # flattened token axis

EPS = 1e-5
NEG_INF = -1e30
SQRT_D = math.sqrt(D)
MM_DTYPE = jnp.bfloat16   # matmul operand dtype (MXU-native); accumulation is f32


# ---------------------------- kernel helpers ---------------------------------
def _mm(a, b):
    """MXU matmul: bf16 operands, f32 accumulation."""
    return jnp.dot(a.astype(MM_DTYPE), b.astype(MM_DTYPE),
                   preferred_element_type=jnp.float32)


def _ln(x, g, b):
    mu = jnp.mean(x, axis=-1, keepdims=True)
    var = jnp.mean((x - mu) ** 2, axis=-1, keepdims=True)
    return (x - mu) * jax.lax.rsqrt(var + EPS) * g + b


# ---------------------- single fused forward-pass kernel ---------------------
def _fused_encoder_kernel(
        tok_ref, pe_ref, bias_ref,
        wq_ref, bq_ref, wk_ref, bk_ref, wv_ref, bv_ref, wo_ref, bo_ref,
        w1_ref, b1_ref, w2_ref, b2_ref,
        g1_ref, be1_ref, g2_ref, be2_ref,
        gf_ref, bf_ref,
        emb_ref, pos_ref, enc_ref):
    # --- embedding scale + positional encoding -------------------------------
    x = tok_ref[...] * SQRT_D              # (BS, D)  input_embedded
    emb_ref[...] = x                       # memory['seq_embedded']
    x = x + pe_ref[...]                    # + PE (zeros when include_position=False)
    pos_ref[...] = x                       # memory['seq_embedded_positioned']

    # Combined (batch block-diagonal + key padding) additive bias over the
    # flattened token axis.  Loaded ONCE, reused by every head of every layer.
    bias = bias_ref[...]                   # (BS, BS)
    scale = 1.0 / math.sqrt(DH)

    # --- L post-LN transformer encoder layers (unrolled; weights in VMEM) ----
    for l in range(L):
        attn = jnp.zeros((BS, D), jnp.float32)
        for h in range(H):                 # per-head weights -> no lane slicing
            qh = _mm(x, wq_ref[l, h]) + bq_ref[l, h]     # (BS, DH)
            kh = _mm(x, wk_ref[l, h]) + bk_ref[l, h]
            vh = _mm(x, wv_ref[l, h]) + bv_ref[l, h]
            s = jax.lax.dot_general(                     # q @ k^T over all BS keys
                qh.astype(MM_DTYPE), kh.astype(MM_DTYPE),
                (((1,), (1,)), ((), ())),
                preferred_element_type=jnp.float32)      # (BS, BS)
            s = s * scale + bias                         # masks cross-batch + padding
            s = s - jnp.max(s, axis=-1, keepdims=True)
            p = jnp.exp(s)
            p = p * pl.reciprocal(jnp.sum(p, axis=-1, keepdims=True), approx=True)
            ctx = _mm(p, vh)                             # (BS, DH)
            attn = attn + _mm(ctx, wo_ref[l, h])         # sum_h ctx_h @ wo_h
        # residual + LayerNorm1 (post-LN)
        y = _ln(x + attn + bo_ref[l], g1_ref[l], be1_ref[l])
        # feed-forward (relu)
        hh = jnp.maximum(_mm(y, w1_ref[l]) + b1_ref[l], 0.0)
        ff = _mm(hh, w2_ref[l]) + b2_ref[l]
        # residual + LayerNorm2
        x = _ln(y + ff, g2_ref[l], be2_ref[l])

    # --- final nn.LayerNorm ---------------------------------------------------
    enc_ref[...] = _ln(x, gf_ref[...], bf_ref[...])


def fused_encoder(tok_emb, pe_tiled, attn_bias, sp, final_g, final_b):
    vmem = pl.BlockSpec(memory_space=pltpu.MemorySpace.VMEM)
    n_in = 21
    out_sds = jax.ShapeDtypeStruct((BS, D), jnp.float32)
    return pl.pallas_call(
        _fused_encoder_kernel,
        out_shape=(out_sds, out_sds, out_sds),   # seq_embedded, positioned, encoding
        in_specs=[vmem] * n_in,
        out_specs=(vmem, vmem, vmem),
    )(tok_emb, pe_tiled, attn_bias,
      sp["wq"], sp["bq"], sp["wk"], sp["bk"], sp["wv"], sp["bv"],
      sp["wo"], sp["bo"], sp["w1"], sp["b1"], sp["w2"], sp["b2"],
      sp["g1"], sp["be1"], sp["g2"], sp["be2"],
      final_g, final_b)


# ------------------------------ parameter setup --------------------------------
def sinusoidal_pe(seq_len, dim):
    pos = jnp.arange(seq_len, dtype=jnp.float32)[:, None]
    div = jnp.exp(jnp.arange(0, dim, 2, dtype=jnp.float32) * (-math.log(10000.0) / dim))
    pe = jnp.zeros((seq_len, dim), jnp.float32)
    pe = pe.at[:, 0::2].set(jnp.sin(pos * div))
    pe = pe.at[:, 1::2].set(jnp.cos(pos * div))
    return pe


def xavier_uniform(key, shape):
    fan_in, fan_out = shape[-2], shape[-1]
    bound = math.sqrt(6.0 / (fan_in + fan_out))
    return jax.random.uniform(key, shape, jnp.float32, -bound, bound)


def init_params(key):
    keys = jax.random.split(key, 2 + L * 8)
    params = {
        "emb": xavier_uniform(keys[0], (VOCAB, D)),     # nn.Embedding, xavier init
        "final_g": jnp.ones((1, D), jnp.float32),
        "final_b": jnp.zeros((1, D), jnp.float32),
        "layers": [],
    }
    ki = 2
    for _ in range(L):
        lp = {
            "wq": xavier_uniform(keys[ki + 0], (D, D)), "bq": jnp.zeros((1, D), jnp.float32),
            "wk": xavier_uniform(keys[ki + 1], (D, D)), "bk": jnp.zeros((1, D), jnp.float32),
            "wv": xavier_uniform(keys[ki + 2], (D, D)), "bv": jnp.zeros((1, D), jnp.float32),
            "wo": xavier_uniform(keys[ki + 3], (D, D)), "bo": jnp.zeros((1, D), jnp.float32),
            "w1": xavier_uniform(keys[ki + 4], (D, F)), "b1": jnp.zeros((1, F), jnp.float32),
            "w2": xavier_uniform(keys[ki + 5], (F, D)), "b2": jnp.zeros((1, D), jnp.float32),
            "g1": jnp.ones((1, D), jnp.float32), "be1": jnp.zeros((1, D), jnp.float32),
            "g2": jnp.ones((1, D), jnp.float32), "be2": jnp.zeros((1, D), jnp.float32),
        }
        params["layers"].append(lp)
        ki += 8
    return params


def stack_layer_params(layers):
    """Stack per-layer weights along a leading L axis and pre-split attention
    projections per head HOST-side (kernel never lane-slices / concatenates)."""
    def split_in_w(w):   # (D, D) -> (H, D, DH): head h uses output cols h*DH:(h+1)*DH
        return w.reshape(D, H, DH).transpose(1, 0, 2)

    def split_in_b(b):   # (1, D) -> (H, 1, DH)
        return b.reshape(1, H, DH).transpose(1, 0, 2)

    def split_out_w(w):  # (D, D) -> (H, DH, D): head h uses input rows h*DH:(h+1)*DH
        return w.reshape(H, DH, D)

    ident = lambda w: w
    stk = lambda fn, name: jnp.stack([fn(lp[name]) for lp in layers], axis=0)
    return {
        "wq": stk(split_in_w, "wq"), "bq": stk(split_in_b, "bq"),
        "wk": stk(split_in_w, "wk"), "bk": stk(split_in_b, "bk"),
        "wv": stk(split_in_w, "wv"), "bv": stk(split_in_b, "bv"),
        "wo": stk(split_out_w, "wo"), "bo": stk(ident, "bo"),
        "w1": stk(ident, "w1"), "b1": stk(ident, "b1"),
        "w2": stk(ident, "w2"), "b2": stk(ident, "b2"),
        "g1": stk(ident, "g1"), "be1": stk(ident, "be1"),
        "g2": stk(ident, "g2"), "be2": stk(ident, "be2"),
    }


# ------------------------------- forward ---------------------------------------
def sequence_encoder_forward(params, input_seq, input_seq_len, include_position=True):
    """Mirrors SequenceEncoder.forward (no pretrained encoder, eval mode)."""
    memory = {}
    padding_mask = jnp.arange(S)[None, :] >= input_seq_len[:, None]          # (B, S) bool
    memory["encoding_mask"] = padding_mask

    # Additive attention bias over the flattened (B*S) token axis: a query may
    # only attend to non-padded keys of the SAME batch element.  Built once
    # host-side; replaces the per-head compare+select inside the kernel.
    valid_key = (~padding_mask).reshape(BS)                                  # (BS,)
    row_batch = jnp.arange(BS) // S
    same_batch = row_batch[:, None] == row_batch[None, :]                    # (BS, BS)
    attn_bias = jnp.where(same_batch & valid_key[None, :], 0.0, NEG_INF
                          ).astype(jnp.float32)

    # Embedding lookup (table gather stays in plain JAX: glue, not kernel work).
    tok_emb = jnp.take(params["emb"], input_seq.reshape(BS), axis=0
                       ).astype(jnp.float32)                                 # (BS, D)

    pe_tiled = jnp.tile(sinusoidal_pe(S, D), (B, 1))                         # (BS, D)
    if not include_position:
        pe_tiled = jnp.zeros_like(pe_tiled)

    sp = stack_layer_params(params["layers"])
    emb_scaled, emb_pos, enc = fused_encoder(
        tok_emb, pe_tiled, attn_bias, sp, params["final_g"], params["final_b"])

    memory["seq_embedded"] = emb_scaled.reshape(B, S, D)
    memory["seq_embedded_positioned"] = emb_pos.reshape(B, S, D)
    return enc.reshape(B, S, D), memory


# --------------------------------- main -----------------------------------------
if __name__ == "__main__":
    key = jax.random.PRNGKey(0)
    k_param, k_tok, k_len = jax.random.split(key, 3)

    params = init_params(k_param)
    input_seq = jax.random.randint(k_tok, (B, S), 0, VOCAB, dtype=jnp.int32)
    input_seq_len = jnp.array([S, S - 3], dtype=jnp.int32)   # second sequence padded

    encoding, memory = sequence_encoder_forward(params, input_seq, input_seq_len)
    encoding = jax.block_until_ready(encoding)

    assert encoding.shape == (B, S, D)
    assert memory["encoding_mask"].shape == (B, S)
    assert memory["seq_embedded"].shape == (B, S, D)
    assert memory["seq_embedded_positioned"].shape == (B, S, D)
    assert bool(jnp.all(jnp.isfinite(encoding)))
    print("KERNEL_OK")
</pallas_src>

<mosaic_0001>
module attributes {stable_mosaic.version = 11 : i64} {
  func.func @_fused_encoder_kernel(%arg0: memref<16x32xf32, #tpu.memory_space<vmem>>, %arg1: memref<16x32xf32, #tpu.memory_space<vmem>>, %arg2: memref<16x16xf32, #tpu.memory_space<vmem>>, %arg3: memref<2x4x32x8xf32, #tpu.memory_space<vmem>>, %arg4: memref<2x4x1x8xf32, #tpu.memory_space<vmem>>, %arg5: memref<2x4x32x8xf32, #tpu.memory_space<vmem>>, %arg6: memref<2x4x1x8xf32, #tpu.memory_space<vmem>>, %arg7: memref<2x4x32x8xf32, #tpu.memory_space<vmem>>, %arg8: memref<2x4x1x8xf32, #tpu.memory_space<vmem>>, %arg9: memref<2x4x8x32xf32, #tpu.memory_space<vmem>>, %arg10: memref<2x1x32xf32, #tpu.memory_space<vmem>>, %arg11: memref<2x32x64xf32, #tpu.memory_space<vmem>>, %arg12: memref<2x1x64xf32, #tpu.memory_space<vmem>>, %arg13: memref<2x64x32xf32, #tpu.memory_space<vmem>>, %arg14: memref<2x1x32xf32, #tpu.memory_space<vmem>>, %arg15: memref<2x1x32xf32, #tpu.memory_space<vmem>>, %arg16: memref<2x1x32xf32, #tpu.memory_space<vmem>>, %arg17: memref<2x1x32xf32, #tpu.memory_space<vmem>>, %arg18: memref<2x1x32xf32, #tpu.memory_space<vmem>>, %arg19: memref<1x32xf32, #tpu.memory_space<vmem>>, %arg20: memref<1x32xf32, #tpu.memory_space<vmem>>, %arg21: memref<16x32xf32, #tpu.memory_space<vmem>>, %arg22: memref<16x32xf32, #tpu.memory_space<vmem>>, %arg23: memref<16x32xf32, #tpu.memory_space<vmem>>) attributes {dimension_semantics = [], scalar_prefetch = 0 : i64, scratch_operands = 0 : i64, tpu.core_type = #tpu.core_type<tc>} {
    %c0 = arith.constant 0 : index
    %c0_0 = arith.constant 0 : index
    %0 = vector.load %arg0[%c0, %c0_0] : memref<16x32xf32, #tpu.memory_space<vmem>>, vector<16x32xf32>
    %cst = arith.constant 5.65685415 : f32
    %1 = vector.broadcast %cst : f32 to vector<16x32xf32>
    %2 = arith.mulf %0, %1 : vector<16x32xf32>
    %c0_1 = arith.constant 0 : index
    %c0_2 = arith.constant 0 : index
    %3 = vector.load %arg21[%c0_1, %c0_2] : memref<16x32xf32, #tpu.memory_space<vmem>>, vector<16x32xf32>
    tpu.vector_store %arg21[%c0_1, %c0_2], %2 {strides = array<i32>} : memref<16x32xf32, #tpu.memory_space<vmem>>, vector<16x32xf32>,
    %c0_3 = arith.constant 0 : index
    %c0_4 = arith.constant 0 : index
    %4 = vector.load %arg1[%c0_3, %c0_4] : memref<16x32xf32, #tpu.memory_space<vmem>>, vector<16x32xf32>
    %5 = arith.addf %2, %4 : vector<16x32xf32>
    %c0_5 = arith.constant 0 : index
    %c0_6 = arith.constant 0 : index
    %6 = vector.load %arg22[%c0_5, %c0_6] : memref<16x32xf32, #tpu.memory_space<vmem>>, vector<16x32xf32>
    tpu.vector_store %arg22[%c0_5, %c0_6], %5 {strides = array<i32>} : memref<16x32xf32, #tpu.memory_space<vmem>>, vector<16x32xf32>,
    %c0_7 = arith.constant 0 : index
    %c0_8 = arith.constant 0 : index
    %7 = vector.load %arg2[%c0_7, %c0_8] : memref<16x16xf32, #tpu.memory_space<vmem>>, vector<16x16xf32>
    %cst_9 = arith.constant 0.000000e+00 : f32
    %8 = vector.broadcast %cst_9 : f32 to vector<16x32xf32>
    %c0_10 = arith.constant 0 : index
    %c0_11 = arith.constant 0 : index
    %c0_12 = arith.constant 0 : index
    %c0_13 = arith.constant 0 : index
    %9 = vector.load %arg3[%c0_10, %c0_11, %c0_12, %c0_13] : memref<2x4x32x8xf32, #tpu.memory_space<vmem>>, vector<1x1x32x8xf32>
    %10 = vector.shape_cast %9 : vector<1x1x32x8xf32> to vector<32x8xf32>
    %11 = arith.truncf %5 : vector<16x32xf32> to vector<16x32xbf16>
    %12 = arith.truncf %10 : vector<32x8xf32> to vector<32x8xbf16>
    %cst_14 = arith.constant dense<0.000000e+00> : vector<16x8xf32>
    %13 = tpu.matmul %11, %12, %cst_14 {dimension_numbers = #tpu.dot_dimension_numbers<[1], [0], [0], [1], [0, 0, 1, 1], [], []>} : vector<16x32xbf16>, vector<32x8xbf16>, vector<16x8xf32> -> vector<16x8xf32>
    %c0_15 = arith.constant 0 : index
    %c0_16 = arith.constant 0 : index
    %c0_17 = arith.constant 0 : index
    %c0_18 = arith.constant 0 : index
    %14 = vector.load %arg4[%c0_15, %c0_16, %c0_17, %c0_18] : memref<2x4x1x8xf32, #tpu.memory_space<vmem>>, vector<1x1x1x8xf32>
    %15 = vector.shape_cast %14 : vector<1x1x1x8xf32> to vector<1x8xf32>
    %16 = vector.broadcast %15 : vector<1x8xf32> to vector<16x8xf32>
    %17 = arith.addf %13, %16 : vector<16x8xf32>
    %c0_19 = arith.constant 0 : index
    %c0_20 = arith.constant 0 : index
    %c0_21 = arith.constant 0 : index
    %c0_22 = arith.constant 0 : index
    %18 = vector.load %arg5[%c0_19, %c0_20, %c0_21, %c0_22] : memref<2x4x32x8xf32, #tpu.memory_space<vmem>>, vector<1x1x32x8xf32>
    %19 = vector.shape_cast %18 : vector<1x1x32x8xf32> to vector<32x8xf32>
    %20 = arith.truncf %5 : vector<16x32xf32> to vector<16x32xbf16>
    %21 = arith.truncf %19 : vector<32x8xf32> to vector<32x8xbf16>
    %cst_23 = arith.constant dense<0.000000e+00> : vector<16x8xf32>
    %22 = tpu.matmul %20, %21, %cst_23 {dimension_numbers = #tpu.dot_dimension_numbers<[1], [0], [0], [1], [0, 0, 1, 1], [], []>} : vector<16x32xbf16>, vector<32x8xbf16>, vector<16x8xf32> -> vector<16x8xf32>
    %c0_24 = arith.constant 0 : index
    %c0_25 = arith.constant 0 : index
    %c0_26 = arith.constant 0 : index
    %c0_27 = arith.constant 0 : index
    %23 = vector.load %arg6[%c0_24, %c0_25, %c0_26, %c0_27] : memref<2x4x1x8xf32, #tpu.memory_space<vmem>>, vector<1x1x1x8xf32>
    %24 = vector.shape_cast %23 : vector<1x1x1x8xf32> to vector<1x8xf32>
    %25 = vector.broadcast %24 : vector<1x8xf32> to vector<16x8xf32>
    %26 = arith.addf %22, %25 : vector<16x8xf32>
    %c0_28 = arith.constant 0 : index
    %c0_29 = arith.constant 0 : index
    %c0_30 = arith.constant 0 : index
    %c0_31 = arith.constant 0 : index
    %27 = vector.load %arg7[%c0_28, %c0_29, %c0_30, %c0_31] : memref<2x4x32x8xf32, #tpu.memory_space<vmem>>, vector<1x1x32x8xf32>
    %28 = vector.shape_cast %27 : vector<1x1x32x8xf32> to vector<32x8xf32>
    %29 = arith.truncf %5 : vector<16x32xf32> to vector<16x32xbf16>
    %30 = arith.truncf %28 : vector<32x8xf32> to vector<32x8xbf16>
    %cst_32 = arith.constant dense<0.000000e+00> : vector<16x8xf32>
    %31 = tpu.matmul %29, %30, %cst_32 {dimension_numbers = #tpu.dot_dimension_numbers<[1], [0], [0], [1], [0, 0, 1, 1], [], []>} : vector<16x32xbf16>, vector<32x8xbf16>, vector<16x8xf32> -> vector<16x8xf32>
    %c0_33 = arith.constant 0 : index
    %c0_34 = arith.constant 0 : index
    %c0_35 = arith.constant 0 : index
    %c0_36 = arith.constant 0 : index
    %32 = vector.load %arg8[%c0_33, %c0_34, %c0_35, %c0_36] : memref<2x4x1x8xf32, #tpu.memory_space<vmem>>, vector<1x1x1x8xf32>
    %33 = vector.shape_cast %32 : vector<1x1x1x8xf32> to vector<1x8xf32>
    %34 = vector.broadcast %33 : vector<1x8xf32> to vector<16x8xf32>
    %35 = arith.addf %31, %34 : vector<16x8xf32>
    %36 = arith.truncf %17 : vector<16x8xf32> to vector<16x8xbf16>
    %37 = arith.truncf %26 : vector<16x8xf32> to vector<16x8xbf16>
    %cst_37 = arith.constant dense<0.000000e+00> : vector<16x16xf32>
    %38 = tpu.matmul %36, %37, %cst_37 {dimension_numbers = #tpu.dot_dimension_numbers<[1], [1], [0], [0], [0, 0, 1, 0], [], []>} : vector<16x8xbf16>, vector<16x8xbf16>, vector<16x16xf32> -> vector<16x16xf32>
    %cst_38 = arith.constant 0.353553385 : f32
    %39 = vector.broadcast %cst_38 : f32 to vector<16x16xf32>
    %40 = arith.mulf %38, %39 : vector<16x16xf32>
    %41 = arith.addf %40, %7 : vector<16x16xf32>
    %cst_39 = arith.constant dense<0xFF800000> : vector<16xf32>
    %42 = vector.multi_reduction <maximumf>, %41, %cst_39 [1] : vector<16x16xf32> to vector<16xf32>
    %43 = vector.shape_cast %42 : vector<16xf32> to vector<16x1xf32>
    %44 = vector.broadcast %43 : vector<16x1xf32> to vector<16x16xf32>
    %45 = arith.subf %41, %44 : vector<16x16xf32>
    %46 = math.exp %45 : vector<16x16xf32>
    %cst_40 = arith.constant dense<0.000000e+00> : vector<16xf32>
    %47 = vector.multi_reduction <add>, %46, %cst_40 [1] : vector<16x16xf32> to vector<16xf32>
    %48 = vector.shape_cast %47 : vector<16xf32> to vector<16x1xf32>
    %49 = tpu.reciprocal %48 {approx = true} : vector<16x1xf32> -> vector<16x1xf32>
    %50 = vector.broadcast %49 : vector<16x1xf32> to vector<16x16xf32>
    %51 = arith.mulf %46, %50 : vector<16x16xf32>
    %52 = arith.truncf %51 : vector<16x16xf32> to vector<16x16xbf16>
    %53 = arith.truncf %35 : vector<16x8xf32> to vector<16x8xbf16>
    %cst_41 = arith.constant dense<0.000000e+00> : vector<16x8xf32>
    %54 = tpu.matmul %52, %53, %cst_41 {dimension_numbers = #tpu.dot_dimension_numbers<[1], [0], [0], [1], [0, 0, 1, 1], [], []>} : vector<16x16xbf16>, vector<16x8xbf16>, vector<16x8xf32> -> vector<16x8xf32>
    %c0_42 = arith.constant 0 : index
    %c0_43 = arith.constant 0 : index
    %c0_44 = arith.constant 0 : index
    %c0_45 = arith.constant 0 : index
    %55 = vector.load %arg9[%c0_42, %c0_43, %c0_44, %c0_45] : memref<2x4x8x32xf32, #tpu.memory_space<vmem>>, vector<1x1x8x32xf32>
    %56 = vector.shape_cast %55 : vector<1x1x8x32xf32> to vector<8x32xf32>
    %57 = arith.truncf %54 : vector<16x8xf32> to vector<16x8xbf16>
    %58 = arith.truncf %56 : vector<8x32xf32> to vector<8x32xbf16>
    %cst_46 = arith.constant dense<0.000000e+00> : vector<16x32xf32>
    %59 = tpu.matmul %57, %58, %cst_46 {dimension_numbers = #tpu.dot_dimension_numbers<[1], [0], [0], [1], [0, 0, 1, 1], [], []>} : vector<16x8xbf16>, vector<8x32xbf16>, vector<16x32xf32> -> vector<16x32xf32>
    %60 = arith.addf %8, %59 : vector<16x32xf32>
    %c0_47 = arith.constant 0 : index
    %c1 = arith.constant 1 : index
    %c0_48 = arith.constant 0 : index
    %c0_49 = arith.constant 0 : index
    %61 = vector.load %arg3[%c0_47, %c1, %c0_48, %c0_49] : memref<2x4x32x8xf32, #tpu.memory_space<vmem>>, vector<1x1x32x8xf32>
    %62 = vector.shape_cast %61 : vector<1x1x32x8xf32> to vector<32x8xf32>
    %63 = arith.truncf %5 : vector<16x32xf32> to vector<16x32xbf16>
    %64 = arith.truncf %62 : vector<32x8xf32> to vector<32x8xbf16>
    %cst_50 = arith.constant dense<0.000000e+00> : vector<16x8xf32>
    %65 = tpu.matmul %63, %64, %cst_50 {dimension_numbers = #tpu.dot_dimension_numbers<[1], [0], [0], [1], [0, 0, 1, 1], [], []>} : vector<16x32xbf16>, vector<32x8xbf16>, vector<16x8xf32> -> vector<16x8xf32>
    %c0_51 = arith.constant 0 : index
    %c1_52 = arith.constant 1 : index
    %c0_53 = arith.constant 0 : index
    %c0_54 = arith.constant 0 : index
    %66 = vector.load %arg4[%c0_51, %c1_52, %c0_53, %c0_54] : memref<2x4x1x8xf32, #tpu.memory_space<vmem>>, vector<1x1x1x8xf32>
    %67 = vector.shape_cast %66 : vector<1x1x1x8xf32> to vector<1x8xf32>
    %68 = vector.broadcast %67 : vector<1x8xf32> to vector<16x8xf32>
    %69 = arith.addf %65, %68 : vector<16x8xf32>
    %c0_55 = arith.constant 0 : index
    %c1_56 = arith.constant 1 : index
    %c0_57 = arith.constant 0 : index
    %c0_58 = arith.constant 0 : index
    %70 = vector.load %arg5[%c0_55, %c1_56, %c0_57, %c0_58] : memref<2x4x32x8xf32, #tpu.memory_space<vmem>>, vector<1x1x32x8xf32>
    %71 = vector.shape_cast %70 : vector<1x1x32x8xf32> to vector<32x8xf32>
    %72 = arith.truncf %5 : vector<16x32xf32> to vector<16x32xbf16>
    %73 = arith.truncf %71 : vector<32x8xf32> to vector<32x8xbf16>
    %cst_59 = arith.constant dense<0.000000e+00> : vector<16x8xf32>
    %74 = tpu.matmul %72, %73, %cst_59 {dimension_numbers = #tpu.dot_dimension_numbers<[1], [0], [0], [1], [0, 0, 1, 1], [], []>} : vector<16x32xbf16>, vector<32x8xbf16>, vector<16x8xf32> -> vector<16x8xf32>
    %c0_60 = arith.constant 0 : index
    %c1_61 = arith.constant 1 : index
    %c0_62 = arith.constant 0 : index
    %c0_63 = arith.constant 0 : index
    %75 = vector.load %arg6[%c0_60, %c1_61, %c0_62, %c0_63] : memref<2x4x1x8xf32, #tpu.memory_space<vmem>>, vector<1x1x1x8xf32>
    %76 = vector.shape_cast %75 : vector<1x1x1x8xf32> to vector<1x8xf32>
    %77 = vector.broadcast %76 : vector<1x8xf32> to vector<16x8xf32>
    %78 = arith.addf %74, %77 : vector<16x8xf32>
    %c0_64 = arith.constant 0 : index
    %c1_65 = arith.constant 1 : index
    %c0_66 = arith.constant 0 : index
    %c0_67 = arith.constant 0 : index
    %79 = vector.load %arg7[%c0_64, %c1_65, %c0_66, %c0_67] : memref<2x4x32x8xf32, #tpu.memory_space<vmem>>, vector<1x1x32x8xf32>
    %80 = vector.shape_cast %79 : vector<1x1x32x8xf32> to vector<32x8xf32>
    %81 = arith.truncf %5 : vector<16x32xf32> to vector<16x32xbf16>
    %82 = arith.truncf %80 : vector<32x8xf32> to vector<32x8xbf16>
    %cst_68 = arith.constant dense<0.000000e+00> : vector<16x8xf32>
    %83 = tpu.matmul %81, %82, %cst_68 {dimension_numbers = #tpu.dot_dimension_numbers<[1], [0], [0], [1], [0, 0, 1, 1], [], []>} : vector<16x32xbf16>, vector<32x8xbf16>, vector<16x8xf32> -> vector<16x8xf32>
    %c0_69 = arith.constant 0 : index
    %c1_70 = arith.constant 1 : index
    %c0_71 = arith.constant 0 : index
    %c0_72 = arith.constant 0 : index
    %84 = vector.load %arg8[%c0_69, %c1_70, %c0_71, %c0_72] : memref<2x4x1x8xf32, #tpu.memory_space<vmem>>, vector<1x1x1x8xf32>
    %85 = vector.shape_cast %84 : vector<1x1x1x8xf32> to vector<1x8xf32>
    %86 = vector.broadcast %85 : vector<1x8xf32> to vector<16x8xf32>
    %87 = arith.addf %83, %86 : vector<16x8xf32>
    %88 = arith.truncf %69 : vector<16x8xf32> to vector<16x8xbf16>
    %89 = arith.truncf %78 : vector<16x8xf32> to vector<16x8xbf16>
    %cst_73 = arith.constant dense<0.000000e+00> : vector<16x16xf32>
    %90 = tpu.matmul %88, %89, %cst_73 {dimension_numbers = #tpu.dot_dimension_numbers<[1], [1], [0], [0], [0, 0, 1, 0], [], []>} : vector<16x8xbf16>, vector<16x8xbf16>, vector<16x16xf32> -> vector<16x16xf32>
    %cst_74 = arith.constant 0.353553385 : f32
    %91 = vector.broadcast %cst_74 : f32 to vector<16x16xf32>
    %92 = arith.mulf %90, %91 : vector<16x16xf32>
    %93 = arith.addf %92, %7 : vector<16x16xf32>
    %cst_75 = arith.constant dense<0xFF800000> : vector<16xf32>
    %94 = vector.multi_reduction <maximumf>, %93, %cst_75 [1] : vector<16x16xf32> to vector<16xf32>
    %95 = vector.shape_cast %94 : vector<16xf32> to vector<16x1xf32>
    %96 = vector.broadcast %95 : vector<16x1xf32> to vector<16x16xf32>
    %97 = arith.subf %93, %96 : vector<16x16xf32>
    %98 = math.exp %97 : vector<16x16xf32>
    %cst_76 = arith.constant dense<0.000000e+00> : vector<16xf32>
    %99 = vector.multi_reduction <add>, %98, %cst_76 [1] : vector<16x16xf32> to vector<16xf32>
    %100 = vector.shape_cast %99 : vector<16xf32> to vector<16x1xf32>
    %101 = tpu.reciprocal %100 {approx = true} : vector<16x1xf32> -> vector<16x1xf32>
    %102 = vector.broadcast %101 : vector<16x1xf32> to vector<16x16xf32>
    %103 = arith.mulf %98, %102 : vector<16x16xf32>
    %104 = arith.truncf %103 : vector<16x16xf32> to vector<16x16xbf16>
    %105 = arith.truncf %87 : vector<16x8xf32> to vector<16x8xbf16>
    %cst_77 = arith.constant dense<0.000000e+00> : vector<16x8xf32>
    %106 = tpu.matmul %104, %105, %cst_77 {dimension_numbers = #tpu.dot_dimension_numbers<[1], [0], [0], [1], [0, 0, 1, 1], [], []>} : vector<16x16xbf16>, vector<16x8xbf16>, vector<16x8xf32> -> vector<16x8xf32>
    %c0_78 = arith.constant 0 : index
    %c1_79 = arith.constant 1 : index
    %c0_80 = arith.constant 0 : index
    %c0_81 = arith.constant 0 : index
    %107 = vector.load %arg9[%c0_78, %c1_79, %c0_80, %c0_81] : memref<2x4x8x32xf32, #tpu.memory_space<vmem>>, vector<1x1x8x32xf32>
    %108 = vector.shape_cast %107 : vector<1x1x8x32xf32> to vector<8x32xf32>
    %109 = arith.truncf %106 : vector<16x8xf32> to vector<16x8xbf16>
    %110 = arith.truncf %108 : vector<8x32xf32> to vector<8x32xbf16>
    %cst_82 = arith.constant dense<0.000000e+00> : vector<16x32xf32>
    %111 = tpu.matmul %109, %110, %cst_82 {dimension_numbers = #tpu.dot_dimension_numbers<[1], [0], [0], [1], [0, 0, 1, 1], [], []>} : vector<16x8xbf16>, vector<8x32xbf16>, vector<16x32xf32> -> vector<16x32xf32>
    %112 = arith.addf %60, %111 : vector<16x32xf32>
    %c0_83 = arith.constant 0 : index
    %c2 = arith.constant 2 : index
    %c0_84 = arith.constant 0 : index
    %c0_85 = arith.constant 0 : index
    %113 = vector.load %arg3[%c0_83, %c2, %c0_84, %c0_85] : memref<2x4x32x8xf32, #tpu.memory_space<vmem>>, vector<1x1x32x8xf32>
    %114 = vector.shape_cast %113 : vector<1x1x32x8xf32> to vector<32x8xf32>
    %115 = arith.truncf %5 : vector<16x32xf32> to vector<16x32xbf16>
    %116 = arith.truncf %114 : vector<32x8xf32> to vector<32x8xbf16>
    %cst_86 = arith.constant dense<0.000000e+00> : vector<16x8xf32>
    %117 = tpu.matmul %115, %116, %cst_86 {dimension_numbers = #tpu.dot_dimension_numbers<[1], [0], [0], [1], [0, 0, 1, 1], [], []>} : vector<16x32xbf16>, vector<32x8xbf16>, vector<16x8xf32> -> vector<16x8xf32>
    %c0_87 = arith.constant 0 : index
    %c2_88 = arith.constant 2 : index
    %c0_89 = arith.constant 0 : index
    %c0_90 = arith.constant 0 : index
    %118 = vector.load %arg4[%c0_87, %c2_88, %c0_89, %c0_90] : memref<2x4x1x8xf32, #tpu.memory_space<vmem>>, vector<1x1x1x8xf32>
    %119 = vector.shape_cast %118 : vector<1x1x1x8xf32> to vector<1x8xf32>
    %120 = vector.broadcast %119 : vector<1x8xf32> to vector<16x8xf32>
    %121 = arith.addf %117, %120 : vector<16x8xf32>
    %c0_91 = arith.constant 0 : index
    %c2_92 = arith.constant 2 : index
    %c0_93 = arith.constant 0 : index
    %c0_94 = arith.constant 0 : index
    %122 = vector.load %arg5[%c0_91, %c2_92, %c0_93, %c0_94] : memref<2x4x32x8xf32, #tpu.memory_space<vmem>>, vector<1x1x32x8xf32>
    %123 = vector.shape_cast %122 : vector<1x1x32x8xf32> to vector<32x8xf32>
    %124 = arith.truncf %5 : vector<16x32xf32> to vector<16x32xbf16>
    %125 = arith.truncf %123 : vector<32x8xf32> to vector<32x8xbf16>
    %cst_95 = arith.constant dense<0.000000e+00> : vector<16x8xf32>
    %126 = tpu.matmul %124, %125, %cst_95 {dimension_numbers = #tpu.dot_dimension_numbers<[1], [0], [0], [1], [0, 0, 1, 1], [], []>} : vector<16x32xbf16>, vector<32x8xbf16>, vector<16x8xf32> -> vector<16x8xf32>
    %c0_96 = arith.constant 0 : index
    %c2_97 = arith.constant 2 : index
    %c0_98 = arith.constant 0 : index
    %c0_99 = arith.constant 0 : index
    %127 = vector.load %arg6[%c0_96, %c2_97, %c0_98, %c0_99] : memref<2x4x1x8xf32, #tpu.memory_space<vmem>>, vector<1x1x1x8xf32>
    %128 = vector.shape_cast %127 : vector<1x1x1x8xf32> to vector<1x8xf32>
    %129 = vector.broadcast %128 : vector<1x8xf32> to vector<16x8xf32>
    %130 = arith.addf %126, %129 : vector<16x8xf32>
    %c0_100 = arith.constant 0 : index
    %c2_101 = arith.constant 2 : index
    %c0_102 = arith.constant 0 : index
    %c0_103 = arith.constant 0 : index
    %131 = vector.load %arg7[%c0_100, %c2_101, %c0_102, %c0_103] : memref<2x4x32x8xf32, #tpu.memory_space<vmem>>, vector<1x1x32x8xf32>
    %132 = vector.shape_cast %131 : vector<1x1x32x8xf32> to vector<32x8xf32>
    %133 = arith.truncf %5 : vector<16x32xf32> to vector<16x32xbf16>
    %134 = arith.truncf %132 : vector<32x8xf32> to vector<32x8xbf16>
    %cst_104 = arith.constant dense<0.000000e+00> : vector<16x8xf32>
    %135 = tpu.matmul %133, %134, %cst_104 {dimension_numbers = #tpu.dot_dimension_numbers<[1], [0], [0], [1], [0, 0, 1, 1], [], []>} : vector<16x32xbf16>, vector<32x8xbf16>, vector<16x8xf32> -> vector<16x8xf32>
    %c0_105 = arith.constant 0 : index
    %c2_106 = arith.constant 2 : index
    %c0_107 = arith.constant 0 : index
    %c0_108 = arith.constant 0 : index
    %136 = vector.load %arg8[%c0_105, %c2_106, %c0_107, %c0_108] : memref<2x4x1x8xf32, #tpu.memory_space<vmem>>, vector<1x1x1x8xf32>
    %137 = vector.shape_cast %136 : vector<1x1x1x8xf32> to vector<1x8xf32>
    %138 = vector.broadcast %137 : vector<1x8xf32> to vector<16x8xf32>
    %139 = arith.addf %135, %138 : vector<16x8xf32>
    %140 = arith.truncf %121 : vector<16x8xf32> to vector<16x8xbf16>
    %141 = arith.truncf %130 : vector<16x8xf32> to vector<16x8xbf16>
    %cst_109 = arith.constant dense<0.000000e+00> : vector<16x16xf32>
    %142 = tpu.matmul %140, %141, %cst_109 {dimension_numbers = #tpu.dot_dimension_numbers<[1], [1], [0], [0], [0, 0, 1, 0], [], []>} : vector<16x8xbf16>, vector<16x8xbf16>, vector<16x16xf32> -> vector<16x16xf32>
    %cst_110 = arith.constant 0.353553385 : f32
    %143 = vector.broadcast %cst_110 : f32 to vector<16x16xf32>
    %144 = arith.mulf %142, %143 : vector<16x16xf32>
    %145 = arith.addf %144, %7 : vector<16x16xf32>
    %cst_111 = arith.constant dense<0xFF800000> : vector<16xf32>
    %146 = vector.multi_reduction <maximumf>, %145, %cst_111 [1] : vector<16x16xf32> to vector<16xf32>
    %147 = vector.shape_cast %146 : vector<16xf32> to vector<16x1xf32>
    %148 = vector.broadcast %147 : vector<16x1xf32> to vector<16x16xf32>
    %149 = arith.subf %145, %148 : vector<16x16xf32>
    %150 = math.exp %149 : vector<16x16xf32>
    %cst_112 = arith.constant dense<0.000000e+00> : vector<16xf32>
    %151 = vector.multi_reduction <add>, %150, %cst_112 [1] : vector<16x16xf32> to vector<16xf32>
    %152 = vector.shape_cast %151 : vector<16xf32> to vector<16x1xf32>
    %153 = tpu.reciprocal %152 {approx = true} : vector<16x1xf32> -> vector<16x1xf32>
    %154 = vector.broadcast %153 : vector<16x1xf32> to vector<16x16xf32>
    %155 = arith.mulf %150, %154 : vector<16x16xf32>
    %156 = arith.truncf %155 : vector<16x16xf32> to vector<16x16xbf16>
    %157 = arith.truncf %139 : vector<16x8xf32> to vector<16x8xbf16>
    %cst_113 = arith.constant dense<0.000000e+00> : vector<16x8xf32>
    %158 = tpu.matmul %156, %157, %cst_113 {dimension_numbers = #tpu.dot_dimension_numbers<[1], [0], [0], [1], [0, 0, 1, 1], [], []>} : vector<16x16xbf16>, vector<16x8xbf16>, vector<16x8xf32> -> vector<16x8xf32>
    %c0_114 = arith.constant 0 : index
    %c2_115 = arith.constant 2 : index
    %c0_116 = arith.constant 0 : index
    %c0_117 = arith.constant 0 : index
    %159 = vector.load %arg9[%c0_114, %c2_115, %c0_116, %c0_117] : memref<2x4x8x32xf32, #tpu.memory_space<vmem>>, vector<1x1x8x32xf32>
    %160 = vector.shape_cast %159 : vector<1x1x8x32xf32> to vector<8x32xf32>
    %161 = arith.truncf %158 : vector<16x8xf32> to vector<16x8xbf16>
    %162 = arith.truncf %160 : vector<8x32xf32> to vector<8x32xbf16>
    %cst_118 = arith.constant dense<0.000000e+00> : vector<16x32xf32>
    %163 = tpu.matmul %161, %162, %cst_118 {dimension_numbers = #tpu.dot_dimension_numbers<[1], [0], [0], [1], [0, 0, 1, 1], [], []>} : vector<16x8xbf16>, vector<8x32xbf16>, vector<16x32xf32> -> vector<16x32xf32>
    %164 = arith.addf %112, %163 : vector<16x32xf32>
    %c0_119 = arith.constant 0 : index
    %c3 = arith.constant 3 : index
    %c0_120 = arith.constant 0 : index
    %c0_121 = arith.constant 0 : index
    %165 = vector.load %arg3[%c0_119, %c3, %c0_120, %c0_121] : memref<2x4x32x8xf32, #tpu.memory_space<vmem>>, vector<1x1x32x8xf32>
    %166 = vector.shape_cast %165 : vector<1x1x32x8xf32> to vector<32x8xf32>
    %167 = arith.truncf %5 : vector<16x32xf32> to vector<16x32xbf16>
    %168 = arith.truncf %166 : vector<32x8xf32> to vector<32x8xbf16>
    %cst_122 = arith.constant dense<0.000000e+00> : vector<16x8xf32>
    %169 = tpu.matmul %167, %168, %cst_122 {dimension_numbers = #tpu.dot_dimension_numbers<[1], [0], [0], [1], [0, 0, 1, 1], [], []>} : vector<16x32xbf16>, vector<32x8xbf16>, vector<16x8xf32> -> vector<16x8xf32>
    %c0_123 = arith.constant 0 : index
    %c3_124 = arith.constant 3 : index
    %c0_125 = arith.constant 0 : index
    %c0_126 = arith.constant 0 : index
    %170 = vector.load %arg4[%c0_123, %c3_124, %c0_125, %c0_126] : memref<2x4x1x8xf32, #tpu.memory_space<vmem>>, vector<1x1x1x8xf32>
    %171 = vector.shape_cast %170 : vector<1x1x1x8xf32> to vector<1x8xf32>
    %172 = vector.broadcast %171 : vector<1x8xf32> to vector<16x8xf32>
    %173 = arith.addf %169, %172 : vector<16x8xf32>
    %c0_127 = arith.constant 0 : index
    %c3_128 = arith.constant 3 : index
    %c0_129 = arith.constant 0 : index
    %c0_130 = arith.constant 0 : index
    %174 = vector.load %arg5[%c0_127, %c3_128, %c0_129, %c0_130] : memref<2x4x32x8xf32, #tpu.memory_space<vmem>>, vector<1x1x32x8xf32>
    %175 = vector.shape_cast %174 : vector<1x1x32x8xf32> to vector<32x8xf32>
    %176 = arith.truncf %5 : vector<16x32xf32> to vector<16x32xbf16>
    %177 = arith.truncf %175 : vector<32x8xf32> to vector<32x8xbf16>
    %cst_131 = arith.constant dense<0.000000e+00> : vector<16x8xf32>
    %178 = tpu.matmul %176, %177, %cst_131 {dimension_numbers = #tpu.dot_dimension_numbers<[1], [0], [0], [1], [0, 0, 1, 1], [], []>} : vector<16x32xbf16>, vector<32x8xbf16>, vector<16x8xf32> -> vector<16x8xf32>
    %c0_132 = arith.constant 0 : index
    %c3_133 = arith.constant 3 : index
    %c0_134 = arith.constant 0 : index
    %c0_135 = arith.constant 0 : index
    %179 = vector.load %arg6[%c0_132, %c3_133, %c0_134, %c0_135] : memref<2x4x1x8xf32, #tpu.memory_space<vmem>>, vector<1x1x1x8xf32>
    %180 = vector.shape_cast %179 : vector<1x1x1x8xf32> to vector<1x8xf32>
    %181 = vector.broadcast %180 : vector<1x8xf32> to vector<16x8xf32>
    %182 = arith.addf %178, %181 : vector<16x8xf32>
    %c0_136 = arith.constant 0 : index
    %c3_137 = arith.constant 3 : index
    %c0_138 = arith.constant 0 : index
    %c0_139 = arith.constant 0 : index
    %183 = vector.load %arg7[%c0_136, %c3_137, %c0_138, %c0_139] : memref<2x4x32x8xf32, #tpu.memory_space<vmem>>, vector<1x1x32x8xf32>
    %184 = vector.shape_cast %183 : vector<1x1x32x8xf32> to vector<32x8xf32>
    %185 = arith.truncf %5 : vector<16x32xf32> to vector<16x32xbf16>
    %186 = arith.truncf %184 : vector<32x8xf32> to vector<32x8xbf16>
    %cst_140 = arith.constant dense<0.000000e+00> : vector<16x8xf32>
    %187 = tpu.matmul %185, %186, %cst_140 {dimension_numbers = #tpu.dot_dimension_numbers<[1], [0], [0], [1], [0, 0, 1, 1], [], []>} : vector<16x32xbf16>, vector<32x8xbf16>, vector<16x8xf32> -> vector<16x8xf32>
    %c0_141 = arith.constant 0 : index
    %c3_142 = arith.constant 3 : index
    %c0_143 = arith.constant 0 : index
    %c0_144 = arith.constant 0 : index
    %188 = vector.load %arg8[%c0_141, %c3_142, %c0_143, %c0_144] : memref<2x4x1x8xf32, #tpu.memory_space<vmem>>, vector<1x1x1x8xf32>
    %189 = vector.shape_cast %188 : vector<1x1x1x8xf32> to vector<1x8xf32>
    %190 = vector.broadcast %189 : vector<1x8xf32> to vector<16x8xf32>
    %191 = arith.addf %187, %190 : vector<16x8xf32>
    %192 = arith.truncf %173 : vector<16x8xf32> to vector<16x8xbf16>
    %193 = arith.truncf %182 : vector<16x8xf32> to vector<16x8xbf16>
    %cst_145 = arith.constant dense<0.000000e+00> : vector<16x16xf32>
    %194 = tpu.matmul %192, %193, %cst_145 {dimension_numbers = #tpu.dot_dimension_numbers<[1], [1], [0], [0], [0, 0, 1, 0], [], []>} : vector<16x8xbf16>, vector<16x8xbf16>, vector<16x16xf32> -> vector<16x16xf32>
    %cst_146 = arith.constant 0.353553385 : f32
    %195 = vector.broadcast %cst_146 : f32 to vector<16x16xf32>
    %196 = arith.mulf %194, %195 : vector<16x16xf32>
    %197 = arith.addf %196, %7 : vector<16x16xf32>
    %cst_147 = arith.constant dense<0xFF800000> : vector<16xf32>
    %198 = vector.multi_reduction <maximumf>, %197, %cst_147 [1] : vector<16x16xf32> to vector<16xf32>
    %199 = vector.shape_cast %198 : vector<16xf32> to vector<16x1xf32>
    %200 = vector.broadcast %199 : vector<16x1xf32> to vector<16x16xf32>
    %201 = arith.subf %197, %200 : vector<16x16xf32>
    %202 = math.exp %201 : vector<16x16xf32>
    %cst_148 = arith.constant dense<0.000000e+00> : vector<16xf32>
    %203 = vector.multi_reduction <add>, %202, %cst_148 [1] : vector<16x16xf32> to vector<16xf32>
    %204 = vector.shape_cast %203 : vector<16xf32> to vector<16x1xf32>
    %205 = tpu.reciprocal %204 {approx = true} : vector<16x1xf32> -> vector<16x1xf32>
    %206 = vector.broadcast %205 : vector<16x1xf32> to vector<16x16xf32>
    %207 = arith.mulf %202, %206 : vector<16x16xf32>
    %208 = arith.truncf %207 : vector<16x16xf32> to vector<16x16xbf16>
    %209 = arith.truncf %191 : vector<16x8xf32> to vector<16x8xbf16>
    %cst_149 = arith.constant dense<0.000000e+00> : vector<16x8xf32>
    %210 = tpu.matmul %208, %209, %cst_149 {dimension_numbers = #tpu.dot_dimension_numbers<[1], [0], [0], [1], [0, 0, 1, 1], [], []>} : vector<16x16xbf16>, vector<16x8xbf16>, vector<16x8xf32> -> vector<16x8xf32>
    %c0_150 = arith.constant 0 : index
    %c3_151 = arith.constant 3 : index
    %c0_152 = arith.constant 0 : index
    %c0_153 = arith.constant 0 : index
    %211 = vector.load %arg9[%c0_150, %c3_151, %c0_152, %c0_153] : memref<2x4x8x32xf32, #tpu.memory_space<vmem>>, vector<1x1x8x32xf32>
    %212 = vector.shape_cast %211 : vector<1x1x8x32xf32> to vector<8x32xf32>
    %213 = arith.truncf %210 : vector<16x8xf32> to vector<16x8xbf16>
    %214 = arith.truncf %212 : vector<8x32xf32> to vector<8x32xbf16>
    %cst_154 = arith.constant dense<0.000000e+00> : vector<16x32xf32>
    %215 = tpu.matmul %213, %214, %cst_154 {dimension_numbers = #tpu.dot_dimension_numbers<[1], [0], [0], [1], [0, 0, 1, 1], [], []>} : vector<16x8xbf16>, vector<8x32xbf16>, vector<16x32xf32> -> vector<16x32xf32>
    %216 = arith.addf %164, %215 : vector<16x32xf32>
    %217 = arith.addf %5, %216 : vector<16x32xf32>
    %c0_155 = arith.constant 0 : index
    %c0_156 = arith.constant 0 : index
    %c0_157 = arith.constant 0 : index
    %218 = vector.load %arg10[%c0_155, %c0_156, %c0_157] : memref<2x1x32xf32, #tpu.memory_space<vmem>>, vector<1x1x32xf32>
    %219 = vector.shape_cast %218 : vector<1x1x32xf32> to vector<1x32xf32>
    %220 = vector.broadcast %219 : vector<1x32xf32> to vector<16x32xf32>
    %221 = arith.addf %217, %220 : vector<16x32xf32>
    %c0_158 = arith.constant 0 : index
    %c0_159 = arith.constant 0 : index
    %c0_160 = arith.constant 0 : index
    %222 = vector.load %arg15[%c0_158, %c0_159, %c0_160] : memref<2x1x32xf32, #tpu.memory_space<vmem>>, vector<1x1x32xf32>
    %223 = vector.shape_cast %222 : vector<1x1x32xf32> to vector<1x32xf32>
    %c0_161 = arith.constant 0 : index
    %c0_162 = arith.constant 0 : index
    %c0_163 = arith.constant 0 : index
    %224 = vector.load %arg16[%c0_161, %c0_162, %c0_163] : memref<2x1x32xf32, #tpu.memory_space<vmem>>, vector<1x1x32xf32>
    %225 = vector.shape_cast %224 : vector<1x1x32xf32> to vector<1x32xf32>
    %cst_164 = arith.constant dense<0.000000e+00> : vector<16xf32>
    %226 = vector.multi_reduction <add>, %221, %cst_164 [1] : vector<16x32xf32> to vector<16xf32>
    %227 = vector.shape_cast %226 : vector<16xf32> to vector<16x1xf32>
    %cst_165 = arith.constant 3.200000e+01 : f32
    %228 = vector.broadcast %cst_165 : f32 to vector<16x1xf32>
    %229 = arith.divf %227, %228 : vector<16x1xf32>
    %230 = vector.broadcast %229 : vector<16x1xf32> to vector<16x32xf32>
    %231 = arith.subf %221, %230 : vector<16x32xf32>
    %232 = arith.mulf %231, %231 : vector<16x32xf32>
    %cst_166 = arith.constant dense<0.000000e+00> : vector<16xf32>
    %233 = vector.multi_reduction <add>, %232, %cst_166 [1] : vector<16x32xf32> to vector<16xf32>
    %234 = vector.shape_cast %233 : vector<16xf32> to vector<16x1xf32>
    %cst_167 = arith.constant 3.200000e+01 : f32
    %235 = vector.broadcast %cst_167 : f32 to vector<16x1xf32>
    %236 = arith.divf %234, %235 : vector<16x1xf32>
    %237 = vector.broadcast %229 : vector<16x1xf32> to vector<16x32xf32>
    %238 = arith.subf %221, %237 : vector<16x32xf32>
    %cst_168 = arith.constant 9.99999974E-6 : f32
    %239 = vector.broadcast %cst_168 : f32 to vector<16x1xf32>
    %240 = arith.addf %236, %239 : vector<16x1xf32>
    %241 = math.rsqrt %240 : vector<16x1xf32>
    %242 = vector.broadcast %241 : vector<16x1xf32> to vector<16x32xf32>
    %243 = arith.mulf %238, %242 : vector<16x32xf32>
    %244 = vector.broadcast %223 : vector<1x32xf32> to vector<16x32xf32>
    %245 = arith.mulf %243, %244 : vector<16x32xf32>
    %246 = vector.broadcast %225 : vector<1x32xf32> to vector<16x32xf32>
    %247 = arith.addf %245, %246 : vector<16x32xf32>
    %c0_169 = arith.constant 0 : index
    %c0_170 = arith.constant 0 : index
    %c0_171 = arith.constant 0 : index
    %248 = vector.load %arg11[%c0_169, %c0_170, %c0_171] : memref<2x32x64xf32, #tpu.memory_space<vmem>>, vector<1x32x64xf32>
    %249 = vector.shape_cast %248 : vector<1x32x64xf32> to vector<32x64xf32>
    %250 = arith.truncf %247 : vector<16x32xf32> to vector<16x32xbf16>
    %251 = arith.truncf %249 : vector<32x64xf32> to vector<32x64xbf16>
    %cst_172 = arith.constant dense<0.000000e+00> : vector<16x64xf32>
    %252 = tpu.matmul %250, %251, %cst_172 {dimension_numbers = #tpu.dot_dimension_numbers<[1], [0], [0], [1], [0, 0, 1, 1], [], []>} : vector<16x32xbf16>, vector<32x64xbf16>, vector<16x64xf32> -> vector<16x64xf32>
    %c0_173 = arith.constant 0 : index
    %c0_174 = arith.constant 0 : index
    %c0_175 = arith.constant 0 : index
    %253 = vector.load %arg12[%c0_173, %c0_174, %c0_175] : memref<2x1x64xf32, #tpu.memory_space<vmem>>, vector<1x1x64xf32>
    %254 = vector.shape_cast %253 : vector<1x1x64xf32> to vector<1x64xf32>
    %255 = vector.broadcast %254 : vector<1x64xf32> to vector<16x64xf32>
    %256 = arith.addf %252, %255 : vector<16x64xf32>
    %cst_176 = arith.constant 0.000000e+00 : f32
    %257 = vector.broadcast %cst_176 : f32 to vector<16x64xf32>
    %258 = arith.maximumf %256, %257 : vector<16x64xf32>
    %c0_177 = arith.constant 0 : index
    %c0_178 = arith.constant 0 : index
    %c0_179 = arith.constant 0 : index
    %259 = vector.load %arg13[%c0_177, %c0_178, %c0_179] : memref<2x64x32xf32, #tpu.memory_space<vmem>>, vector<1x64x32xf32>
    %260 = vector.shape_cast %259 : vector<1x64x32xf32> to vector<64x32xf32>
    %261 = arith.truncf %258 : vector<16x64xf32> to vector<16x64xbf16>
    %262 = arith.truncf %260 : vector<64x32xf32> to vector<64x32xbf16>
    %cst_180 = arith.constant dense<0.000000e+00> : vector<16x32xf32>
    %263 = tpu.matmul %261, %262, %cst_180 {dimension_numbers = #tpu.dot_dimension_numbers<[1], [0], [0], [1], [0, 0, 1, 1], [], []>} : vector<16x64xbf16>, vector<64x32xbf16>, vector<16x32xf32> -> vector<16x32xf32>
    %c0_181 = arith.constant 0 : index
    %c0_182 = arith.constant 0 : index
    %c0_183 = arith.constant 0 : index
    %264 = vector.load %arg14[%c0_181, %c0_182, %c0_183] : memref<2x1x32xf32, #tpu.memory_space<vmem>>, vector<1x1x32xf32>
    %265 = vector.shape_cast %264 : vector<1x1x32xf32> to vector<1x32xf32>
    %266 = vector.broadcast %265 : vector<1x32xf32> to vector<16x32xf32>
    %267 = arith.addf %263, %266 : vector<16x32xf32>
    %268 = arith.addf %247, %267 : vector<16x32xf32>
    %c0_184 = arith.constant 0 : index
    %c0_185 = arith.constant 0 : index
    %c0_186 = arith.constant 0 : index
    %269 = vector.load %arg17[%c0_184, %c0_185, %c0_186] : memref<2x1x32xf32, #tpu.memory_space<vmem>>, vector<1x1x32xf32>
    %270 = vector.shape_cast %269 : vector<1x1x32xf32> to vector<1x32xf32>
    %c0_187 = arith.constant 0 : index
    %c0_188 = arith.constant 0 : index
    %c0_189 = arith.constant 0 : index
    %271 = vector.load %arg18[%c0_187, %c0_188, %c0_189] : memref<2x1x32xf32, #tpu.memory_space<vmem>>, vector<1x1x32xf32>
    %272 = vector.shape_cast %271 : vector<1x1x32xf32> to vector<1x32xf32>
    %cst_190 = arith.constant dense<0.000000e+00> : vector<16xf32>
    %273 = vector.multi_reduction <add>, %268, %cst_190 [1] : vector<16x32xf32> to vector<16xf32>
    %274 = vector.shape_cast %273 : vector<16xf32> to vector<16x1xf32>
    %cst_191 = arith.constant 3.200000e+01 : f32
    %275 = vector.broadcast %cst_191 : f32 to vector<16x1xf32>
    %276 = arith.divf %274, %275 : vector<16x1xf32>
    %277 = vector.broadcast %276 : vector<16x1xf32> to vector<16x32xf32>
    %278 = arith.subf %268, %277 : vector<16x32xf32>
    %279 = arith.mulf %278, %278 : vector<16x32xf32>
    %cst_192 = arith.constant dense<0.000000e+00> : vector<16xf32>
    %280 = vector.multi_reduction <add>, %279, %cst_192 [1] : vector<16x32xf32> to vector<16xf32>
    %281 = vector.shape_cast %280 : vector<16xf32> to vector<16x1xf32>
    %cst_193 = arith.constant 3.200000e+01 : f32
    %282 = vector.broadcast %cst_193 : f32 to vector<16x1xf32>
    %283 = arith.divf %281, %282 : vector<16x1xf32>
    %284 = vector.broadcast %276 : vector<16x1xf32> to vector<16x32xf32>
    %285 = arith.subf %268, %284 : vector<16x32xf32>
    %cst_194 = arith.constant 9.99999974E-6 : f32
    %286 = vector.broadcast %cst_194 : f32 to vector<16x1xf32>
    %287 = arith.addf %283, %286 : vector<16x1xf32>
    %288 = math.rsqrt %287 : vector<16x1xf32>
    %289 = vector.broadcast %288 : vector<16x1xf32> to vector<16x32xf32>
    %290 = arith.mulf %285, %289 : vector<16x32xf32>
    %291 = vector.broadcast %270 : vector<1x32xf32> to vector<16x32xf32>
    %292 = arith.mulf %290, %291 : vector<16x32xf32>
    %293 = vector.broadcast %272 : vector<1x32xf32> to vector<16x32xf32>
    %294 = arith.addf %292, %293 : vector<16x32xf32>
    %cst_195 = arith.constant 0.000000e+00 : f32
    %295 = vector.broadcast %cst_195 : f32 to vector<16x32xf32>
    %c1_196 = arith.constant 1 : index
    %c0_197 = arith.constant 0 : index
    %c0_198 = arith.constant 0 : index
    %c0_199 = arith.constant 0 : index
    %296 = vector.load %arg3[%c1_196, %c0_197, %c0_198, %c0_199] : memref<2x4x32x8xf32, #tpu.memory_space<vmem>>, vector<1x1x32x8xf32>
    %297 = vector.shape_cast %296 : vector<1x1x32x8xf32> to vector<32x8xf32>
    %298 = arith.truncf %294 : vector<16x32xf32> to vector<16x32xbf16>
    %299 = arith.truncf %297 : vector<32x8xf32> to vector<32x8xbf16>
    %cst_200 = arith.constant dense<0.000000e+00> : vector<16x8xf32>
    %300 = tpu.matmul %298, %299, %cst_200 {dimension_numbers = #tpu.dot_dimension_numbers<[1], [0], [0], [1], [0, 0, 1, 1], [], []>} : vector<16x32xbf16>, vector<32x8xbf16>, vector<16x8xf32> -> vector<16x8xf32>
    %c1_201 = arith.constant 1 : index
    %c0_202 = arith.constant 0 : index
    %c0_203 = arith.constant 0 : index
    %c0_204 = arith.constant 0 : index
    %301 = vector.load %arg4[%c1_201, %c0_202, %c0_203, %c0_204] : memref<2x4x1x8xf32, #tpu.memory_space<vmem>>, vector<1x1x1x8xf32>
    %302 = vector.shape_cast %301 : vector<1x1x1x8xf32> to vector<1x8xf32>
    %303 = vector.broadcast %302 : vector<1x8xf32> to vector<16x8xf32>
    %304 = arith.addf %300, %303 : vector<16x8xf32>
    %c1_205 = arith.constant 1 : index
    %c0_206 = arith.constant 0 : index
    %c0_207 = arith.constant 0 : index
    %c0_208 = arith.constant 0 : index
    %305 = vector.load %arg5[%c1_205, %c0_206, %c0_207, %c0_208] : memref<2x4x32x8xf32, #tpu.memory_space<vmem>>, vector<1x1x32x8xf32>
    %306 = vector.shape_cast %305 : vector<1x1x32x8xf32> to vector<32x8xf32>
    %307 = arith.truncf %294 : vector<16x32xf32> to vector<16x32xbf16>
    %308 = arith.truncf %306 : vector<32x8xf32> to vector<32x8xbf16>
    %cst_209 = arith.constant dense<0.000000e+00> : vector<16x8xf32>
    %309 = tpu.matmul %307, %308, %cst_209 {dimension_numbers = #tpu.dot_dimension_numbers<[1], [0], [0], [1], [0, 0, 1, 1], [], []>} : vector<16x32xbf16>, vector<32x8xbf16>, vector<16x8xf32> -> vector<16x8xf32>
    %c1_210 = arith.constant 1 : index
    %c0_211 = arith.constant 0 : index
    %c0_212 = arith.constant 0 : index
    %c0_213 = arith.constant 0 : index
    %310 = vector.load %arg6[%c1_210, %c0_211, %c0_212, %c0_213] : memref<2x4x1x8xf32, #tpu.memory_space<vmem>>, vector<1x1x1x8xf32>
    %311 = vector.shape_cast %310 : vector<1x1x1x8xf32> to vector<1x8xf32>
    %312 = vector.broadcast %311 : vector<1x8xf32> to vector<16x8xf32>
    %313 = arith.addf %309, %312 : vector<16x8xf32>
    %c1_214 = arith.constant 1 : index
    %c0_215 = arith.constant 0 : index
    %c0_216 = arith.constant 0 : index
    %c0_217 = arith.constant 0 : index
    %314 = vector.load %arg7[%c1_214, %c0_215, %c0_216, %c0_217] : memref<2x4x32x8xf32, #tpu.memory_space<vmem>>, vector<1x1x32x8xf32>
    %315 = vector.shape_cast %314 : vector<1x1x32x8xf32> to vector<32x8xf32>
    %316 = arith.truncf %294 : vector<16x32xf32> to vector<16x32xbf16>
    %317 = arith.truncf %315 : vector<32x8xf32> to vector<32x8xbf16>
    %cst_218 = arith.constant dense<0.000000e+00> : vector<16x8xf32>
    %318 = tpu.matmul %316, %317, %cst_218 {dimension_numbers = #tpu.dot_dimension_numbers<[1], [0], [0], [1], [0, 0, 1, 1], [], []>} : vector<16x32xbf16>, vector<32x8xbf16>, vector<16x8xf32> -> vector<16x8xf32>
    %c1_219 = arith.constant 1 : index
    %c0_220 = arith.constant 0 : index
    %c0_221 = arith.constant 0 : index
    %c0_222 = arith.constant 0 : index
    %319 = vector.load %arg8[%c1_219, %c0_220, %c0_221, %c0_222] : memref<2x4x1x8xf32, #tpu.memory_space<vmem>>, vector<1x1x1x8xf32>
    %320 = vector.shape_cast %319 : vector<1x1x1x8xf32> to vector<1x8xf32>
    %321 = vector.broadcast %320 : vector<1x8xf32> to vector<16x8xf32>
    %322 = arith.addf %318, %321 : vector<16x8xf32>
    %323 = arith.truncf %304 : vector<16x8xf32> to vector<16x8xbf16>
    %324 = arith.truncf %313 : vector<16x8xf32> to vector<16x8xbf16>
    %cst_223 = arith.constant dense<0.000000e+00> : vector<16x16xf32>
    %325 = tpu.matmul %323, %324, %cst_223 {dimension_numbers = #tpu.dot_dimension_numbers<[1], [1], [0], [0], [0, 0, 1, 0], [], []>} : vector<16x8xbf16>, vector<16x8xbf16>, vector<16x16xf32> -> vector<16x16xf32>
    %cst_224 = arith.constant 0.353553385 : f32
    %326 = vector.broadcast %cst_224 : f32 to vector<16x16xf32>
    %327 = arith.mulf %325, %326 : vector<16x16xf32>
    %328 = arith.addf %327, %7 : vector<16x16xf32>
    %cst_225 = arith.constant dense<0xFF800000> : vector<16xf32>
    %329 = vector.multi_reduction <maximumf>, %328, %cst_225 [1] : vector<16x16xf32> to vector<16xf32>
    %330 = vector.shape_cast %329 : vector<16xf32> to vector<16x1xf32>
    %331 = vector.broadcast %330 : vector<16x1xf32> to vector<16x16xf32>
    %332 = arith.subf %328, %331 : vector<16x16xf32>
    %333 = math.exp %332 : vector<16x16xf32>
    %cst_226 = arith.constant dense<0.000000e+00> : vector<16xf32>
    %334 = vector.multi_reduction <add>, %333, %cst_226 [1] : vector<16x16xf32> to vector<16xf32>
    %335 = vector.shape_cast %334 : vector<16xf32> to vector<16x1xf32>
    %336 = tpu.reciprocal %335 {approx = true} : vector<16x1xf32> -> vector<16x1xf32>
    %337 = vector.broadcast %336 : vector<16x1xf32> to vector<16x16xf32>
    %338 = arith.mulf %333, %337 : vector<16x16xf32>
    %339 = arith.truncf %338 : vector<16x16xf32> to vector<16x16xbf16>
    %340 = arith.truncf %322 : vector<16x8xf32> to vector<16x8xbf16>
    %cst_227 = arith.constant dense<0.000000e+00> : vector<16x8xf32>
    %341 = tpu.matmul %339, %340, %cst_227 {dimension_numbers = #tpu.dot_dimension_numbers<[1], [0], [0], [1], [0, 0, 1, 1], [], []>} : vector<16x16xbf16>, vector<16x8xbf16>, vector<16x8xf32> -> vector<16x8xf32>
    %c1_228 = arith.constant 1 : index
    %c0_229 = arith.constant 0 : index
    %c0_230 = arith.constant 0 : index
    %c0_231 = arith.constant 0 : index
    %342 = vector.load %arg9[%c1_228, %c0_229, %c0_230, %c0_231] : memref<2x4x8x32xf32, #tpu.memory_space<vmem>>, vector<1x1x8x32xf32>
    %343 = vector.shape_cast %342 : vector<1x1x8x32xf32> to vector<8x32xf32>
    %344 = arith.truncf %341 : vector<16x8xf32> to vector<16x8xbf16>
    %345 = arith.truncf %343 : vector<8x32xf32> to vector<8x32xbf16>
    %cst_232 = arith.constant dense<0.000000e+00> : vector<16x32xf32>
    %346 = tpu.matmul %344, %345, %cst_232 {dimension_numbers = #tpu.dot_dimension_numbers<[1], [0], [0], [1], [0, 0, 1, 1], [], []>} : vector<16x8xbf16>, vector<8x32xbf16>, vector<16x32xf32> -> vector<16x32xf32>
    %347 = arith.addf %295, %346 : vector<16x32xf32>
    %c1_233 = arith.constant 1 : index
    %c1_234 = arith.constant 1 : index
    %c0_235 = arith.constant 0 : index
    %c0_236 = arith.constant 0 : index
    %348 = vector.load %arg3[%c1_233, %c1_234, %c0_235, %c0_236] : memref<2x4x32x8xf32, #tpu.memory_space<vmem>>, vector<1x1x32x8xf32>
    %349 = vector.shape_cast %348 : vector<1x1x32x8xf32> to vector<32x8xf32>
    %350 = arith.truncf %294 : vector<16x32xf32> to vector<16x32xbf16>
    %351 = arith.truncf %349 : vector<32x8xf32> to vector<32x8xbf16>
    %cst_237 = arith.constant dense<0.000000e+00> : vector<16x8xf32>
    %352 = tpu.matmul %350, %351, %cst_237 {dimension_numbers = #tpu.dot_dimension_numbers<[1], [0], [0], [1], [0, 0, 1, 1], [], []>} : vector<16x32xbf16>, vector<32x8xbf16>, vector<16x8xf32> -> vector<16x8xf32>
    %c1_238 = arith.constant 1 : index
    %c1_239 = arith.constant 1 : index
    %c0_240 = arith.constant 0 : index
    %c0_241 = arith.constant 0 : index
    %353 = vector.load %arg4[%c1_238, %c1_239, %c0_240, %c0_241] : memref<2x4x1x8xf32, #tpu.memory_space<vmem>>, vector<1x1x1x8xf32>
    %354 = vector.shape_cast %353 : vector<1x1x1x8xf32> to vector<1x8xf32>
    %355 = vector.broadcast %354 : vector<1x8xf32> to vector<16x8xf32>
    %356 = arith.addf %352, %355 : vector<16x8xf32>
    %c1_242 = arith.constant 1 : index
    %c1_243 = arith.constant 1 : index
    %c0_244 = arith.constant 0 : index
    %c0_245 = arith.constant 0 : index
    %357 = vector.load %arg5[%c1_242, %c1_243, %c0_244, %c0_245] : memref<2x4x32x8xf32, #tpu.memory_space<vmem>>, vector<1x1x32x8xf32>
    %358 = vector.shape_cast %357 : vector<1x1x32x8xf32> to vector<32x8xf32>
    %359 = arith.truncf %294 : vector<16x32xf32> to vector<16x32xbf16>
    %360 = arith.truncf %358 : vector<32x8xf32> to vector<32x8xbf16>
    %cst_246 = arith.constant dense<0.000000e+00> : vector<16x8xf32>
    %361 = tpu.matmul %359, %360, %cst_246 {dimension_numbers = #tpu.dot_dimension_numbers<[1], [0], [0], [1], [0, 0, 1, 1], [], []>} : vector<16x32xbf16>, vector<32x8xbf16>, vector<16x8xf32> -> vector<16x8xf32>
    %c1_247 = arith.constant 1 : index
    %c1_248 = arith.constant 1 : index
    %c0_249 = arith.constant 0 : index
    %c0_250 = arith.constant 0 : index
    %362 = vector.load %arg6[%c1_247, %c1_248, %c0_249, %c0_250] : memref<2x4x1x8xf32, #tpu.memory_space<vmem>>, vector<1x1x1x8xf32>
    %363 = vector.shape_cast %362 : vector<1x1x1x8xf32> to vector<1x8xf32>
    %364 = vector.broadcast %363 : vector<1x8xf32> to vector<16x8xf32>
    %365 = arith.addf %361, %364 : vector<16x8xf32>
    %c1_251 = arith.constant 1 : index
    %c1_252 = arith.constant 1 : index
    %c0_253 = arith.constant 0 : index
    %c0_254 = arith.constant 0 : index
    %366 = vector.load %arg7[%c1_251, %c1_252, %c0_253, %c0_254] : memref<2x4x32x8xf32, #tpu.memory_space<vmem>>, vector<1x1x32x8xf32>
    %367 = vector.shape_cast %366 : vector<1x1x32x8xf32> to vector<32x8xf32>
    %368 = arith.truncf %294 : vector<16x32xf32> to vector<16x32xbf16>
    %369 = arith.truncf %367 : vector<32x8xf32> to vector<32x8xbf16>
    %cst_255 = arith.constant dense<0.000000e+00> : vector<16x8xf32>
    %370 = tpu.matmul %368, %369, %cst_255 {dimension_numbers = #tpu.dot_dimension_numbers<[1], [0], [0], [1], [0, 0, 1, 1], [], []>} : vector<16x32xbf16>, vector<32x8xbf16>, vector<16x8xf32> -> vector<16x8xf32>
    %c1_256 = arith.constant 1 : index
    %c1_257 = arith.constant 1 : index
    %c0_258 = arith.constant 0 : index
    %c0_259 = arith.constant 0 : index
    %371 = vector.load %arg8[%c1_256, %c1_257, %c0_258, %c0_259] : memref<2x4x1x8xf32, #tpu.memory_space<vmem>>, vector<1x1x1x8xf32>
    %372 = vector.shape_cast %371 : vector<1x1x1x8xf32> to vector<1x8xf32>
    %373 = vector.broadcast %372 : vector<1x8xf32> to vector<16x8xf32>
    %374 = arith.addf %370, %373 : vector<16x8xf32>
    %375 = arith.truncf %356 : vector<16x8xf32> to vector<16x8xbf16>
    %376 = arith.truncf %365 : vector<16x8xf32> to vector<16x8xbf16>
    %cst_260 = arith.constant dense<0.000000e+00> : vector<16x16xf32>
    %377 = tpu.matmul %375, %376, %cst_260 {dimension_numbers = #tpu.dot_dimension_numbers<[1], [1], [0], [0], [0, 0, 1, 0], [], []>} : vector<16x8xbf16>, vector<16x8xbf16>, vector<16x16xf32> -> vector<16x16xf32>
    %cst_261 = arith.constant 0.353553385 : f32
    %378 = vector.broadcast %cst_261 : f32 to vector<16x16xf32>
    %379 = arith.mulf %377, %378 : vector<16x16xf32>
    %380 = arith.addf %379, %7 : vector<16x16xf32>
    %cst_262 = arith.constant dense<0xFF800000> : vector<16xf32>
    %381 = vector.multi_reduction <maximumf>, %380, %cst_262 [1] : vector<16x16xf32> to vector<16xf32>
    %382 = vector.shape_cast %381 : vector<16xf32> to vector<16x1xf32>
    %383 = vector.broadcast %382 : vector<16x1xf32> to vector<16x16xf32>
    %384 = arith.subf %380, %383 : vector<16x16xf32>
    %385 = math.exp %384 : vector<16x16xf32>
    %cst_263 = arith.constant dense<0.000000e+00> : vector<16xf32>
    %386 = vector.multi_reduction <add>, %385, %cst_263 [1] : vector<16x16xf32> to vector<16xf32>
    %387 = vector.shape_cast %386 : vector<16xf32> to vector<16x1xf32>
    %388 = tpu.reciprocal %387 {approx = true} : vector<16x1xf32> -> vector<16x1xf32>
    %389 = vector.broadcast %388 : vector<16x1xf32> to vector<16x16xf32>
    %390 = arith.mulf %385, %389 : vector<16x16xf32>
    %391 = arith.truncf %390 : vector<16x16xf32> to vector<16x16xbf16>
    %392 = arith.truncf %374 : vector<16x8xf32> to vector<16x8xbf16>
    %cst_264 = arith.constant dense<0.000000e+00> : vector<16x8xf32>
    %393 = tpu.matmul %391, %392, %cst_264 {dimension_numbers = #tpu.dot_dimension_numbers<[1], [0], [0], [1], [0, 0, 1, 1], [], []>} : vector<16x16xbf16>, vector<16x8xbf16>, vector<16x8xf32> -> vector<16x8xf32>
    %c1_265 = arith.constant 1 : index
    %c1_266 = arith.constant 1 : index
    %c0_267 = arith.constant 0 : index
    %c0_268 = arith.constant 0 : index
    %394 = vector.load %arg9[%c1_265, %c1_266, %c0_267, %c0_268] : memref<2x4x8x32xf32, #tpu.memory_space<vmem>>, vector<1x1x8x32xf32>
    %395 = vector.shape_cast %394 : vector<1x1x8x32xf32> to vector<8x32xf32>
    %396 = arith.truncf %393 : vector<16x8xf32> to vector<16x8xbf16>
    %397 = arith.truncf %395 : vector<8x32xf32> to vector<8x32xbf16>
    %cst_269 = arith.constant dense<0.000000e+00> : vector<16x32xf32>
    %398 = tpu.matmul %396, %397, %cst_269 {dimension_numbers = #tpu.dot_dimension_numbers<[1], [0], [0], [1], [0, 0, 1, 1], [], []>} : vector<16x8xbf16>, vector<8x32xbf16>, vector<16x32xf32> -> vector<16x32xf32>
    %399 = arith.addf %347, %398 : vector<16x32xf32>
    %c1_270 = arith.constant 1 : index
    %c2_271 = arith.constant 2 : index
    %c0_272 = arith.constant 0 : index
    %c0_273 = arith.constant 0 : index
    %400 = vector.load %arg3[%c1_270, %c2_271, %c0_272, %c0_273] : memref<2x4x32x8xf32, #tpu.memory_space<vmem>>, vector<1x1x32x8xf32>
    %401 = vector.shape_cast %400 : vector<1x1x32x8xf32> to vector<32x8xf32>
    %402 = arith.truncf %294 : vector<16x32xf32> to vector<16x32xbf16>
    %403 = arith.truncf %401 : vector<32x8xf32> to vector<32x8xbf16>
    %cst_274 = arith.constant dense<0.000000e+00> : vector<16x8xf32>
    %404 = tpu.matmul %402, %403, %cst_274 {dimension_numbers = #tpu.dot_dimension_numbers<[1], [0], [0], [1], [0, 0, 1, 1], [], []>} : vector<16x32xbf16>, vector<32x8xbf16>, vector<16x8xf32> -> vector<16x8xf32>
    %c1_275 = arith.constant 1 : index
    %c2_276 = arith.constant 2 : index
    %c0_277 = arith.constant 0 : index
    %c0_278 = arith.constant 0 : index
    %405 = vector.load %arg4[%c1_275, %c2_276, %c0_277, %c0_278] : memref<2x4x1x8xf32, #tpu.memory_space<vmem>>, vector<1x1x1x8xf32>
    %406 = vector.shape_cast %405 : vector<1x1x1x8xf32> to vector<1x8xf32>
    %407 = vector.broadcast %406 : vector<1x8xf32> to vector<16x8xf32>
    %408 = arith.addf %404, %407 : vector<16x8xf32>
    %c1_279 = arith.constant 1 : index
    %c2_280 = arith.constant 2 : index
    %c0_281 = arith.constant 0 : index
    %c0_282 = arith.constant 0 : index
    %409 = vector.load %arg5[%c1_279, %c2_280, %c0_281, %c0_282] : memref<2x4x32x8xf32, #tpu.memory_space<vmem>>, vector<1x1x32x8xf32>
    %410 = vector.shape_cast %409 : vector<1x1x32x8xf32> to vector<32x8xf32>
    %411 = arith.truncf %294 : vector<16x32xf32> to vector<16x32xbf16>
    %412 = arith.truncf %410 : vector<32x8xf32> to vector<32x8xbf16>
    %cst_283 = arith.constant dense<0.000000e+00> : vector<16x8xf32>
    %413 = tpu.matmul %411, %412, %cst_283 {dimension_numbers = #tpu.dot_dimension_numbers<[1], [0], [0], [1], [0, 0, 1, 1], [], []>} : vector<16x32xbf16>, vector<32x8xbf16>, vector<16x8xf32> -> vector<16x8xf32>
    %c1_284 = arith.constant 1 : index
    %c2_285 = arith.constant 2 : index
    %c0_286 = arith.constant 0 : index
    %c0_287 = arith.constant 0 : index
    %414 = vector.load %arg6[%c1_284, %c2_285, %c0_286, %c0_287] : memref<2x4x1x8xf32, #tpu.memory_space<vmem>>, vector<1x1x1x8xf32>
    %415 = vector.shape_cast %414 : vector<1x1x1x8xf32> to vector<1x8xf32>
    %416 = vector.broadcast %415 : vector<1x8xf32> to vector<16x8xf32>
    %417 = arith.addf %413, %416 : vector<16x8xf32>
    %c1_288 = arith.constant 1 : index
    %c2_289 = arith.constant 2 : index
    %c0_290 = arith.constant 0 : index
    %c0_291 = arith.constant 0 : index
    %418 = vector.load %arg7[%c1_288, %c2_289, %c0_290, %c0_291] : memref<2x4x32x8xf32, #tpu.memory_space<vmem>>, vector<1x1x32x8xf32>
    %419 = vector.shape_cast %418 : vector<1x1x32x8xf32> to vector<32x8xf32>
    %420 = arith.truncf %294 : vector<16x32xf32> to vector<16x32xbf16>
    %421 = arith.truncf %419 : vector<32x8xf32> to vector<32x8xbf16>
    %cst_292 = arith.constant dense<0.000000e+00> : vector<16x8xf32>
    %422 = tpu.matmul %420, %421, %cst_292 {dimension_numbers = #tpu.dot_dimension_numbers<[1], [0], [0], [1], [0, 0, 1, 1], [], []>} : vector<16x32xbf16>, vector<32x8xbf16>, vector<16x8xf32> -> vector<16x8xf32>
    %c1_293 = arith.constant 1 : index
    %c2_294 = arith.constant 2 : index
    %c0_295 = arith.constant 0 : index
    %c0_296 = arith.constant 0 : index
    %423 = vector.load %arg8[%c1_293, %c2_294, %c0_295, %c0_296] : memref<2x4x1x8xf32, #tpu.memory_space<vmem>>, vector<1x1x1x8xf32>
    %424 = vector.shape_cast %423 : vector<1x1x1x8xf32> to vector<1x8xf32>
    %425 = vector.broadcast %424 : vector<1x8xf32> to vector<16x8xf32>
    %426 = arith.addf %422, %425 : vector<16x8xf32>
    %427 = arith.truncf %408 : vector<16x8xf32> to vector<16x8xbf16>
    %428 = arith.truncf %417 : vector<16x8xf32> to vector<16x8xbf16>
    %cst_297 = arith.constant dense<0.000000e+00> : vector<16x16xf32>
    %429 = tpu.matmul %427, %428, %cst_297 {dimension_numbers = #tpu.dot_dimension_numbers<[1], [1], [0], [0], [0, 0, 1, 0], [], []>} : vector<16x8xbf16>, vector<16x8xbf16>, vector<16x16xf32> -> vector<16x16xf32>
    %cst_298 = arith.constant 0.353553385 : f32
    %430 = vector.broadcast %cst_298 : f32 to vector<16x16xf32>
    %431 = arith.mulf %429, %430 : vector<16x16xf32>
    %432 = arith.addf %431, %7 : vector<16x16xf32>
    %cst_299 = arith.constant dense<0xFF800000> : vector<16xf32>
    %433 = vector.multi_reduction <maximumf>, %432, %cst_299 [1] : vector<16x16xf32> to vector<16xf32>
    %434 = vector.shape_cast %433 : vector<16xf32> to vector<16x1xf32>
    %435 = vector.broadcast %434 : vector<16x1xf32> to vector<16x16xf32>
    %436 = arith.subf %432, %435 : vector<16x16xf32>
    %437 = math.exp %436 : vector<16x16xf32>
    %cst_300 = arith.constant dense<0.000000e+00> : vector<16xf32>
    %438 = vector.multi_reduction <add>, %437, %cst_300 [1] : vector<16x16xf32> to vector<16xf32>
    %439 = vector.shape_cast %438 : vector<16xf32> to vector<16x1xf32>
    %440 = tpu.reciprocal %439 {approx = true} : vector<16x1xf32> -> vector<16x1xf32>
    %441 = vector.broadcast %440 : vector<16x1xf32> to vector<16x16xf32>
    %442 = arith.mulf %437, %441 : vector<16x16xf32>
    %443 = arith.truncf %442 : vector<16x16xf32> to vector<16x16xbf16>
    %444 = arith.truncf %426 : vector<16x8xf32> to vector<16x8xbf16>
    %cst_301 = arith.constant dense<0.000000e+00> : vector<16x8xf32>
    %445 = tpu.matmul %443, %444, %cst_301 {dimension_numbers = #tpu.dot_dimension_numbers<[1], [0], [0], [1], [0, 0, 1, 1], [], []>} : vector<16x16xbf16>, vector<16x8xbf16>, vector<16x8xf32> -> vector<16x8xf32>
    %c1_302 = arith.constant 1 : index
    %c2_303 = arith.constant 2 : index
    %c0_304 = arith.constant 0 : index
    %c0_305 = arith.constant 0 : index
    %446 = vector.load %arg9[%c1_302, %c2_303, %c0_304, %c0_305] : memref<2x4x8x32xf32, #tpu.memory_space<vmem>>, vector<1x1x8x32xf32>
    %447 = vector.shape_cast %446 : vector<1x1x8x32xf32> to vector<8x32xf32>
    %448 = arith.truncf %445 : vector<16x8xf32> to vector<16x8xbf16>
    %449 = arith.truncf %447 : vector<8x32xf32> to vector<8x32xbf16>
    %cst_306 = arith.constant dense<0.000000e+00> : vector<16x32xf32>
    %450 = tpu.matmul %448, %449, %cst_306 {dimension_numbers = #tpu.dot_dimension_numbers<[1], [0], [0], [1], [0, 0, 1, 1], [], []>} : vector<16x8xbf16>, vector<8x32xbf16>, vector<16x32xf32> -> vector<16x32xf32>
    %451 = arith.addf %399, %450 : vector<16x32xf32>
    %c1_307 = arith.constant 1 : index
    %c3_308 = arith.constant 3 : index
    %c0_309 = arith.constant 0 : index
    %c0_310 = arith.constant 0 : index
    %452 = vector.load %arg3[%c1_307, %c3_308, %c0_309, %c0_310] : memref<2x4x32x8xf32, #tpu.memory_space<vmem>>, vector<1x1x32x8xf32>
    %453 = vector.shape_cast %452 : vector<1x1x32x8xf32> to vector<32x8xf32>
    %454 = arith.truncf %294 : vector<16x32xf32> to vector<16x32xbf16>
    %455 = arith.truncf %453 : vector<32x8xf32> to vector<32x8xbf16>
    %cst_311 = arith.constant dense<0.000000e+00> : vector<16x8xf32>
    %456 = tpu.matmul %454, %455, %cst_311 {dimension_numbers = #tpu.dot_dimension_numbers<[1], [0], [0], [1], [0, 0, 1, 1], [], []>} : vector<16x32xbf16>, vector<32x8xbf16>, vector<16x8xf32> -> vector<16x8xf32>
    %c1_312 = arith.constant 1 : index
    %c3_313 = arith.constant 3 : index
    %c0_314 = arith.constant 0 : index
    %c0_315 = arith.constant 0 : index
    %457 = vector.load %arg4[%c1_312, %c3_313, %c0_314, %c0_315] : memref<2x4x1x8xf32, #tpu.memory_space<vmem>>, vector<1x1x1x8xf32>
    %458 = vector.shape_cast %457 : vector<1x1x1x8xf32> to vector<1x8xf32>
    %459 = vector.broadcast %458 : vector<1x8xf32> to vector<16x8xf32>
    %460 = arith.addf %456, %459 : vector<16x8xf32>
    %c1_316 = arith.constant 1 : index
    %c3_317 = arith.constant 3 : index
    %c0_318 = arith.constant 0 : index
    %c0_319 = arith.constant 0 : index
    %461 = vector.load %arg5[%c1_316, %c3_317, %c0_318, %c0_319] : memref<2x4x32x8xf32, #tpu.memory_space<vmem>>, vector<1x1x32x8xf32>
    %462 = vector.shape_cast %461 : vector<1x1x32x8xf32> to vector<32x8xf32>
    %463 = arith.truncf %294 : vector<16x32xf32> to vector<16x32xbf16>
    %464 = arith.truncf %462 : vector<32x8xf32> to vector<32x8xbf16>
    %cst_320 = arith.constant dense<0.000000e+00> : vector<16x8xf32>
    %465 = tpu.matmul %463, %464, %cst_320 {dimension_numbers = #tpu.dot_dimension_numbers<[1], [0], [0], [1], [0, 0, 1, 1], [], []>} : vector<16x32xbf16>, vector<32x8xbf16>, vector<16x8xf32> -> vector<16x8xf32>
    %c1_321 = arith.constant 1 : index
    %c3_322 = arith.constant 3 : index
    %c0_323 = arith.constant 0 : index
    %c0_324 = arith.constant 0 : index
    %466 = vector.load %arg6[%c1_321, %c3_322, %c0_323, %c0_324] : memref<2x4x1x8xf32, #tpu.memory_space<vmem>>, vector<1x1x1x8xf32>
    %467 = vector.shape_cast %466 : vector<1x1x1x8xf32> to vector<1x8xf32>
    %468 = vector.broadcast %467 : vector<1x8xf32> to vector<16x8xf32>
    %469 = arith.addf %465, %468 : vector<16x8xf32>
    %c1_325 = arith.constant 1 : index
    %c3_326 = arith.constant 3 : index
    %c0_327 = arith.constant 0 : index
    %c0_328 = arith.constant 0 : index
    %470 = vector.load %arg7[%c1_325, %c3_326, %c0_327, %c0_328] : memref<2x4x32x8xf32, #tpu.memory_space<vmem>>, vector<1x1x32x8xf32>
    %471 = vector.shape_cast %470 : vector<1x1x32x8xf32> to vector<32x8xf32>
    %472 = arith.truncf %294 : vector<16x32xf32> to vector<16x32xbf16>
    %473 = arith.truncf %471 : vector<32x8xf32> to vector<32x8xbf16>
    %cst_329 = arith.constant dense<0.000000e+00> : vector<16x8xf32>
    %474 = tpu.matmul %472, %473, %cst_329 {dimension_numbers = #tpu.dot_dimension_numbers<[1], [0], [0], [1], [0, 0, 1, 1], [], []>} : vector<16x32xbf16>, vector<32x8xbf16>, vector<16x8xf32> -> vector<16x8xf32>
    %c1_330 = arith.constant 1 : index
    %c3_331 = arith.constant 3 : index
    %c0_332 = arith.constant 0 : index
    %c0_333 = arith.constant 0 : index
    %475 = vector.load %arg8[%c1_330, %c3_331, %c0_332, %c0_333] : memref<2x4x1x8xf32, #tpu.memory_space<vmem>>, vector<1x1x1x8xf32>
    %476 = vector.shape_cast %475 : vector<1x1x1x8xf32> to vector<1x8xf32>
    %477 = vector.broadcast %476 : vector<1x8xf32> to vector<16x8xf32>
    %478 = arith.addf %474, %477 : vector<16x8xf32>
    %479 = arith.truncf %460 : vector<16x8xf32> to vector<16x8xbf16>
    %480 = arith.truncf %469 : vector<16x8xf32> to vector<16x8xbf16>
    %cst_334 = arith.constant dense<0.000000e+00> : vector<16x16xf32>
    %481 = tpu.matmul %479, %480, %cst_334 {dimension_numbers = #tpu.dot_dimension_numbers<[1], [1], [0], [0], [0, 0, 1, 0], [], []>} : vector<16x8xbf16>, vector<16x8xbf16>, vector<16x16xf32> -> vector<16x16xf32>
    %cst_335 = arith.constant 0.353553385 : f32
    %482 = vector.broadcast %cst_335 : f32 to vector<16x16xf32>
    %483 = arith.mulf %481, %482 : vector<16x16xf32>
    %484 = arith.addf %483, %7 : vector<16x16xf32>
    %cst_336 = arith.constant dense<0xFF800000> : vector<16xf32>
    %485 = vector.multi_reduction <maximumf>, %484, %cst_336 [1] : vector<16x16xf32> to vector<16xf32>
    %486 = vector.shape_cast %485 : vector<16xf32> to vector<16x1xf32>
    %487 = vector.broadcast %486 : vector<16x1xf32> to vector<16x16xf32>
    %488 = arith.subf %484, %487 : vector<16x16xf32>
    %489 = math.exp %488 : vector<16x16xf32>
    %cst_337 = arith.constant dense<0.000000e+00> : vector<16xf32>
    %490 = vector.multi_reduction <add>, %489, %cst_337 [1] : vector<16x16xf32> to vector<16xf32>
    %491 = vector.shape_cast %490 : vector<16xf32> to vector<16x1xf32>
    %492 = tpu.reciprocal %491 {approx = true} : vector<16x1xf32> -> vector<16x1xf32>
    %493 = vector.broadcast %492 : vector<16x1xf32> to vector<16x16xf32>
    %494 = arith.mulf %489, %493 : vector<16x16xf32>
    %495 = arith.truncf %494 : vector<16x16xf32> to vector<16x16xbf16>
    %496 = arith.truncf %478 : vector<16x8xf32> to vector<16x8xbf16>
    %cst_338 = arith.constant dense<0.000000e+00> : vector<16x8xf32>
    %497 = tpu.matmul %495, %496, %cst_338 {dimension_numbers = #tpu.dot_dimension_numbers<[1], [0], [0], [1], [0, 0, 1, 1], [], []>} : vector<16x16xbf16>, vector<16x8xbf16>, vector<16x8xf32> -> vector<16x8xf32>
    %c1_339 = arith.constant 1 : index
    %c3_340 = arith.constant 3 : index
    %c0_341 = arith.constant 0 : index
    %c0_342 = arith.constant 0 : index
    %498 = vector.load %arg9[%c1_339, %c3_340, %c0_341, %c0_342] : memref<2x4x8x32xf32, #tpu.memory_space<vmem>>, vector<1x1x8x32xf32>
    %499 = vector.shape_cast %498 : vector<1x1x8x32xf32> to vector<8x32xf32>
    %500 = arith.truncf %497 : vector<16x8xf32> to vector<16x8xbf16>
    %501 = arith.truncf %499 : vector<8x32xf32> to vector<8x32xbf16>
    %cst_343 = arith.constant dense<0.000000e+00> : vector<16x32xf32>
    %502 = tpu.matmul %500, %501, %cst_343 {dimension_numbers = #tpu.dot_dimension_numbers<[1], [0], [0], [1], [0, 0, 1, 1], [], []>} : vector<16x8xbf16>, vector<8x32xbf16>, vector<16x32xf32> -> vector<16x32xf32>
    %503 = arith.addf %451, %502 : vector<16x32xf32>
    %504 = arith.addf %294, %503 : vector<16x32xf32>
    %c1_344 = arith.constant 1 : index
    %c0_345 = arith.constant 0 : index
    %c0_346 = arith.constant 0 : index
    %505 = vector.load %arg10[%c1_344, %c0_345, %c0_346] : memref<2x1x32xf32, #tpu.memory_space<vmem>>, vector<1x1x32xf32>
    %506 = vector.shape_cast %505 : vector<1x1x32xf32> to vector<1x32xf32>
    %507 = vector.broadcast %506 : vector<1x32xf32> to vector<16x32xf32>
    %508 = arith.addf %504, %507 : vector<16x32xf32>
    %c1_347 = arith.constant 1 : index
    %c0_348 = arith.constant 0 : index
    %c0_349 = arith.constant 0 : index
    %509 = vector.load %arg15[%c1_347, %c0_348, %c0_349] : memref<2x1x32xf32, #tpu.memory_space<vmem>>, vector<1x1x32xf32>
    %510 = vector.shape_cast %509 : vector<1x1x32xf32> to vector<1x32xf32>
    %c1_350 = arith.constant 1 : index
    %c0_351 = arith.constant 0 : index
    %c0_352 = arith.constant 0 : index
    %511 = vector.load %arg16[%c1_350, %c0_351, %c0_352] : memref<2x1x32xf32, #tpu.memory_space<vmem>>, vector<1x1x32xf32>
    %512 = vector.shape_cast %511 : vector<1x1x32xf32> to vector<1x32xf32>
    %cst_353 = arith.constant dense<0.000000e+00> : vector<16xf32>
    %513 = vector.multi_reduction <add>, %508, %cst_353 [1] : vector<16x32xf32> to vector<16xf32>
    %514 = vector.shape_cast %513 : vector<16xf32> to vector<16x1xf32>
    %cst_354 = arith.constant 3.200000e+01 : f32
    %515 = vector.broadcast %cst_354 : f32 to vector<16x1xf32>
    %516 = arith.divf %514, %515 : vector<16x1xf32>
    %517 = vector.broadcast %516 : vector<16x1xf32> to vector<16x32xf32>
    %518 = arith.subf %508, %517 : vector<16x32xf32>
    %519 = arith.mulf %518, %518 : vector<16x32xf32>
    %cst_355 = arith.constant dense<0.000000e+00> : vector<16xf32>
    %520 = vector.multi_reduction <add>, %519, %cst_355 [1] : vector<16x32xf32> to vector<16xf32>
    %521 = vector.shape_cast %520 : vector<16xf32> to vector<16x1xf32>
    %cst_356 = arith.constant 3.200000e+01 : f32
    %522 = vector.broadcast %cst_356 : f32 to vector<16x1xf32>
    %523 = arith.divf %521, %522 : vector<16x1xf32>
    %524 = vector.broadcast %516 : vector<16x1xf32> to vector<16x32xf32>
    %525 = arith.subf %508, %524 : vector<16x32xf32>
    %cst_357 = arith.constant 9.99999974E-6 : f32
    %526 = vector.broadcast %cst_357 : f32 to vector<16x1xf32>
    %527 = arith.addf %523, %526 : vector<16x1xf32>
    %528 = math.rsqrt %527 : vector<16x1xf32>
    %529 = vector.broadcast %528 : vector<16x1xf32> to vector<16x32xf32>
    %530 = arith.mulf %525, %529 : vector<16x32xf32>
    %531 = vector.broadcast %510 : vector<1x32xf32> to vector<16x32xf32>
    %532 = arith.mulf %530, %531 : vector<16x32xf32>
    %533 = vector.broadcast %512 : vector<1x32xf32> to vector<16x32xf32>
    %534 = arith.addf %532, %533 : vector<16x32xf32>
    %c1_358 = arith.constant 1 : index
    %c0_359 = arith.constant 0 : index
    %c0_360 = arith.constant 0 : index
    %535 = vector.load %arg11[%c1_358, %c0_359, %c0_360] : memref<2x32x64xf32, #tpu.memory_space<vmem>>, vector<1x32x64xf32>
    %536 = vector.shape_cast %535 : vector<1x32x64xf32> to vector<32x64xf32>
    %537 = arith.truncf %534 : vector<16x32xf32> to vector<16x32xbf16>
    %538 = arith.truncf %536 : vector<32x64xf32> to vector<32x64xbf16>
    %cst_361 = arith.constant dense<0.000000e+00> : vector<16x64xf32>
    %539 = tpu.matmul %537, %538, %cst_361 {dimension_numbers = #tpu.dot_dimension_numbers<[1], [0], [0], [1], [0, 0, 1, 1], [], []>} : vector<16x32xbf16>, vector<32x64xbf16>, vector<16x64xf32> -> vector<16x64xf32>
    %c1_362 = arith.constant 1 : index
    %c0_363 = arith.constant 0 : index
    %c0_364 = arith.constant 0 : index
    %540 = vector.load %arg12[%c1_362, %c0_363, %c0_364] : memref<2x1x64xf32, #tpu.memory_space<vmem>>, vector<1x1x64xf32>
    %541 = vector.shape_cast %540 : vector<1x1x64xf32> to vector<1x64xf32>
    %542 = vector.broadcast %541 : vector<1x64xf32> to vector<16x64xf32>
    %543 = arith.addf %539, %542 : vector<16x64xf32>
    %cst_365 = arith.constant 0.000000e+00 : f32
    %544 = vector.broadcast %cst_365 : f32 to vector<16x64xf32>
    %545 = arith.maximumf %543, %544 : vector<16x64xf32>
    %c1_366 = arith.constant 1 : index
    %c0_367 = arith.constant 0 : index
    %c0_368 = arith.constant 0 : index
    %546 = vector.load %arg13[%c1_366, %c0_367, %c0_368] : memref<2x64x32xf32, #tpu.memory_space<vmem>>, vector<1x64x32xf32>
    %547 = vector.shape_cast %546 : vector<1x64x32xf32> to vector<64x32xf32>
    %548 = arith.truncf %545 : vector<16x64xf32> to vector<16x64xbf16>
    %549 = arith.truncf %547 : vector<64x32xf32> to vector<64x32xbf16>
    %cst_369 = arith.constant dense<0.000000e+00> : vector<16x32xf32>
    %550 = tpu.matmul %548, %549, %cst_369 {dimension_numbers = #tpu.dot_dimension_numbers<[1], [0], [0], [1], [0, 0, 1, 1], [], []>} : vector<16x64xbf16>, vector<64x32xbf16>, vector<16x32xf32> -> vector<16x32xf32>
    %c1_370 = arith.constant 1 : index
    %c0_371 = arith.constant 0 : index
    %c0_372 = arith.constant 0 : index
    %551 = vector.load %arg14[%c1_370, %c0_371, %c0_372] : memref<2x1x32xf32, #tpu.memory_space<vmem>>, vector<1x1x32xf32>
    %552 = vector.shape_cast %551 : vector<1x1x32xf32> to vector<1x32xf32>
    %553 = vector.broadcast %552 : vector<1x32xf32> to vector<16x32xf32>
    %554 = arith.addf %550, %553 : vector<16x32xf32>
    %555 = arith.addf %534, %554 : vector<16x32xf32>
    %c1_373 = arith.constant 1 : index
    %c0_374 = arith.constant 0 : index
    %c0_375 = arith.constant 0 : index
    %556 = vector.load %arg17[%c1_373, %c0_374, %c0_375] : memref<2x1x32xf32, #tpu.memory_space<vmem>>, vector<1x1x32xf32>
    %557 = vector.shape_cast %556 : vector<1x1x32xf32> to vector<1x32xf32>
    %c1_376 = arith.constant 1 : index
    %c0_377 = arith.constant 0 : index
    %c0_378 = arith.constant 0 : index
    %558 = vector.load %arg18[%c1_376, %c0_377, %c0_378] : memref<2x1x32xf32, #tpu.memory_space<vmem>>, vector<1x1x32xf32>
    %559 = vector.shape_cast %558 : vector<1x1x32xf32> to vector<1x32xf32>
    %cst_379 = arith.constant dense<0.000000e+00> : vector<16xf32>
    %560 = vector.multi_reduction <add>, %555, %cst_379 [1] : vector<16x32xf32> to vector<16xf32>
    %561 = vector.shape_cast %560 : vector<16xf32> to vector<16x1xf32>
    %cst_380 = arith.constant 3.200000e+01 : f32
    %562 = vector.broadcast %cst_380 : f32 to vector<16x1xf32>
    %563 = arith.divf %561, %562 : vector<16x1xf32>
    %564 = vector.broadcast %563 : vector<16x1xf32> to vector<16x32xf32>
    %565 = arith.subf %555, %564 : vector<16x32xf32>
    %566 = arith.mulf %565, %565 : vector<16x32xf32>
    %cst_381 = arith.constant dense<0.000000e+00> : vector<16xf32>
    %567 = vector.multi_reduction <add>, %566, %cst_381 [1] : vector<16x32xf32> to vector<16xf32>
    %568 = vector.shape_cast %567 : vector<16xf32> to vector<16x1xf32>
    %cst_382 = arith.constant 3.200000e+01 : f32
    %569 = vector.broadcast %cst_382 : f32 to vector<16x1xf32>
    %570 = arith.divf %568, %569 : vector<16x1xf32>
    %571 = vector.broadcast %563 : vector<16x1xf32> to vector<16x32xf32>
    %572 = arith.subf %555, %571 : vector<16x32xf32>
    %cst_383 = arith.constant 9.99999974E-6 : f32
    %573 = vector.broadcast %cst_383 : f32 to vector<16x1xf32>
    %574 = arith.addf %570, %573 : vector<16x1xf32>
    %575 = math.rsqrt %574 : vector<16x1xf32>
    %576 = vector.broadcast %575 : vector<16x1xf32> to vector<16x32xf32>
    %577 = arith.mulf %572, %576 : vector<16x32xf32>
    %578 = vector.broadcast %557 : vector<1x32xf32> to vector<16x32xf32>
    %579 = arith.mulf %577, %578 : vector<16x32xf32>
    %580 = vector.broadcast %559 : vector<1x32xf32> to vector<16x32xf32>
    %581 = arith.addf %579, %580 : vector<16x32xf32>
    %c0_384 = arith.constant 0 : index
    %c0_385 = arith.constant 0 : index
    %582 = vector.load %arg19[%c0_384, %c0_385] : memref<1x32xf32, #tpu.memory_space<vmem>>, vector<1x32xf32>
    %c0_386 = arith.constant 0 : index
    %c0_387 = arith.constant 0 : index
    %583 = vector.load %arg20[%c0_386, %c0_387] : memref<1x32xf32, #tpu.memory_space<vmem>>, vector<1x32xf32>
    %cst_388 = arith.constant dense<0.000000e+00> : vector<16xf32>
    %584 = vector.multi_reduction <add>, %581, %cst_388 [1] : vector<16x32xf32> to vector<16xf32>
    %585 = vector.shape_cast %584 : vector<16xf32> to vector<16x1xf32>
    %cst_389 = arith.constant 3.200000e+01 : f32
    %586 = vector.broadcast %cst_389 : f32 to vector<16x1xf32>
    %587 = arith.divf %585, %586 : vector<16x1xf32>
    %588 = vector.broadcast %587 : vector<16x1xf32> to vector<16x32xf32>
    %589 = arith.subf %581, %588 : vector<16x32xf32>
    %590 = arith.mulf %589, %589 : vector<16x32xf32>
    %cst_390 = arith.constant dense<0.000000e+00> : vector<16xf32>
    %591 = vector.multi_reduction <add>, %590, %cst_390 [1] : vector<16x32xf32> to vector<16xf32>
    %592 = vector.shape_cast %591 : vector<16xf32> to vector<16x1xf32>
    %cst_391 = arith.constant 3.200000e+01 : f32
    %593 = vector.broadcast %cst_391 : f32 to vector<16x1xf32>
    %594 = arith.divf %592, %593 : vector<16x1xf32>
    %595 = vector.broadcast %587 : vector<16x1xf32> to vector<16x32xf32>
    %596 = arith.subf %581, %595 : vector<16x32xf32>
    %cst_392 = arith.constant 9.99999974E-6 : f32
    %597 = vector.broadcast %cst_392 : f32 to vector<16x1xf32>
    %598 = arith.addf %594, %597 : vector<16x1xf32>
    %599 = math.rsqrt %598 : vector<16x1xf32>
    %600 = vector.broadcast %599 : vector<16x1xf32> to vector<16x32xf32>
    %601 = arith.mulf %596, %600 : vector<16x32xf32>
    %602 = vector.broadcast %582 : vector<1x32xf32> to vector<16x32xf32>
    %603 = arith.mulf %601, %602 : vector<16x32xf32>
    %604 = vector.broadcast %583 : vector<1x32xf32> to vector<16x32xf32>
    %605 = arith.addf %603, %604 : vector<16x32xf32>
    %c0_393 = arith.constant 0 : index
    %c0_394 = arith.constant 0 : index
    %606 = vector.load %arg23[%c0_393, %c0_394] : memref<16x32xf32, #tpu.memory_space<vmem>>, vector<16x32xf32>
    tpu.vector_store %arg23[%c0_393, %c0_394], %605 {strides = array<i32>} : memref<16x32xf32, #tpu.memory_space<vmem>>, vector<16x32xf32>,
    return
  }
}

</mosaic_0001>

<llo_original>
// kernel: tpu_custom_call.1
$region0: #{tpu_custom_call.1}
  #allocation0 [shape = 'u32[]', space=smem, size = 0x4, offset = 0x4, fixed_abs, tag = 'smem constant byte address 0x4 - core index']
  #allocation1 [shape = 'u32[144,128]{1,0:T(1,128)}', space=vmem, size = 0x12000, scoped, tag = 'internal scratch']
  %s0 = inlined_call_operand.vmem [shape: f32[16,32], index: 0, kind: input, shape index: {}]
  %s1 = inlined_call_operand.vmem [shape: f32[16,32], index: 1, kind: input, shape index: {}]
  %s2 = inlined_call_operand.vmem [shape: f32[16,16], index: 2, kind: input, shape index: {}]
  %s3 = inlined_call_operand.vmem [shape: f32[2,4,32,8], index: 3, kind: input, shape index: {}]
  %s4 = inlined_call_operand.vmem [shape: f32[2,4,1,8], index: 4, kind: input, shape index: {}]
  %s5 = inlined_call_operand.vmem [shape: f32[2,4,32,8], index: 5, kind: input, shape index: {}]
  %s6 = inlined_call_operand.vmem [shape: f32[2,4,1,8], index: 6, kind: input, shape index: {}]
  %s7 = inlined_call_operand.vmem [shape: f32[2,4,32,8], index: 7, kind: input, shape index: {}]
  %s8 = inlined_call_operand.vmem [shape: f32[2,4,1,8], index: 8, kind: input, shape index: {}]
  %s9 = inlined_call_operand.vmem [shape: f32[2,4,8,32], index: 9, kind: input, shape index: {}]
  %s10 = inlined_call_operand.vmem [shape: f32[2,1,32], index: 10, kind: input, shape index: {}]
  %s11 = inlined_call_operand.vmem [shape: f32[2,32,64], index: 11, kind: input, shape index: {}]
  %s12 = inlined_call_operand.vmem [shape: f32[2,1,64], index: 12, kind: input, shape index: {}]
  %s13 = inlined_call_operand.vmem [shape: f32[2,64,32], index: 13, kind: input, shape index: {}]
  %s14 = inlined_call_operand.vmem [shape: f32[2,1,32], index: 14, kind: input, shape index: {}]
  %s15 = inlined_call_operand.vmem [shape: f32[2,1,32], index: 15, kind: input, shape index: {}]
  %s16 = inlined_call_operand.vmem [shape: f32[2,1,32], index: 16, kind: input, shape index: {}]
  %s17 = inlined_call_operand.vmem [shape: f32[2,1,32], index: 17, kind: input, shape index: {}]
  %s18 = inlined_call_operand.vmem [shape: f32[2,1,32], index: 18, kind: input, shape index: {}]
  %s19 = inlined_call_operand.vmem [shape: f32[1,32], index: 19, kind: input, shape index: {}]
  %s20 = inlined_call_operand.vmem [shape: f32[1,32], index: 20, kind: input, shape index: {}]
  %s21 = inlined_call_operand.hbm [shape: f32[16,32], index: 21, kind: output, shape index: {0}]
  %s22 = inlined_call_operand.hbm [shape: f32[16,32], index: 22, kind: output, shape index: {1}]
  %s23 = inlined_call_operand.hbm [shape: f32[16,32], index: 23, kind: output, shape index: {2}]
  %24 = xla_tuple %s21, %s22, %s23
  %s25 = sld [smem:[#allocation0]]
  $region110: #{tpu_custom_call.1} parent=0
    _
  %s27 = ssub.s32 1, %s25
  %s28 = scalar_select 0, %s27, %s25
  $region1: #{tpu_custom_call.1} parent=0
    #allocation2 [shape = 'u8[8192]{0}', space=vmem, size = 0x2000, scoped, tag = 'output window, operand 0, single buffered']
    #allocation3 [shape = 's32[1]{0}', space=sflag, size = 0x4, scoped, tag = 'scoped memory for tpu_custom_call.1']
    #allocation4 [shape = 'u8[8192]{0}', space=vmem, size = 0x2000, scoped, tag = 'output window, operand 1, single buffered']
    #allocation5 [shape = 's32[1]{0}', space=sflag, size = 0x4, scoped, tag = 'scoped memory for tpu_custom_call.1']
    #allocation6 [shape = 'u8[8192]{0}', space=vmem, size = 0x2000, scoped, tag = 'output window, operand 2, single buffered']
    %29 = vsyncpa [#allocation3], 0
    %30 = vsyncpa [#allocation5], 0
    // Predicated region
    $region2: #{tpu_custom_call.1} parent=1 // pred_check
      _
    $region3: #{tpu_custom_call.1} parent=1 // pred_check_branch
      %32 = sbr.rel (0) target = $region5
    $region4: #{tpu_custom_call.1} parent=1 // pred_region
      _
    $region5: #{tpu_custom_call.1} parent=1 // pred_fallthru
      _
    // Predicated region
    $region6: #{tpu_custom_call.1} parent=1 // pred_check
      _
    $region7: #{tpu_custom_call.1} parent=1 // pred_check_branch
      %34 = sbr.rel (0) target = $region9
    $region8: #{tpu_custom_call.1} parent=1 // pred_region
      _
    $region9: #{tpu_custom_call.1} parent=1 // pred_fallthru
      _
    // Predicated region
    $region10: #{tpu_custom_call.1} parent=1 // pred_check
      _
    $region11: #{tpu_custom_call.1} parent=1 // pred_check_branch
      %36 = sbr.rel (0) target = $region13
    $region12: #{tpu_custom_call.1} parent=1 // pred_region
      _
    $region13: #{tpu_custom_call.1} parent=1 // pred_fallthru
      _
    // Predicated region
    $region14: #{tpu_custom_call.1} parent=1 // pred_check
      _
    $region15: #{tpu_custom_call.1} parent=1 // pred_check_branch
      %38 = sbr.rel (0) target = $region17
    $region16: #{tpu_custom_call.1} parent=1 // pred_region
      _
    $region17: #{tpu_custom_call.1} parent=1 // pred_fallthru
      _
    // Predicated region
    $region18: #{tpu_custom_call.1} parent=1 // pred_check
      _
    $region19: #{tpu_custom_call.1} parent=1 // pred_check_branch
      %40 = sbr.rel (0) target = $region21
    $region20: #{tpu_custom_call.1} parent=1 // pred_region
      _
    $region21: #{tpu_custom_call.1} parent=1 // pred_fallthru
      _
    // Predicated region
    $region22: #{tpu_custom_call.1} parent=1 // pred_check
      _
    $region23: #{tpu_custom_call.1} parent=1 // pred_check_branch
      %42 = sbr.rel (0) target = $region25
    $region24: #{tpu_custom_call.1} parent=1 // pred_region
      _
    $region25: #{tpu_custom_call.1} parent=1 // pred_fallthru
      _
    // Predicated region
    $region26: #{tpu_custom_call.1} parent=1 // pred_check
      _
    $region27: #{tpu_custom_call.1} parent=1 // pred_check_branch
      %44 = sbr.rel (0) target = $region29
    $region28: #{tpu_custom_call.1} parent=1 // pred_region
      _
    $region29: #{tpu_custom_call.1} parent=1 // pred_fallthru
      _
    // Predicated region
    $region30: #{tpu_custom_call.1} parent=1 // pred_check
      _
    $region31: #{tpu_custom_call.1} parent=1 // pred_check_branch
      %46 = sbr.rel (0) target = $region33
    $region32: #{tpu_custom_call.1} parent=1 // pred_region
      _
    $region33: #{tpu_custom_call.1} parent=1 // pred_fallthru
      _
    // Predicated region
    $region34: #{tpu_custom_call.1} parent=1 // pred_check
      _
    $region35: #{tpu_custom_call.1} parent=1 // pred_check_branch
      %48 = sbr.rel (0) target = $region37
    $region36: #{tpu_custom_call.1} parent=1 // pred_region
      _
    $region37: #{tpu_custom_call.1} parent=1 // pred_fallthru
      _
    // Predicated region
    $region38: #{tpu_custom_call.1} parent=1 // pred_check
      _
    $region39: #{tpu_custom_call.1} parent=1 // pred_check_branch
      %50 = sbr.rel (0) target = $region41
    $region40: #{tpu_custom_call.1} parent=1 // pred_region
      _
    $region41: #{tpu_custom_call.1} parent=1 // pred_fallthru
      _
    // Predicated region
    $region42: #{tpu_custom_call.1} parent=1 // pred_check
      _
    $region43: #{tpu_custom_call.1} parent=1 // pred_check_branch
      %52 = sbr.rel (0) target = $region45
    $region44: #{tpu_custom_call.1} parent=1 // pred_region
      _
    $region45: #{tpu_custom_call.1} parent=1 // pred_fallthru
      _
    // Predicated region
    $region46: #{tpu_custom_call.1} parent=1 // pred_check
      _
    $region47: #{tpu_custom_call.1} parent=1 // pred_check_branch
      %54 = sbr.rel (0) target = $region49
    $region48: #{tpu_custom_call.1} parent=1 // pred_region
      _
    $region49: #{tpu_custom_call.1} parent=1 // pred_fallthru
      _
    // Predicated region
    $region50: #{tpu_custom_call.1} parent=1 // pred_check
      _
    $region51: #{tpu_custom_call.1} parent=1 // pred_check_branch
      %56 = sbr.rel (0) target = $region53
    $region52: #{tpu_custom_call.1} parent=1 // pred_region
      _
    $region53: #{tpu_custom_call.1} parent=1 // pred_fallthru
      _
    // Predicated region
    $region54: #{tpu_custom_call.1} parent=1 // pred_check
      _
    $region55: #{tpu_custom_call.1} parent=1 // pred_check_branch
      %58 = sbr.rel (0) target = $region57
    $region56: #{tpu_custom_call.1} parent=1 // pred_region
      _
    $region57: #{tpu_custom_call.1} parent=1 // pred_fallthru
      _
    // Predicated region
    $region58: #{tpu_custom_call.1} parent=1 // pred_check
      _
    $region59: #{tpu_custom_call.1} parent=1 // pred_check_branch
      %60 = sbr.rel (0) target = $region61
    $region60: #{tpu_custom_call.1} parent=1 // pred_region
      _
    $region61: #{tpu_custom_call.1} parent=1 // pred_fallthru
      _
    // Predicated region
    $region62: #{tpu_custom_call.1} parent=1 // pred_check
      _
    $region63: #{tpu_custom_call.1} parent=1 // pred_check_branch
      %62 = sbr.rel (0) target = $region65
    $region64: #{tpu_custom_call.1} parent=1 // pred_region
      _
    $region65: #{tpu_custom_call.1} parent=1 // pred_fallthru
      _
    // Predicated region
    $region66: #{tpu_custom_call.1} parent=1 // pred_check
      _
    $region67: #{tpu_custom_call.1} parent=1 // pred_check_branch
      %64 = sbr.rel (0) target = $region69
    $region68: #{tpu_custom_call.1} parent=1 // pred_region
      _
    $region69: #{tpu_custom_call.1} parent=1 // pred_fallthru
      _
    // Predicated region
    $region70: #{tpu_custom_call.1} parent=1 // pred_check
      _
    $region71: #{tpu_custom_call.1} parent=1 // pred_check_branch
      %66 = sbr.rel (0) target = $region73
    $region72: #{tpu_custom_call.1} parent=1 // pred_region
      _
    $region73: #{tpu_custom_call.1} parent=1 // pred_fallthru
      _
    // Predicated region
    $region74: #{tpu_custom_call.1} parent=1 // pred_check
      _
    $region75: #{tpu_custom_call.1} parent=1 // pred_check_branch
      %68 = sbr.rel (0) target = $region77
    $region76: #{tpu_custom_call.1} parent=1 // pred_region
      _
    $region77: #{tpu_custom_call.1} parent=1 // pred_fallthru
      _
    // Predicated region
    $region78: #{tpu_custom_call.1} parent=1 // pred_check
      _
    $region79: #{tpu_custom_call.1} parent=1 // pred_check_branch
      %70 = sbr.rel (0) target = $region81
    $region80: #{tpu_custom_call.1} parent=1 // pred_region
      _
    $region81: #{tpu_custom_call.1} parent=1 // pred_fallthru
      _
    // Predicated region
    $region82: #{tpu_custom_call.1} parent=1 // pred_check
      _
    $region83: #{tpu_custom_call.1} parent=1 // pred_check_branch
      %72 = sbr.rel (0) target = $region85
    $region84: #{tpu_custom_call.1} parent=1 // pred_region
      _
    $region85: #{tpu_custom_call.1} parent=1 // pred_fallthru
      _
    %v74 = vld [vmem:[%s0] sm:$0xff]
    %v75 = vld [vmem:[%s0 + $0x8] sm:$0xff]
    %v76 = vmul.f32 %v74, 5.656854
    %v77 = vmul.f32 %v75, 5.656854
    %vm78 = vcmask 261120
    %79 = vst.msk [vmem:[#allocation2] sm:$0xff] %vm78, %v76
    %80 = vst.msk [vmem:[#allocation2 + $0x8] sm:$0xff] %vm78, %v77
    %v81 = vld [vmem:[%s1] sm:$0xff]
    %v82 = vld [vmem:[%s1 + $0x8] sm:$0xff]
    %v83 = vadd.f32 %v76, %v81
    %v84 = vadd.f32 %v77, %v82
    %85 = vst.msk [vmem:[#allocation4] sm:$0xff] %vm78, %v83
    %86 = vst.msk [vmem:[#allocation4 + $0x8] sm:$0xff] %vm78, %v84
    %v87 = vld [vmem:[%s2] sm:$0xff]
    %v88 = vld [vmem:[%s2 + $0x8] sm:$0xff]
    %v89 = vld [vmem:[%s3] sm:$0xff]
    %v90 = vld [vmem:[%s3 + $0x8] sm:$0xff]
    %v91 = vld [vmem:[%s3 + $0x10] sm:$0xff]
    %v92 = vld [vmem:[%s3 + $0x18] sm:$0xff]
    %v93 = vpack.c.bf16 %v84, %v83
    %v94 = vpack.c.bf16 %v90, %v89
    %v95 = vpack.c.bf16 %v92, %v91
    %v96 = vld [vmem:[%s4] sm:$0x1]
    %v98 = vlaneseq
    %v99 = vshrl.u32 %v98, 7
    %v100 = vsub.s32 0, %v99
    %v101 = vrot.slane %v96, %v100
    %v104 = vsel %vm78, %v93, 0
    %106 = vmatprep.subr.bf16.mxu0 0
    %107 = vmatpush1.bf16.msra.mxu0 0
    %108 = vmatprep.subr.bf16.mxu0 0
    %109 = vmatpush1.bf16.msra.mxu0 0
    %110 = vmatprep.subr.bf16.mxu0 0
    %111 = vmatpush1.bf16.msra.mxu0 0
    %112 = vmatprep.subr.bf16.mxu0 0
    %113 = vmatpush1.bf16.msra.mxu0 0
    %114 = vmatprep.subr.bf16.mxu0 0
    %115 = vmatpush1.bf16.msra.mxu0 0
    %116 = vmatprep.subr.bf16.mxu0 0
    %117 = vmatpush1.bf16.msra.mxu0 0
    %118 = vmatprep.subr.bf16.mxu0 0
    %119 = vmatpush1.bf16.msra.mxu0 %v95
    %120 = vmatprep.subr.bf16.mxu0 0
    %121 = vmatpush1.bf16.msra.mxu0 %v94
    %122 = vmatprep.subr.bf16.mxu0 0
    %123 = vmatpush2.bf16.msra.mxu0 0
    %124 = vmatprep.subr.bf16.mxu0 0
    %125 = vmatpush2.bf16.msra.mxu0 0
    %126 = vmatprep.subr.bf16.mxu0 0
    %127 = vmatpush2.bf16.msra.mxu0 0
    %128 = vmatprep.subr.bf16.mxu0 0
    %129 = vmatpush2.bf16.msra.mxu0 0
    %130 = vmatprep.subr.bf16.mxu0 0
    %131 = vmatpush2.bf16.msra.mxu0 0
    %132 = vmatprep.subr.bf16.mxu0 0
    %133 = vmatpush2.bf16.msra.mxu0 0
    %134 = vmatprep.subr.bf16.mxu0 0
    %135 = vmatpush2.bf16.msra.mxu0 0
    %136 = vmatprep.subr.bf16.mxu0 0
    %137 = vmatpush2.bf16.msra.mxu0 0
    %138 = vmatprep.mubr.bf16.mxu0 0
    %139 = vmatmul.mubr.bf16.gmra.mxu0 %v104
    %v140 = vpop.f32.mrf.mxu0
    %v141 = vadd.f32 %v101, %v140
    %v142 = vpop.f32.mrf.mxu0
    %v143 = vpop.f32.mrf.mxu0
    %v144 = vadd.f32 %v101, %v143
    %v145 = vpop.f32.mrf.mxu0
    %146 = vdwg.mxu0
    %v147 = vld [vmem:[%s5] sm:$0xff]
    %v148 = vld [vmem:[%s5 + $0x8] sm:$0xff]
    %v149 = vld [vmem:[%s5 + $0x10] sm:$0xff]
    %v150 = vld [vmem:[%s5 + $0x18] sm:$0xff]
    %v151 = vpack.c.bf16 %v148, %v147
    %v152 = vpack.c.bf16 %v150, %v149
    %v153 = vld [vmem:[%s6] sm:$0x1]
    %v155 = vlaneseq
    %v156 = vshrl.u32 %v155, 7
    %v157 = vsub.s32 0, %v156
    %v158 = vrot.slane %v153, %v157
    %160 = vmatprep.subr.bf16.mxu0 0
    %161 = vmatpush1.bf16.msra.mxu0 0
    %162 = vmatprep.subr.bf16.mxu0 0
    %163 = vmatpush1.bf16.msra.mxu0 0
    %164 = vmatprep.subr.bf16.mxu0 0
    %165 = vmatpush1.bf16.msra.mxu0 0
    %166 = vmatprep.subr.bf16.mxu0 0
    %167 = vmatpush1.bf16.msra.mxu0 0
    %168 = vmatprep.subr.bf16.mxu0 0
    %169 = vmatpush1.bf16.msra.mxu0 0
    %170 = vmatprep.subr.bf16.mxu0 0
    %171 = vmatpush1.bf16.msra.mxu0 0
    %172 = vmatprep.subr.bf16.mxu0 0
    %173 = vmatpush1.bf16.msra.mxu0 %v152
    %174 = vmatprep.subr.bf16.mxu0 0
    %175 = vmatpush1.bf16.msra.mxu0 %v151
    %176 = vmatprep.subr.bf16.mxu0 0
    %177 = vmatpush2.bf16.msra.mxu0 0
    %178 = vmatprep.subr.bf16.mxu0 0
    %179 = vmatpush2.bf16.msra.mxu0 0
    %180 = vmatprep.subr.bf16.mxu0 0
    %181 = vmatpush2.bf16.msra.mxu0 0
    %182 = vmatprep.subr.bf16.mxu0 0
    %183 = vmatpush2.bf16.msra.mxu0 0
    %184 = vmatprep.subr.bf16.mxu0 0
    %185 = vmatpush2.bf16.msra.mxu0 0
    %186 = vmatprep.subr.bf16.mxu0 0
    %187 = vmatpush2.bf16.msra.mxu0 0
    %188 = vmatprep.subr.bf16.mxu0 0
    %189 = vmatpush2.bf16.msra.mxu0 0
    %190 = vmatprep.subr.bf16.mxu0 0
    %191 = vmatpush2.bf16.msra.mxu0 0
    %192 = vmatprep.mubr.bf16.mxu0 0
    %193 = vmatmul.mubr.bf16.gmra.mxu0 %v104
    %v194 = vpop.f32.mrf.mxu0
    %v195 = vadd.f32 %v158, %v194
    %v196 = vpop.f32.mrf.mxu0
    %v197 = vpop.f32.mrf.mxu0
    %v198 = vadd.f32 %v158, %v197
    %v199 = vpop.f32.mrf.mxu0
    %200 = vdwg.mxu0
    %v201 = vld [vmem:[%s7] sm:$0xff]
    %v202 = vld [vmem:[%s7 + $0x8] sm:$0xff]
    %v203 = vld [vmem:[%s7 + $0x10] sm:$0xff]
    %v204 = vld [vmem:[%s7 + $0x18] sm:$0xff]
    %v205 = vpack.c.bf16 %v202, %v201
    %v206 = vpack.c.bf16 %v204, %v203
    %v207 = vld [vmem:[%s8] sm:$0x1]
    %v209 = vlaneseq
    %v210 = vshrl.u32 %v209, 7
    %v211 = vsub.s32 0, %v210
    %v212 = vrot.slane %v207, %v211
    %214 = vmatprep.subr.bf16.mxu0 0
    %215 = vmatpush1.bf16.msra.mxu0 0
    %216 = vmatprep.subr.bf16.mxu0 0
    %217 = vmatpush1.bf16.msra.mxu0 0
    %218 = vmatprep.subr.bf16.mxu0 0
    %219 = vmatpush1.bf16.msra.mxu0 0
    %220 = vmatprep.subr.bf16.mxu0 0
    %221 = vmatpush1.bf16.msra.mxu0 0
    %222 = vmatprep.subr.bf16.mxu0 0
    %223 = vmatpush1.bf16.msra.mxu0 0
    %224 = vmatprep.subr.bf16.mxu0 0
    %225 = vmatpush1.bf16.msra.mxu0 0
    %226 = vmatprep.subr.bf16.mxu0 0
    %227 = vmatpush1.bf16.msra.mxu0 %v206
    %228 = vmatprep.subr.bf16.mxu0 0
    %229 = vmatpush1.bf16.msra.mxu0 %v205
    %230 = vmatprep.subr.bf16.mxu0 0
    %231 = vmatpush2.bf16.msra.mxu0 0
    %232 = vmatprep.subr.bf16.mxu0 0
    %233 = vmatpush2.bf16.msra.mxu0 0
    %234 = vmatprep.subr.bf16.mxu0 0
    %235 = vmatpush2.bf16.msra.mxu0 0
    %236 = vmatprep.subr.bf16.mxu0 0
    %237 = vmatpush2.bf16.msra.mxu0 0
    %238 = vmatprep.subr.bf16.mxu0 0
    %239 = vmatpush2.bf16.msra.mxu0 0
    %240 = vmatprep.subr.bf16.mxu0 0
    %241 = vmatpush2.bf16.msra.mxu0 0
    %242 = vmatprep.subr.bf16.mxu0 0
    %243 = vmatpush2.bf16.msra.mxu0 0
    %244 = vmatprep.subr.bf16.mxu0 0
    %245 = vmatpush2.bf16.msra.mxu0 0
    %246 = vmatprep.mubr.bf16.mxu0 0
    %247 = vmatmul.mubr.bf16.gmra.mxu0 %v104
    %v248 = vpop.f32.mrf.mxu0
    %v249 = vadd.f32 %v212, %v248
    %v250 = vpop.f32.mrf.mxu0
    %v251 = vpop.f32.mrf.mxu0
    %v252 = vadd.f32 %v212, %v251
    %v253 = vpop.f32.mrf.mxu0
    %254 = vdwg.mxu0
    %v255 = vpack.c.bf16 %v144, %v141
    %v256 = vpack.c.bf16 %v198, %v195
    %vm257 = vcmask 64512
    %v259 = vsel %vm257, %v255, 0
    %v262 = vsel %vm257, %v256, 0
    %264 = vmatprep.subr.bf16.mxu0 0
    %265 = vmatpush1.bf16.xpose.msra.mxu0 0
    %266 = vmatprep.subr.bf16.mxu0 0
    %267 = vmatpush1.bf16.xpose.msra.mxu0 0
    %268 = vmatprep.subr.bf16.mxu0 0
    %269 = vmatpush1.bf16.xpose.msra.mxu0 0
    %270 = vmatprep.subr.bf16.mxu0 0
    %271 = vmatpush1.bf16.xpose.msra.mxu0 0
    %272 = vmatprep.subr.bf16.mxu0 0
    %273 = vmatpush1.bf16.xpose.msra.mxu0 0
    %274 = vmatprep.subr.bf16.mxu0 0
    %275 = vmatpush1.bf16.xpose.msra.mxu0 0
    %276 = vmatprep.subr.bf16.mxu0 0
    %277 = vmatpush1.bf16.xpose.msra.mxu0 0
    %278 = vmatprep.subr.bf16.mxu0 0
    %279 = vmatpush1.bf16.xpose.msra.mxu0 %v262
    %280 = vmatprep.subr.bf16.mxu0 0
    %281 = vmatpush2.bf16.xpose.msra.mxu0 0
    %282 = vmatprep.subr.bf16.mxu0 0
    %283 = vmatpush2.bf16.xpose.msra.mxu0 0
    %284 = vmatprep.subr.bf16.mxu0 0
    %285 = vmatpush2.bf16.xpose.msra.mxu0 0
    %286 = vmatprep.subr.bf16.mxu0 0
    %287 = vmatpush2.bf16.xpose.msra.mxu0 0
    %288 = vmatprep.subr.bf16.mxu0 0
    %289 = vmatpush2.bf16.xpose.msra.mxu0 0
    %290 = vmatprep.subr.bf16.mxu0 0
    %291 = vmatpush2.bf16.xpose.msra.mxu0 0
    %292 = vmatprep.subr.bf16.mxu0 0
    %293 = vmatpush2.bf16.xpose.msra.mxu0 0
    %294 = vmatprep.subr.bf16.mxu0 0
    %295 = vmatpush2.bf16.xpose.msra.mxu0 0
    %296 = vmatprep.mubr.bf16.mxu0 0
    %297 = vmatmul.mubr.bf16.gmra.mxu0 %v259
    %v298 = vpop.f32.mrf.mxu0
    %v299 = vadd.f32 0.0, %v298
    %v300 = vpop.f32.mrf.mxu0
    %v301 = vpop.f32.mrf.mxu0
    %v302 = vadd.f32 0.0, %v301
    %v303 = vpop.f32.mrf.mxu0
    %304 = vdwg.mxu0
    %v305 = vmul.f32 %v299, 0.35355338
    %v306 = vmul.f32 %v302, 0.35355338
    %v307 = vadd.f32 %v305, %v87
    %v308 = vadd.f32 %v306, %v88
    %vm309 = vcmask 130048
    %v310 = vsel %vm309, %v307, -inf
    %311 = vmax.xlane.f32.xlu0 %v310
    %v312 = vpop.xlane.xlu0 %311
    %v313 = vsel %vm309, %v308, -inf
    %314 = vmax.xlane.f32.xlu0 %v313
    %v315 = vpop.xlane.xlu0 %314
    %v316 = vsub.f32 %v307, %v312
    %v317 = vsub.f32 %v308, %v315
    %v318 = vmul.f32 %v316, 1.442695
    %v319 = vpow.pop %v318
    %v320 = vmul.f32 %v317, 1.442695
    %v321 = vpow.pop %v320
    %v322 = vsel %vm309, %v319, 0.0
    %323 = vadd.xlane.f32.xlu0 %v322
    %v324 = vpop.xlane.xlu0 %323
    %v325 = vsel %vm309, %v321, 0.0
    %326 = vadd.xlane.f32.xlu0 %v325
    %v327 = vpop.xlane.xlu0 %326
    %v328 = vrcp.pop %v324
    %v329 = vrcp.pop %v327
    %v330 = vmul.f32 %v319, %v328
    %v331 = vmul.f32 %v321, %v329
    %v332 = vpack.c.bf16 %v331, %v330
    %v333 = vpack.c.bf16 %v252, %v249
    %v335 = vsel %vm309, %v332, 0
    %337 = vmatprep.subr.bf16.mxu0 0
    %338 = vmatpush1.bf16.msra.mxu0 0
    %339 = vmatprep.subr.bf16.mxu0 0
    %340 = vmatpush1.bf16.msra.mxu0 0
    %341 = vmatprep.subr.bf16.mxu0 0
    %342 = vmatpush1.bf16.msra.mxu0 0
    %343 = vmatprep.subr.bf16.mxu0 0
    %344 = vmatpush1.bf16.msra.mxu0 0
    %345 = vmatprep.subr.bf16.mxu0 0
    %346 = vmatpush1.bf16.msra.mxu0 0
    %347 = vmatprep.subr.bf16.mxu0 0
    %348 = vmatpush1.bf16.msra.mxu0 0
    %349 = vmatprep.subr.bf16.mxu0 0
    %350 = vmatpush1.bf16.msra.mxu0 0
    %351 = vmatprep.subr.bf16.mxu0 0
    %352 = vmatpush1.bf16.msra.mxu0 %v333
    %353 = vmatprep.subr.bf16.mxu0 0
    %354 = vmatpush2.bf16.msra.mxu0 0
    %355 = vmatprep.subr.bf16.mxu0 0
    %356 = vmatpush2.bf16.msra.mxu0 0
    %357 = vmatprep.subr.bf16.mxu0 0
    %358 = vmatpush2.bf16.msra.mxu0 0
    %359 = vmatprep.subr.bf16.mxu0 0
    %360 = vmatpush2.bf16.msra.mxu0 0
    %361 = vmatprep.subr.bf16.mxu0 0
    %362 = vmatpush2.bf16.msra.mxu0 0
    %363 = vmatprep.subr.bf16.mxu0 0
    %364 = vmatpush2.bf16.msra.mxu0 0
    %365 = vmatprep.subr.bf16.mxu0 0
    %366 = vmatpush2.bf16.msra.mxu0 0
    %367 = vmatprep.subr.bf16.mxu0 0
    %368 = vmatpush2.bf16.msra.mxu0 0
    %369 = vmatprep.mubr.bf16.mxu0 0
    %370 = vmatmul.mubr.bf16.gmra.mxu0 %v335
    %v371 = vpop.f32.mrf.mxu0
    %v372 = vadd.f32 0.0, %v371
    %v373 = vpop.f32.mrf.mxu0
    %v374 = vpop.f32.mrf.mxu0
    %v375 = vadd.f32 0.0, %v374
    %v376 = vpop.f32.mrf.mxu0
    %377 = vdwg.mxu0
    %v378 = vld [vmem:[%s9] sm:$0xff]
    %v379 = vpack.c.bf16 %v375, %v372
    %v380 = vpack.c.bf16 %v378, %v378
    %s381 = scalar_lea.vmem %s3, 32
    %v382 = vld [vmem:[%s381] sm:$0xff]
    %v383 = vld [vmem:[%s381 + $0x8] sm:$0xff]
    %v384 = vld [vmem:[%s381 + $0x10] sm:$0xff]
    %v385 = vld [vmem:[%s381 + $0x18] sm:$0xff]
    %v386 = vpack.c.bf16 %v383, %v382
    %v387 = vpack.c.bf16 %v385, %v384
    %s388 = scalar_lea.vmem %s4, 1
    %v389 = vld [vmem:[%s388] sm:$0x1]
    %v391 = vlaneseq
    %v392 = vshrl.u32 %v391, 7
    %v393 = vsub.s32 0, %v392
    %v394 = vrot.slane %v389, %v393
    %396 = vmatprep.subr.bf16.mxu0 0
    %397 = vmatpush1.bf16.msra.mxu0 0
    %398 = vmatprep.subr.bf16.mxu0 0
    %399 = vmatpush1.bf16.msra.mxu0 0
    %400 = vmatprep.subr.bf16.mxu0 0
    %401 = vmatpush1.bf16.msra.mxu0 0
    %402 = vmatprep.subr.bf16.mxu0 0
    %403 = vmatpush1.bf16.msra.mxu0 0
    %404 = vmatprep.subr.bf16.mxu0 0
    %405 = vmatpush1.bf16.msra.mxu0 0
    %406 = vmatprep.subr.bf16.mxu0 0
    %407 = vmatpush1.bf16.msra.mxu0 0
    %408 = vmatprep.subr.bf16.mxu0 0
    %409 = vmatpush1.bf16.msra.mxu0 %v387
    %410 = vmatprep.subr.bf16.mxu0 0
    %411 = vmatpush1.bf16.msra.mxu0 %v386
    %412 = vmatprep.subr.bf16.mxu0 0
    %413 = vmatpush2.bf16.msra.mxu0 0
    %414 = vmatprep.subr.bf16.mxu0 0
    %415 = vmatpush2.bf16.msra.mxu0 0
    %416 = vmatprep.subr.bf16.mxu0 0
    %417 = vmatpush2.bf16.msra.mxu0 0
    %418 = vmatprep.subr.bf16.mxu0 0
    %419 = vmatpush2.bf16.msra.mxu0 0
    %420 = vmatprep.subr.bf16.mxu0 0
    %421 = vmatpush2.bf16.msra.mxu0 0
    %422 = vmatprep.subr.bf16.mxu0 0
    %423 = vmatpush2.bf16.msra.mxu0 0
    %424 = vmatprep.subr.bf16.mxu0 0
    %425 = vmatpush2.bf16.msra.mxu0 0
    %426 = vmatprep.subr.bf16.mxu0 0
    %427 = vmatpush2.bf16.msra.mxu0 0
    %428 = vmatprep.mubr.bf16.mxu0 0
    %429 = vmatmul.mubr.bf16.gmra.mxu0 %v104
    %v430 = vpop.f32.mrf.mxu0
    %v431 = vadd.f32 %v394, %v430
    %v432 = vpop.f32.mrf.mxu0
    %v433 = vpop.f32.mrf.mxu0
    %v434 = vadd.f32 %v394, %v433
    %v435 = vpop.f32.mrf.mxu0
    %436 = vdwg.mxu0
    %s437 = scalar_lea.vmem %s5, 32
    %v438 = vld [vmem:[%s437] sm:$0xff]
    %v439 = vld [vmem:[%s437 + $0x8] sm:$0xff]
    %v440 = vld [vmem:[%s437 + $0x10] sm:$0xff]
    %v441 = vld [vmem:[%s437 + $0x18] sm:$0xff]
    %v442 = vpack.c.bf16 %v439, %v438
    %v443 = vpack.c.bf16 %v441, %v440
    %s444 = scalar_lea.vmem %s6, 1
    %v445 = vld [vmem:[%s444] sm:$0x1]
    %v447 = vlaneseq
    %v448 = vshrl.u32 %v447, 7
    %v449 = vsub.s32 0, %v448
    %v450 = vrot.slane %v445, %v449
    %452 = vmatprep.subr.bf16.mxu0 0
    %453 = vmatpush1.bf16.msra.mxu0 0
    %454 = vmatprep.subr.bf16.mxu0 0
    %455 = vmatpush1.bf16.msra.mxu0 0
    %456 = vmatprep.subr.bf16.mxu0 0
    %457 = vmatpush1.bf16.msra.mxu0 0
    %458 = vmatprep.subr.bf16.mxu0 0
    %459 = vmatpush1.bf16.msra.mxu0 0
    %460 = vmatprep.subr.bf16.mxu0 0
    %461 = vmatpush1.bf16.msra.mxu0 0
    %462 = vmatprep.subr.bf16.mxu0 0
    %463 = vmatpush1.bf16.msra.mxu0 0
    %464 = vmatprep.subr.bf16.mxu0 0
    %465 = vmatpush1.bf16.msra.mxu0 %v443
    %466 = vmatprep.subr.bf16.mxu0 0
    %467 = vmatpush1.bf16.msra.mxu0 %v442
    %468 = vmatprep.subr.bf16.mxu0 0
    %469 = vmatpush2.bf16.msra.mxu0 0
    %470 = vmatprep.subr.bf16.mxu0 0
    %471 = vmatpush2.bf16.msra.mxu0 0
    %472 = vmatprep.subr.bf16.mxu0 0
    %473 = vmatpush2.bf16.msra.mxu0 0
    %474 = vmatprep.subr.bf16.mxu0 0
    %475 = vmatpush2.bf16.msra.mxu0 0
    %476 = vmatprep.subr.bf16.mxu0 0
    %477 = vmatpush2.bf16.msra.mxu0 0
    %478 = vmatprep.subr.bf16.mxu0 0
    %479 = vmatpush2.bf16.msra.mxu0 0
    %480 = vmatprep.subr.bf16.mxu0 0
    %481 = vmatpush2.bf16.msra.mxu0 0
    %482 = vmatprep.subr.bf16.mxu0 0
    %483 = vmatpush2.bf16.msra.mxu0 0
    %484 = vmatprep.mubr.bf16.mxu0 0
    %485 = vmatmul.mubr.bf16.gmra.mxu0 %v104
    %v486 = vpop.f32.mrf.mxu0
    %v487 = vadd.f32 %v450, %v486
    %v488 = vpop.f32.mrf.mxu0
    %v489 = vpop.f32.mrf.mxu0
    %v490 = vadd.f32 %v450, %v489
    %v491 = vpop.f32.mrf.mxu0
    %492 = vdwg.mxu0
    %s493 = scalar_lea.vmem %s7, 32
    %v494 = vld [vmem:[%s493] sm:$0xff]
    %v495 = vld [vmem:[%s493 + $0x8] sm:$0xff]
    %v496 = vld [vmem:[%s493 + $0x10] sm:$0xff]
    %v497 = vld [vmem:[%s493 + $0x18] sm:$0xff]
    %v498 = vpack.c.bf16 %v495, %v494
    %v499 = vpack.c.bf16 %v497, %v496
    %s500 = scalar_lea.vmem %s8, 1
    %v501 = vld [vmem:[%s500] sm:$0x1]
    %v503 = vlaneseq
    %v504 = vshrl.u32 %v503, 7
    %v505 = vsub.s32 0, %v504
    %v506 = vrot.slane %v501, %v505
    %508 = vmatprep.subr.bf16.mxu0 0
    %509 = vmatpush1.bf16.msra.mxu0 0
    %510 = vmatprep.subr.bf16.mxu0 0
    %511 = vmatpush1.bf16.msra.mxu0 0
    %512 = vmatprep.subr.bf16.mxu0 0
    %513 = vmatpush1.bf16.msra.mxu0 0
    %514 = vmatprep.subr.bf16.mxu0 0
    %515 = vmatpush1.bf16.msra.mxu0 0
    %516 = vmatprep.subr.bf16.mxu0 0
    %517 = vmatpush1.bf16.msra.mxu0 0
    %518 = vmatprep.subr.bf16.mxu0 0
    %519 = vmatpush1.bf16.msra.mxu0 0
    %520 = vmatprep.subr.bf16.mxu0 0
    %521 = vmatpush1.bf16.msra.mxu0 %v499
    %522 = vmatprep.subr.bf16.mxu0 0
    %523 = vmatpush1.bf16.msra.mxu0 %v498
    %524 = vmatprep.subr.bf16.mxu0 0
    %525 = vmatpush2.bf16.msra.mxu0 0
    %526 = vmatprep.subr.bf16.mxu0 0
    %527 = vmatpush2.bf16.msra.mxu0 0
    %528 = vmatprep.subr.bf16.mxu0 0
    %529 = vmatpush2.bf16.msra.mxu0 0
    %530 = vmatprep.subr.bf16.mxu0 0
    %531 = vmatpush2.bf16.msra.mxu0 0
    %532 = vmatprep.subr.bf16.mxu0 0
    %533 = vmatpush2.bf16.msra.mxu0 0
    %534 = vmatprep.subr.bf16.mxu0 0
    %535 = vmatpush2.bf16.msra.mxu0 0
    %536 = vmatprep.subr.bf16.mxu0 0
    %537 = vmatpush2.bf16.msra.mxu0 0
    %538 = vmatprep.subr.bf16.mxu0 0
    %539 = vmatpush2.bf16.msra.mxu0 0
    %540 = vmatprep.mubr.bf16.mxu0 0
    %541 = vmatmul.mubr.bf16.gmra.mxu0 %v104
    %v542 = vpop.f32.mrf.mxu0
    %v543 = vadd.f32 %v506, %v542
    %v544 = vpop.f32.mrf.mxu0
    %v545 = vpop.f32.mrf.mxu0
    %v546 = vadd.f32 %v506, %v545
    %v547 = vpop.f32.mrf.mxu0
    %548 = vdwg.mxu0
    %v549 = vpack.c.bf16 %v434, %v431
    %v550 = vpack.c.bf16 %v490, %v487
    %v552 = vsel %vm257, %v549, 0
    %v555 = vsel %vm257, %v550, 0
    %557 = vmatprep.subr.bf16.mxu0 0
    %558 = vmatpush1.bf16.xpose.msra.mxu0 0
    %559 = vmatprep.subr.bf16.mxu0 0
    %560 = vmatpush1.bf16.xpose.msra.mxu0 0
    %561 = vmatprep.subr.bf16.mxu0 0
    %562 = vmatpush1.bf16.xpose.msra.mxu0 0
    %563 = vmatprep.subr.bf16.mxu0 0
    %564 = vmatpush1.bf16.xpose.msra.mxu0 0
    %565 = vmatprep.subr.bf16.mxu0 0
    %566 = vmatpush1.bf16.xpose.msra.mxu0 0
    %567 = vmatprep.subr.bf16.mxu0 0
    %568 = vmatpush1.bf16.xpose.msra.mxu0 0
    %569 = vmatprep.subr.bf16.mxu0 0
    %570 = vmatpush1.bf16.xpose.msra.mxu0 0
    %571 = vmatprep.subr.bf16.mxu0 0
    %572 = vmatpush1.bf16.xpose.msra.mxu0 %v555
    %573 = vmatprep.subr.bf16.mxu0 0
    %574 = vmatpush2.bf16.xpose.msra.mxu0 0
    %575 = vmatprep.subr.bf16.mxu0 0
    %576 = vmatpush2.bf16.xpose.msra.mxu0 0
    %577 = vmatprep.subr.bf16.mxu0 0
    %578 = vmatpush2.bf16.xpose.msra.mxu0 0
    %579 = vmatprep.subr.bf16.mxu0 0
    %580 = vmatpush2.bf16.xpose.msra.mxu0 0
    %581 = vmatprep.subr.bf16.mxu0 0
    %582 = vmatpush2.bf16.xpose.msra.mxu0 0
    %583 = vmatprep.subr.bf16.mxu0 0
    %584 = vmatpush2.bf16.xpose.msra.mxu0 0
    %585 = vmatprep.subr.bf16.mxu0 0
    %586 = vmatpush2.bf16.xpose.msra.mxu0 0
    %587 = vmatprep.subr.bf16.mxu0 0
    %588 = vmatpush2.bf16.xpose.msra.mxu0 0
    %589 = vmatprep.mubr.bf16.mxu0 0
    %590 = vmatmul.mubr.bf16.gmra.mxu0 %v552
    %v591 = vpop.f32.mrf.mxu0
    %v592 = vadd.f32 0.0, %v591
    %v593 = vpop.f32.mrf.mxu0
    %v594 = vpop.f32.mrf.mxu0
    %v595 = vadd.f32 0.0, %v594
    %v596 = vpop.f32.mrf.mxu0
    %597 = vdwg.mxu0
    %v598 = vmul.f32 %v592, 0.35355338
    %v599 = vmul.f32 %v595, 0.35355338
    %v600 = vadd.f32 %v598, %v87
    %v601 = vadd.f32 %v599, %v88
    %v602 = vsel %vm309, %v600, -inf
    %603 = vmax.xlane.f32.xlu0 %v602
    %v604 = vpop.xlane.xlu0 %603
    %v605 = vsel %vm309, %v601, -inf
    %606 = vmax.xlane.f32.xlu0 %v605
    %v607 = vpop.xlane.xlu0 %606
    %v608 = vsub.f32 %v600, %v604
    %v609 = vsub.f32 %v601, %v607
    %v610 = vmul.f32 %v608, 1.442695
    %v611 = vpow.pop %v610
    %v612 = vmul.f32 %v609, 1.442695
    %v613 = vpow.pop %v612
    %v614 = vsel %vm309, %v611, 0.0
    %615 = vadd.xlane.f32.xlu0 %v614
    %v616 = vpop.xlane.xlu0 %615
    %v617 = vsel %vm309, %v613, 0.0
    %618 = vadd.xlane.f32.xlu0 %v617
    %v619 = vpop.xlane.xlu0 %618
    %v620 = vrcp.pop %v616
    %v621 = vrcp.pop %v619
    %v622 = vmul.f32 %v611, %v620
    %v623 = vmul.f32 %v613, %v621
    %v624 = vpack.c.bf16 %v623, %v622
    %v625 = vpack.c.bf16 %v546, %v543
    %v627 = vsel %vm309, %v624, 0
    %629 = vmatprep.subr.bf16.mxu0 0
    %630 = vmatpush1.bf16.msra.mxu0 0
    %631 = vmatprep.subr.bf16.mxu0 0
    %632 = vmatpush1.bf16.msra.mxu0 0
    %633 = vmatprep.subr.bf16.mxu0 0
    %634 = vmatpush1.bf16.msra.mxu0 0
    %635 = vmatprep.subr.bf16.mxu0 0
    %636 = vmatpush1.bf16.msra.mxu0 0
    %637 = vmatprep.subr.bf16.mxu0 0
    %638 = vmatpush1.bf16.msra.mxu0 0
    %639 = vmatprep.subr.bf16.mxu0 0
    %640 = vmatpush1.bf16.msra.mxu0 0
    %641 = vmatprep.subr.bf16.mxu0 0
    %642 = vmatpush1.bf16.msra.mxu0 0
    %643 = vmatprep.subr.bf16.mxu0 0
    %644 = vmatpush1.bf16.msra.mxu0 %v625
    %645 = vmatprep.subr.bf16.mxu0 0
    %646 = vmatpush2.bf16.msra.mxu0 0
    %647 = vmatprep.subr.bf16.mxu0 0
    %648 = vmatpush2.bf16.msra.mxu0 0
    %649 = vmatprep.subr.bf16.mxu0 0
    %650 = vmatpush2.bf16.msra.mxu0 0
    %651 = vmatprep.subr.bf16.mxu0 0
    %652 = vmatpush2.bf16.msra.mxu0 0
    %653 = vmatprep.subr.bf16.mxu0 0
    %654 = vmatpush2.bf16.msra.mxu0 0
    %655 = vmatprep.subr.bf16.mxu0 0
    %656 = vmatpush2.bf16.msra.mxu0 0
    %657 = vmatprep.subr.bf16.mxu0 0
    %658 = vmatpush2.bf16.msra.mxu0 0
    %659 = vmatprep.subr.bf16.mxu0 0
    %660 = vmatpush2.bf16.msra.mxu0 0
    %661 = vmatprep.mubr.bf16.mxu0 0
    %662 = vmatmul.mubr.bf16.gmra.mxu0 %v627
    %v663 = vpop.f32.mrf.mxu0
    %v664 = vadd.f32 0.0, %v663
    %v665 = vpop.f32.mrf.mxu0
    %v666 = vpop.f32.mrf.mxu0
    %v667 = vadd.f32 0.0, %v666
    %v668 = vpop.f32.mrf.mxu0
    %669 = vdwg.mxu0
    %s670 = scalar_lea.vmem %s9, 8
    %v671 = vld [vmem:[%s670] sm:$0xff]
    %v672 = vpack.c.bf16 %v667, %v664
    %v673 = vpack.c.bf16 %v671, %v671
    %v675 = vsel %vm257, %v672, 0
    %vm677 = vcmask 1043456
    %v679 = vsel %vm677, %v673, 0
    %681 = vmatprep.subr.bf16.mxu0 0
    %682 = vmatpush1.bf16.msra.mxu0 0
    %683 = vmatprep.subr.bf16.mxu0 0
    %684 = vmatpush1.bf16.msra.mxu0 0
    %685 = vmatprep.subr.bf16.mxu0 0
    %686 = vmatpush1.bf16.msra.mxu0 0
    %687 = vmatprep.subr.bf16.mxu0 0
    %688 = vmatpush1.bf16.msra.mxu0 0
    %689 = vmatprep.subr.bf16.mxu0 0
    %690 = vmatpush1.bf16.msra.mxu0 0
    %691 = vmatprep.subr.bf16.mxu0 0
    %692 = vmatpush1.bf16.msra.mxu0 0
    %693 = vmatprep.subr.bf16.mxu0 0
    %694 = vmatpush1.bf16.msra.mxu0 0
    %695 = vmatprep.subr.bf16.mxu0 0
    %696 = vmatpush1.bf16.msra.mxu0 %v679
    %697 = vmatprep.subr.bf16.mxu0 0
    %698 = vmatpush2.bf16.msra.mxu0 0
    %699 = vmatprep.subr.bf16.mxu0 0
    %700 = vmatpush2.bf16.msra.mxu0 0
    %701 = vmatprep.subr.bf16.mxu0 0
    %702 = vmatpush2.bf16.msra.mxu0 0
    %703 = vmatprep.subr.bf16.mxu0 0
    %704 = vmatpush2.bf16.msra.mxu0 0
    %705 = vmatprep.subr.bf16.mxu0 0
    %706 = vmatpush2.bf16.msra.mxu0 0
    %707 = vmatprep.subr.bf16.mxu0 0
    %708 = vmatpush2.bf16.msra.mxu0 0
    %709 = vmatprep.subr.bf16.mxu0 0
    %710 = vmatpush2.bf16.msra.mxu0 0
    %711 = vmatprep.subr.bf16.mxu0 0
    %712 = vmatpush2.bf16.msra.mxu0 0
    %713 = vmatprep.mubr.bf16.mxu0 0
    %714 = vmatmul.mubr.bf16.gmra.mxu0 %v675
    %v715 = vpop.f32.mrf.mxu0
    %v716 = vadd.f32 0.0, %v715
    %v717 = vpop.f32.mrf.mxu0
    %v718 = vpop.f32.mrf.mxu0
    %v719 = vadd.f32 0.0, %v718
    %v720 = vpop.f32.mrf.mxu0
    %721 = vdwg.mxu0
    %v723 = vsel %vm257, %v379, 0
    %v726 = vsel %vm677, %v380, 0
    %728 = vmatprep.subr.bf16.mxu0 0
    %729 = vmatpush1.bf16.msra.mxu0 0
    %730 = vmatprep.subr.bf16.mxu0 0
    %731 = vmatpush1.bf16.msra.mxu0 0
    %732 = vmatprep.subr.bf16.mxu0 0
    %733 = vmatpush1.bf16.msra.mxu0 0
    %734 = vmatprep.subr.bf16.mxu0 0
    %735 = vmatpush1.bf16.msra.mxu0 0
    %736 = vmatprep.subr.bf16.mxu0 0
    %737 = vmatpush1.bf16.msra.mxu0 0
    %738 = vmatprep.subr.bf16.mxu0 0
    %739 = vmatpush1.bf16.msra.mxu0 0
    %740 = vmatprep.subr.bf16.mxu0 0
    %741 = vmatpush1.bf16.msra.mxu0 0
    %742 = vmatprep.subr.bf16.mxu0 0
    %743 = vmatpush1.bf16.msra.mxu0 %v726
    %744 = vmatprep.subr.bf16.mxu0 0
    %745 = vmatpush2.bf16.msra.mxu0 0
    %746 = vmatprep.subr.bf16.mxu0 0
    %747 = vmatpush2.bf16.msra.mxu0 0
    %748 = vmatprep.subr.bf16.mxu0 0
    %749 = vmatpush2.bf16.msra.mxu0 0
    %750 = vmatprep.subr.bf16.mxu0 0
    %751 = vmatpush2.bf16.msra.mxu0 0
    %752 = vmatprep.subr.bf16.mxu0 0
    %753 = vmatpush2.bf16.msra.mxu0 0
    %754 = vmatprep.subr.bf16.mxu0 0
    %755 = vmatpush2.bf16.msra.mxu0 0
    %756 = vmatprep.subr.bf16.mxu0 0
    %757 = vmatpush2.bf16.msra.mxu0 0
    %758 = vmatprep.subr.bf16.mxu0 0
    %759 = vmatpush2.bf16.msra.mxu0 0
    %760 = vmatprep.mubr.bf16.mxu0 0
    %761 = vmatmul.mubr.bf16.gmra.mxu0 %v723
    %v762 = vpop.f32.mrf.mxu0
    %v763 = vadd.f32 %v716, %v762
    %v764 = vpop.f32.mrf.mxu0
    %v765 = vpop.f32.mrf.mxu0
    %v766 = vadd.f32 %v719, %v765
    %v767 = vpop.f32.mrf.mxu0
    %768 = vdwg.mxu0
    %s769 = scalar_lea.vmem %s3, 64
    %v770 = vld [vmem:[%s769] sm:$0xff]
    %v771 = vld [vmem:[%s769 + $0x8] sm:$0xff]
    %v772 = vld [vmem:[%s769 + $0x10] sm:$0xff]
    %v773 = vld [vmem:[%s769 + $0x18] sm:$0xff]
    %v774 = vpack.c.bf16 %v771, %v770
    %v775 = vpack.c.bf16 %v773, %v772
    %s776 = scalar_lea.vmem %s4, 2
    %v777 = vld [vmem:[%s776] sm:$0x1]
    %v779 = vlaneseq
    %v780 = vshrl.u32 %v779, 7
    %v781 = vsub.s32 0, %v780
    %v782 = vrot.slane %v777, %v781
    %784 = vmatprep.subr.bf16.mxu0 0
    %785 = vmatpush1.bf16.msra.mxu0 0
    %786 = vmatprep.subr.bf16.mxu0 0
    %787 = vmatpush1.bf16.msra.mxu0 0
    %788 = vmatprep.subr.bf16.mxu0 0
    %789 = vmatpush1.bf16.msra.mxu0 0
    %790 = vmatprep.subr.bf16.mxu0 0
    %791 = vmatpush1.bf16.msra.mxu0 0
    %792 = vmatprep.subr.bf16.mxu0 0
    %793 = vmatpush1.bf16.msra.mxu0 0
    %794 = vmatprep.subr.bf16.mxu0 0
    %795 = vmatpush1.bf16.msra.mxu0 0
    %796 = vmatprep.subr.bf16.mxu0 0
    %797 = vmatpush1.bf16.msra.mxu0 %v775
    %798 = vmatprep.subr.bf16.mxu0 0
    %799 = vmatpush1.bf16.msra.mxu0 %v774
    %800 = vmatprep.subr.bf16.mxu0 0
    %801 = vmatpush2.bf16.msra.mxu0 0
    %802 = vmatprep.subr.bf16.mxu0 0
    %803 = vmatpush2.bf16.msra.mxu0 0
    %804 = vmatprep.subr.bf16.mxu0 0
    %805 = vmatpush2.bf16.msra.mxu0 0
    %806 = vmatprep.subr.bf16.mxu0 0
    %807 = vmatpush2.bf16.msra.mxu0 0
    %808 = vmatprep.subr.bf16.mxu0 0
    %809 = vmatpush2.bf16.msra.mxu0 0
    %810 = vmatprep.subr.bf16.mxu0 0
    %811 = vmatpush2.bf16.msra.mxu0 0
    %812 = vmatprep.subr.bf16.mxu0 0
    %813 = vmatpush2.bf16.msra.mxu0 0
    %814 = vmatprep.subr.bf16.mxu0 0
    %815 = vmatpush2.bf16.msra.mxu0 0
    %816 = vmatprep.mubr.bf16.mxu0 0
    %817 = vmatmul.mubr.bf16.gmra.mxu0 %v104
    %v818 = vpop.f32.mrf.mxu0
    %v819 = vadd.f32 %v782, %v818
    %v820 = vpop.f32.mrf.mxu0
    %v821 = vpop.f32.mrf.mxu0
    %v822 = vadd.f32 %v782, %v821
    %v823 = vpop.f32.mrf.mxu0
    %824 = vdwg.mxu0
    %s825 = scalar_lea.vmem %s5, 64
    %v826 = vld [vmem:[%s825] sm:$0xff]
    %v827 = vld [vmem:[%s825 + $0x8] sm:$0xff]
    %v828 = vld [vmem:[%s825 + $0x10] sm:$0xff]
    %v829 = vld [vmem:[%s825 + $0x18] sm:$0xff]
    %v830 = vpack.c.bf16 %v827, %v826
    %v831 = vpack.c.bf16 %v829, %v828
    %s832 = scalar_lea.vmem %s6, 2
    %v833 = vld [vmem:[%s832] sm:$0x1]
    %v835 = vlaneseq
    %v836 = vshrl.u32 %v835, 7
    %v837 = vsub.s32 0, %v836
    %v838 = vrot.slane %v833, %v837
    %840 = vmatprep.subr.bf16.mxu0 0
    %841 = vmatpush1.bf16.msra.mxu0 0
    %842 = vmatprep.subr.bf16.mxu0 0
    %843 = vmatpush1.bf16.msra.mxu0 0
    %844 = vmatprep.subr.bf16.mxu0 0
    %845 = vmatpush1.bf16.msra.mxu0 0
    %846 = vmatprep.subr.bf16.mxu0 0
    %847 = vmatpush1.bf16.msra.mxu0 0
    %848 = vmatprep.subr.bf16.mxu0 0
    %849 = vmatpush1.bf16.msra.mxu0 0
    %850 = vmatprep.subr.bf16.mxu0 0
    %851 = vmatpush1.bf16.msra.mxu0 0
    %852 = vmatprep.subr.bf16.mxu0 0
    %853 = vmatpush1.bf16.msra.mxu0 %v831
    %854 = vmatprep.subr.bf16.mxu0 0
    %855 = vmatpush1.bf16.msra.mxu0 %v830
    %856 = vmatprep.subr.bf16.mxu0 0
    %857 = vmatpush2.bf16.msra.mxu0 0
    %858 = vmatprep.subr.bf16.mxu0 0
    %859 = vmatpush2.bf16.msra.mxu0 0
    %860 = vmatprep.subr.bf16.mxu0 0
    %861 = vmatpush2.bf16.msra.mxu0 0
    %862 = vmatprep.subr.bf16.mxu0 0
    %863 = vmatpush2.bf16.msra.mxu0 0
    %864 = vmatprep.subr.bf16.mxu0 0
    %865 = vmatpush2.bf16.msra.mxu0 0
    %866 = vmatprep.subr.bf16.mxu0 0
    %867 = vmatpush2.bf16.msra.mxu0 0
    %868 = vmatprep.subr.bf16.mxu0 0
    %869 = vmatpush2.bf16.msra.mxu0 0
    %870 = vmatprep.subr.bf16.mxu0 0
    %871 = vmatpush2.bf16.msra.mxu0 0
    %872 = vmatprep.mubr.bf16.mxu0 0
    %873 = vmatmul.mubr.bf16.gmra.mxu0 %v104
    %v874 = vpop.f32.mrf.mxu0
    %v875 = vadd.f32 %v838, %v874
    %v876 = vpop.f32.mrf.mxu0
    %v877 = vpop.f32.mrf.mxu0
    %v878 = vadd.f32 %v838, %v877
    %v879 = vpop.f32.mrf.mxu0
    %880 = vdwg.mxu0
    %s881 = scalar_lea.vmem %s7, 64
    %v882 = vld [vmem:[%s881] sm:$0xff]
    %v883 = vld [vmem:[%s881 + $0x8] sm:$0xff]
    %v884 = vld [vmem:[%s881 + $0x10] sm:$0xff]
    %v885 = vld [vmem:[%s881 + $0x18] sm:$0xff]
    %v886 = vpack.c.bf16 %v883, %v882
    %v887 = vpack.c.bf16 %v885, %v884
    %s888 = scalar_lea.vmem %s8, 2
    %v889 = vld [vmem:[%s888] sm:$0x1]
    %v891 = vlaneseq
    %v892 = vshrl.u32 %v891, 7
    %v893 = vsub.s32 0, %v892
    %v894 = vrot.slane %v889, %v893
    %896 = vmatprep.subr.bf16.mxu0 0
    %897 = vmatpush1.bf16.msra.mxu0 0
    %898 = vmatprep.subr.bf16.mxu0 0
    %899 = vmatpush1.bf16.msra.mxu0 0
    %900 = vmatprep.subr.bf16.mxu0 0
    %901 = vmatpush1.bf16.msra.mxu0 0
    %902 = vmatprep.subr.bf16.mxu0 0
    %903 = vmatpush1.bf16.msra.mxu0 0
    %904 = vmatprep.subr.bf16.mxu0 0
    %905 = vmatpush1.bf16.msra.mxu0 0
    %906 = vmatprep.subr.bf16.mxu0 0
    %907 = vmatpush1.bf16.msra.mxu0 0
    %908 = vmatprep.subr.bf16.mxu0 0
    %909 = vmatpush1.bf16.msra.mxu0 %v887
    %910 = vmatprep.subr.bf16.mxu0 0
    %911 = vmatpush1.bf16.msra.mxu0 %v886
    %912 = vmatprep.subr.bf16.mxu0 0
    %913 = vmatpush2.bf16.msra.mxu0 0
    %914 = vmatprep.subr.bf16.mxu0 0
    %915 = vmatpush2.bf16.msra.mxu0 0
    %916 = vmatprep.subr.bf16.mxu0 0
    %917 = vmatpush2.bf16.msra.mxu0 0
    %918 = vmatprep.subr.bf16.mxu0 0
    %919 = vmatpush2.bf16.msra.mxu0 0
    %920 = vmatprep.subr.bf16.mxu0 0
    %921 = vmatpush2.bf16.msra.mxu0 0
    %922 = vmatprep.subr.bf16.mxu0 0
    %923 = vmatpush2.bf16.msra.mxu0 0
    %924 = vmatprep.subr.bf16.mxu0 0
    %925 = vmatpush2.bf16.msra.mxu0 0
    %926 = vmatprep.subr.bf16.mxu0 0
    %927 = vmatpush2.bf16.msra.mxu0 0
    %928 = vmatprep.mubr.bf16.mxu0 0
    %929 = vmatmul.mubr.bf16.gmra.mxu0 %v104
    %v930 = vpop.f32.mrf.mxu0
    %v931 = vadd.f32 %v894, %v930
    %v932 = vpop.f32.mrf.mxu0
    %v933 = vpop.f32.mrf.mxu0
    %v934 = vadd.f32 %v894, %v933
    %v935 = vpop.f32.mrf.mxu0
    %936 = vdwg.mxu0
    %v937 = vpack.c.bf16 %v822, %v819
    %v938 = vpack.c.bf16 %v878, %v875
    %v940 = vsel %vm257, %v937, 0
    %v943 = vsel %vm257, %v938, 0
    %945 = vmatprep.subr.bf16.mxu0 0
    %946 = vmatpush1.bf16.xpose.msra.mxu0 0
    %947 = vmatprep.subr.bf16.mxu0 0
    %948 = vmatpush1.bf16.xpose.msra.mxu0 0
    %949 = vmatprep.subr.bf16.mxu0 0
    %950 = vmatpush1.bf16.xpose.msra.mxu0 0
    %951 = vmatprep.subr.bf16.mxu0 0
    %952 = vmatpush1.bf16.xpose.msra.mxu0 0
    %953 = vmatprep.subr.bf16.mxu0 0
    %954 = vmatpush1.bf16.xpose.msra.mxu0 0
    %955 = vmatprep.subr.bf16.mxu0 0
    %956 = vmatpush1.bf16.xpose.msra.mxu0 0
    %957 = vmatprep.subr.bf16.mxu0 0
    %958 = vmatpush1.bf16.xpose.msra.mxu0 0
    %959 = vmatprep.subr.bf16.mxu0 0
    %960 = vmatpush1.bf16.xpose.msra.mxu0 %v943
    %961 = vmatprep.subr.bf16.mxu0 0
    %962 = vmatpush2.bf16.xpose.msra.mxu0 0
    %963 = vmatprep.subr.bf16.mxu0 0
    %964 = vmatpush2.bf16.xpose.msra.mxu0 0
    %965 = vmatprep.subr.bf16.mxu0 0
    %966 = vmatpush2.bf16.xpose.msra.mxu0 0
    %967 = vmatprep.subr.bf16.mxu0 0
    %968 = vmatpush2.bf16.xpose.msra.mxu0 0
    %969 = vmatprep.subr.bf16.mxu0 0
    %970 = vmatpush2.bf16.xpose.msra.mxu0 0
    %971 = vmatprep.subr.bf16.mxu0 0
    %972 = vmatpush2.bf16.xpose.msra.mxu0 0
    %973 = vmatprep.subr.bf16.mxu0 0
    %974 = vmatpush2.bf16.xpose.msra.mxu0 0
    %975 = vmatprep.subr.bf16.mxu0 0
    %976 = vmatpush2.bf16.xpose.msra.mxu0 0
    %977 = vmatprep.mubr.bf16.mxu0 0
    %978 = vmatmul.mubr.bf16.gmra.mxu0 %v940
    %v979 = vpop.f32.mrf.mxu0
    %v980 = vadd.f32 0.0, %v979
    %v981 = vpop.f32.mrf.mxu0
    %v982 = vpop.f32.mrf.mxu0
    %v983 = vadd.f32 0.0, %v982
    %v984 = vpop.f32.mrf.mxu0
    %985 = vdwg.mxu0
    %v986 = vmul.f32 %v980, 0.35355338
    %v987 = vmul.f32 %v983, 0.35355338
    %v988 = vadd.f32 %v986, %v87
    %v989 = vadd.f32 %v987, %v88
    %v990 = vsel %vm309, %v988, -inf
    %991 = vmax.xlane.f32.xlu0 %v990
    %v992 = vpop.xlane.xlu0 %991
    %v993 = vsel %vm309, %v989, -inf
    %994 = vmax.xlane.f32.xlu0 %v993
    %v995 = vpop.xlane.xlu0 %994
    %v996 = vsub.f32 %v988, %v992
    %v997 = vsub.f32 %v989, %v995
    %v998 = vmul.f32 %v996, 1.442695
    %v999 = vpow.pop %v998
    %v1000 = vmul.f32 %v997, 1.442695
    %v1001 = vpow.pop %v1000
    %v1002 = vsel %vm309, %v999, 0.0
    %1003 = vadd.xlane.f32.xlu0 %v1002
    %v1004 = vpop.xlane.xlu0 %1003
    %v1005 = vsel %vm309, %v1001, 0.0
    %1006 = vadd.xlane.f32.xlu0 %v1005
    %v1007 = vpop.xlane.xlu0 %1006
    %v1008 = vrcp.pop %v1004
    %v1009 = vrcp.pop %v1007
    %v1010 = vmul.f32 %v999, %v1008
    %v1011 = vmul.f32 %v1001, %v1009
    %v1012 = vpack.c.bf16 %v1011, %v1010
    %v1013 = vpack.c.bf16 %v934, %v931
    %v1015 = vsel %vm309, %v1012, 0
    %1017 = vmatprep.subr.bf16.mxu0 0
    %1018 = vmatpush1.bf16.msra.mxu0 0
    %1019 = vmatprep.subr.bf16.mxu0 0
    %1020 = vmatpush1.bf16.msra.mxu0 0
    %1021 = vmatprep.subr.bf16.mxu0 0
    %1022 = vmatpush1.bf16.msra.mxu0 0
    %1023 = vmatprep.subr.bf16.mxu0 0
    %1024 = vmatpush1.bf16.msra.mxu0 0
    %1025 = vmatprep.subr.bf16.mxu0 0
    %1026 = vmatpush1.bf16.msra.mxu0 0
    %1027 = vmatprep.subr.bf16.mxu0 0
    %1028 = vmatpush1.bf16.msra.mxu0 0
    %1029 = vmatprep.subr.bf16.mxu0 0
    %1030 = vmatpush1.bf16.msra.mxu0 0
    %1031 = vmatprep.subr.bf16.mxu0 0
    %1032 = vmatpush1.bf16.msra.mxu0 %v1013
    %1033 = vmatprep.subr.bf16.mxu0 0
    %1034 = vmatpush2.bf16.msra.mxu0 0
    %1035 = vmatprep.subr.bf16.mxu0 0
    %1036 = vmatpush2.bf16.msra.mxu0 0
    %1037 = vmatprep.subr.bf16.mxu0 0
    %1038 = vmatpush2.bf16.msra.mxu0 0
    %1039 = vmatprep.subr.bf16.mxu0 0
    %1040 = vmatpush2.bf16.msra.mxu0 0
    %1041 = vmatprep.subr.bf16.mxu0 0
    %1042 = vmatpush2.bf16.msra.mxu0 0
    %1043 = vmatprep.subr.bf16.mxu0 0
    %1044 = vmatpush2.bf16.msra.mxu0 0
    %1045 = vmatprep.subr.bf16.mxu0 0
    %1046 = vmatpush2.bf16.msra.mxu0 0
    %1047 = vmatprep.subr.bf16.mxu0 0
    %1048 = vmatpush2.bf16.msra.mxu0 0
    %1049 = vmatprep.mubr.bf16.mxu0 0
    %1050 = vmatmul.mubr.bf16.gmra.mxu0 %v1015
    %v1051 = vpop.f32.mrf.mxu0
    %v1052 = vadd.f32 0.0, %v1051
    %v1053 = vpop.f32.mrf.mxu0
    %v1054 = vpop.f32.mrf.mxu0
    %v1055 = vadd.f32 0.0, %v1054
    %v1056 = vpop.f32.mrf.mxu0
    %1057 = vdwg.mxu0
    %s1058 = scalar_lea.vmem %s9, 16
    %v1059 = vld [vmem:[%s1058] sm:$0xff]
    %v1060 = vpack.c.bf16 %v1055, %v1052
    %v1061 = vpack.c.bf16 %v1059, %v1059
    %v1063 = vsel %vm257, %v1060, 0
    %v1066 = vsel %vm677, %v1061, 0
    %1068 = vmatprep.subr.bf16.mxu0 0
    %1069 = vmatpush1.bf16.msra.mxu0 0
    %1070 = vmatprep.subr.bf16.mxu0 0
    %1071 = vmatpush1.bf16.msra.mxu0 0
    %1072 = vmatprep.subr.bf16.mxu0 0
    %1073 = vmatpush1.bf16.msra.mxu0 0
    %1074 = vmatprep.subr.bf16.mxu0 0
    %1075 = vmatpush1.bf16.msra.mxu0 0
    %1076 = vmatprep.subr.bf16.mxu0 0
    %1077 = vmatpush1.bf16.msra.mxu0 0
    %1078 = vmatprep.subr.bf16.mxu0 0
    %1079 = vmatpush1.bf16.msra.mxu0 0
    %1080 = vmatprep.subr.bf16.mxu0 0
    %1081 = vmatpush1.bf16.msra.mxu0 0
    %1082 = vmatprep.subr.bf16.mxu0 0
    %1083 = vmatpush1.bf16.msra.mxu0 %v1066
    %1084 = vmatprep.subr.bf16.mxu0 0
    %1085 = vmatpush2.bf16.msra.mxu0 0
    %1086 = vmatprep.subr.bf16.mxu0 0
    %1087 = vmatpush2.bf16.msra.mxu0 0
    %1088 = vmatprep.subr.bf16.mxu0 0
    %1089 = vmatpush2.bf16.msra.mxu0 0
    %1090 = vmatprep.subr.bf16.mxu0 0
    %1091 = vmatpush2.bf16.msra.mxu0 0
    %1092 = vmatprep.subr.bf16.mxu0 0
    %1093 = vmatpush2.bf16.msra.mxu0 0
    %1094 = vmatprep.subr.bf16.mxu0 0
    %1095 = vmatpush2.bf16.msra.mxu0 0
    %1096 = vmatprep.subr.bf16.mxu0 0
    %1097 = vmatpush2.bf16.msra.mxu0 0
    %1098 = vmatprep.subr.bf16.mxu0 0
    %1099 = vmatpush2.bf16.msra.mxu0 0
    %1100 = vmatprep.mubr.bf16.mxu0 0
    %1101 = vmatmul.mubr.bf16.gmra.mxu0 %v1063
    %v1102 = vpop.f32.mrf.mxu0
    %v1103 = vadd.f32 0.0, %v1102
    %v1104 = vpop.f32.mrf.mxu0
    %v1105 = vpop.f32.mrf.mxu0
    %v1106 = vadd.f32 0.0, %v1105
    %v1107 = vpop.f32.mrf.mxu0
    %1108 = vdwg.mxu0
    %v1109 = vadd.f32 %v763, %v1103
    %v1110 = vadd.f32 %v766, %v1106
    %s1111 = scalar_lea.vmem %s3, 96
    %v1112 = vld [vmem:[%s1111] sm:$0xff]
    %v1113 = vld [vmem:[%s1111 + $0x8] sm:$0xff]
    %v1114 = vld [vmem:[%s1111 + $0x10] sm:$0xff]
    %v1115 = vld [vmem:[%s1111 + $0x18] sm:$0xff]
    %v1116 = vpack.c.bf16 %v1113, %v1112
    %v1117 = vpack.c.bf16 %v1115, %v1114
    %s1118 = scalar_lea.vmem %s4, 3
    %v1119 = vld [vmem:[%s1118] sm:$0x1]
    %v1121 = vlaneseq
    %v1122 = vshrl.u32 %v1121, 7
    %v1123 = vsub.s32 0, %v1122
    %v1124 = vrot.slane %v1119, %v1123
    %1126 = vmatprep.subr.bf16.mxu0 0
    %1127 = vmatpush1.bf16.msra.mxu0 0
    %1128 = vmatprep.subr.bf16.mxu0 0
    %1129 = vmatpush1.bf16.msra.mxu0 0
    %1130 = vmatprep.subr.bf16.mxu0 0
    %1131 = vmatpush1.bf16.msra.mxu0 0
    %1132 = vmatprep.subr.bf16.mxu0 0
    %1133 = vmatpush1.bf16.msra.mxu0 0
    %1134 = vmatprep.subr.bf16.mxu0 0
    %1135 = vmatpush1.bf16.msra.mxu0 0
    %1136 = vmatprep.subr.bf16.mxu0 0
    %1137 = vmatpush1.bf16.msra.mxu0 0
    %1138 = vmatprep.subr.bf16.mxu0 0
    %1139 = vmatpush1.bf16.msra.mxu0 %v1117
    %1140 = vmatprep.subr.bf16.mxu0 0
    %1141 = vmatpush1.bf16.msra.mxu0 %v1116
    %1142 = vmatprep.subr.bf16.mxu0 0
    %1143 = vmatpush2.bf16.msra.mxu0 0
    %1144 = vmatprep.subr.bf16.mxu0 0
    %1145 = vmatpush2.bf16.msra.mxu0 0
    %1146 = vmatprep.subr.bf16.mxu0 0
    %1147 = vmatpush2.bf16.msra.mxu0 0
    %1148 = vmatprep.subr.bf16.mxu0 0
    %1149 = vmatpush2.bf16.msra.mxu0 0
    %1150 = vmatprep.subr.bf16.mxu0 0
    %1151 = vmatpush2.bf16.msra.mxu0 0
    %1152 = vmatprep.subr.bf16.mxu0 0
    %1153 = vmatpush2.bf16.msra.mxu0 0
    %1154 = vmatprep.subr.bf16.mxu0 0
    %1155 = vmatpush2.bf16.msra.mxu0 0
    %1156 = vmatprep.subr.bf16.mxu0 0
    %1157 = vmatpush2.bf16.msra.mxu0 0
    %1158 = vmatprep.mubr.bf16.mxu0 0
    %1159 = vmatmul.mubr.bf16.gmra.mxu0 %v104
    %v1160 = vpop.f32.mrf.mxu0
    %v1161 = vadd.f32 %v1124, %v1160
    %v1162 = vpop.f32.mrf.mxu0
    %v1163 = vpop.f32.mrf.mxu0
    %v1164 = vadd.f32 %v1124, %v1163
    %v1165 = vpop.f32.mrf.mxu0
    %1166 = vdwg.mxu0
    %s1167 = scalar_lea.vmem %s5, 96
    %v1168 = vld [vmem:[%s1167] sm:$0xff]
    %v1169 = vld [vmem:[%s1167 + $0x8] sm:$0xff]
    %v1170 = vld [vmem:[%s1167 + $0x10] sm:$0xff]
    %v1171 = vld [vmem:[%s1167 + $0x18] sm:$0xff]
    %v1172 = vpack.c.bf16 %v1169, %v1168
    %v1173 = vpack.c.bf16 %v1171, %v1170
    %s1174 = scalar_lea.vmem %s6, 3
    %v1175 = vld [vmem:[%s1174] sm:$0x1]
    %v1177 = vlaneseq
    %v1178 = vshrl.u32 %v1177, 7
    %v1179 = vsub.s32 0, %v1178
    %v1180 = vrot.slane %v1175, %v1179
    %1182 = vmatprep.subr.bf16.mxu0 0
    %1183 = vmatpush1.bf16.msra.mxu0 0
    %1184 = vmatprep.subr.bf16.mxu0 0
    %1185 = vmatpush1.bf16.msra.mxu0 0
    %1186 = vmatprep.subr.bf16.mxu0 0
    %1187 = vmatpush1.bf16.msra.mxu0 0
    %1188 = vmatprep.subr.bf16.mxu0 0
    %1189 = vmatpush1.bf16.msra.mxu0 0
    %1190 = vmatprep.subr.bf16.mxu0 0
    %1191 = vmatpush1.bf16.msra.mxu0 0
    %1192 = vmatprep.subr.bf16.mxu0 0
    %1193 = vmatpush1.bf16.msra.mxu0 0
    %1194 = vmatprep.subr.bf16.mxu0 0
    %1195 = vmatpush1.bf16.msra.mxu0 %v1173
    %1196 = vmatprep.subr.bf16.mxu0 0
    %1197 = vmatpush1.bf16.msra.mxu0 %v1172
    %1198 = vmatprep.subr.bf16.mxu0 0
    %1199 = vmatpush2.bf16.msra.mxu0 0
    %1200 = vmatprep.subr.bf16.mxu0 0
    %1201 = vmatpush2.bf16.msra.mxu0 0
    %1202 = vmatprep.subr.bf16.mxu0 0
    %1203 = vmatpush2.bf16.msra.mxu0 0
    %1204 = vmatprep.subr.bf16.mxu0 0
    %1205 = vmatpush2.bf16.msra.mxu0 0
    %1206 = vmatprep.subr.bf16.mxu0 0
    %1207 = vmatpush2.bf16.msra.mxu0 0
    %1208 = vmatprep.subr.bf16.mxu0 0
    %1209 = vmatpush2.bf16.msra.mxu0 0
    %1210 = vmatprep.subr.bf16.mxu0 0
    %1211 = vmatpush2.bf16.msra.mxu0 0
    %1212 = vmatprep.subr.bf16.mxu0 0
    %1213 = vmatpush2.bf16.msra.mxu0 0
    %1214 = vmatprep.mubr.bf16.mxu0 0
    %1215 = vmatmul.mubr.bf16.gmra.mxu0 %v104
    %v1216 = vpop.f32.mrf.mxu0
    %v1217 = vadd.f32 %v1180, %v1216
    %v1218 = vpop.f32.mrf.mxu0
    %v1219 = vpop.f32.mrf.mxu0
    %v1220 = vadd.f32 %v1180, %v1219
    %v1221 = vpop.f32.mrf.mxu0
    %1222 = vdwg.mxu0
    %s1223 = scalar_lea.vmem %s7, 96
    %v1224 = vld [vmem:[%s1223] sm:$0xff]
    %v1225 = vld [vmem:[%s1223 + $0x8] sm:$0xff]
    %v1226 = vld [vmem:[%s1223 + $0x10] sm:$0xff]
    %v1227 = vld [vmem:[%s1223 + $0x18] sm:$0xff]
    %v1228 = vpack.c.bf16 %v1225, %v1224
    %v1229 = vpack.c.bf16 %v1227, %v1226
    %s1230 = scalar_lea.vmem %s8, 3
    %v1231 = vld [vmem:[%s1230] sm:$0x1]
    %v1233 = vlaneseq
    %v1234 = vshrl.u32 %v1233, 7
    %v1235 = vsub.s32 0, %v1234
    %v1236 = vrot.slane %v1231, %v1235
    %1238 = vmatprep.subr.bf16.mxu0 0
    %1239 = vmatpush1.bf16.msra.mxu0 0
    %1240 = vmatprep.subr.bf16.mxu0 0
    %1241 = vmatpush1.bf16.msra.mxu0 0
    %1242 = vmatprep.subr.bf16.mxu0 0
    %1243 = vmatpush1.bf16.msra.mxu0 0
    %1244 = vmatprep.subr.bf16.mxu0 0
    %1245 = vmatpush1.bf16.msra.mxu0 0
    %1246 = vmatprep.subr.bf16.mxu0 0
    %1247 = vmatpush1.bf16.msra.mxu0 0
    %1248 = vmatprep.subr.bf16.mxu0 0
    %1249 = vmatpush1.bf16.msra.mxu0 0
    %1250 = vmatprep.subr.bf16.mxu0 0
    %1251 = vmatpush1.bf16.msra.mxu0 %v1229
    %1252 = vmatprep.subr.bf16.mxu0 0
    %1253 = vmatpush1.bf16.msra.mxu0 %v1228
    %1254 = vmatprep.subr.bf16.mxu0 0
    %1255 = vmatpush2.bf16.msra.mxu0 0
    %1256 = vmatprep.subr.bf16.mxu0 0
    %1257 = vmatpush2.bf16.msra.mxu0 0
    %1258 = vmatprep.subr.bf16.mxu0 0
    %1259 = vmatpush2.bf16.msra.mxu0 0
    %1260 = vmatprep.subr.bf16.mxu0 0
    %1261 = vmatpush2.bf16.msra.mxu0 0
    %1262 = vmatprep.subr.bf16.mxu0 0
    %1263 = vmatpush2.bf16.msra.mxu0 0
    %1264 = vmatprep.subr.bf16.mxu0 0
    %1265 = vmatpush2.bf16.msra.mxu0 0
    %1266 = vmatprep.subr.bf16.mxu0 0
    %1267 = vmatpush2.bf16.msra.mxu0 0
    %1268 = vmatprep.subr.bf16.mxu0 0
    %1269 = vmatpush2.bf16.msra.mxu0 0
    %1270 = vmatprep.mubr.bf16.mxu0 0
    %1271 = vmatmul.mubr.bf16.gmra.mxu0 %v104
    %v1272 = vpop.f32.mrf.mxu0
    %v1273 = vadd.f32 %v1236, %v1272
    %v1274 = vpop.f32.mrf.mxu0
    %v1275 = vpop.f32.mrf.mxu0
    %v1276 = vadd.f32 %v1236, %v1275
    %v1277 = vpop.f32.mrf.mxu0
    %1278 = vdwg.mxu0
    %v1279 = vpack.c.bf16 %v1164, %v1161
    %v1280 = vpack.c.bf16 %v1220, %v1217
    %v1282 = vsel %vm257, %v1279, 0
    %v1285 = vsel %vm257, %v1280, 0
    %1287 = vmatprep.subr.bf16.mxu0 0
    %1288 = vmatpush1.bf16.xpose.msra.mxu0 0
    %1289 = vmatprep.subr.bf16.mxu0 0
    %1290 = vmatpush1.bf16.xpose.msra.mxu0 0
    %1291 = vmatprep.subr.bf16.mxu0 0
    %1292 = vmatpush1.bf16.xpose.msra.mxu0 0
    %1293 = vmatprep.subr.bf16.mxu0 0
    %1294 = vmatpush1.bf16.xpose.msra.mxu0 0
    %1295 = vmatprep.subr.bf16.mxu0 0
    %1296 = vmatpush1.bf16.xpose.msra.mxu0 0
    %1297 = vmatprep.subr.bf16.mxu0 0
    %1298 = vmatpush1.bf16.xpose.msra.mxu0 0
    %1299 = vmatprep.subr.bf16.mxu0 0
    %1300 = vmatpush1.bf16.xpose.msra.mxu0 0
    %1301 = vmatprep.subr.bf16.mxu0 0
    %1302 = vmatpush1.bf16.xpose.msra.mxu0 %v1285
    %1303 = vmatprep.subr.bf16.mxu0 0
    %1304 = vmatpush2.bf16.xpose.msra.mxu0 0
    %1305 = vmatprep.subr.bf16.mxu0 0
    %1306 = vmatpush2.bf16.xpose.msra.mxu0 0
    %1307 = vmatprep.subr.bf16.mxu0 0
    %1308 = vmatpush2.bf16.xpose.msra.mxu0 0
    %1309 = vmatprep.subr.bf16.mxu0 0
    %1310 = vmatpush2.bf16.xpose.msra.mxu0 0
    %1311 = vmatprep.subr.bf16.mxu0 0
    %1312 = vmatpush2.bf16.xpose.msra.mxu0 0
    %1313 = vmatprep.subr.bf16.mxu0 0
    %1314 = vmatpush2.bf16.xpose.msra.mxu0 0
    %1315 = vmatprep.subr.bf16.mxu0 0
    %1316 = vmatpush2.bf16.xpose.msra.mxu0 0
    %1317 = vmatprep.subr.bf16.mxu0 0
    %1318 = vmatpush2.bf16.xpose.msra.mxu0 0
    %1319 = vmatprep.mubr.bf16.mxu0 0
    %1320 = vmatmul.mubr.bf16.gmra.mxu0 %v1282
    %v1321 = vpop.f32.mrf.mxu0
    %v1322 = vadd.f32 0.0, %v1321
    %v1323 = vpop.f32.mrf.mxu0
    %v1324 = vpop.f32.mrf.mxu0
    %v1325 = vadd.f32 0.0, %v1324
    %v1326 = vpop.f32.mrf.mxu0
    %1327 = vdwg.mxu0
    %v1328 = vmul.f32 %v1322, 0.35355338
    %v1329 = vmul.f32 %v1325, 0.35355338
    %v1330 = vadd.f32 %v1328, %v87
    %v1331 = vadd.f32 %v1329, %v88
    %v1332 = vsel %vm309, %v1330, -inf
    %1333 = vmax.xlane.f32.xlu0 %v1332
    %v1334 = vpop.xlane.xlu0 %1333
    %v1335 = vsel %vm309, %v1331, -inf
    %1336 = vmax.xlane.f32.xlu0 %v1335
    %v1337 = vpop.xlane.xlu0 %1336
    %v1338 = vsub.f32 %v1330, %v1334
    %v1339 = vsub.f32 %v1331, %v1337
    %v1340 = vmul.f32 %v1338, 1.442695
    %v1341 = vpow.pop %v1340
    %v1342 = vmul.f32 %v1339, 1.442695
    %v1343 = vpow.pop %v1342
    %v1344 = vsel %vm309, %v1341, 0.0
    %1345 = vadd.xlane.f32.xlu0 %v1344
    %v1346 = vpop.xlane.xlu0 %1345
    %v1347 = vsel %vm309, %v1343, 0.0
    %1348 = vadd.xlane.f32.xlu0 %v1347
    %v1349 = vpop.xlane.xlu0 %1348
    %v1350 = vrcp.pop %v1346
    %v1351 = vrcp.pop %v1349
    %v1352 = vmul.f32 %v1341, %v1350
    %v1353 = vmul.f32 %v1343, %v1351
    %v1354 = vpack.c.bf16 %v1353, %v1352
    %v1355 = vpack.c.bf16 %v1276, %v1273
    %v1357 = vsel %vm309, %v1354, 0
    %1359 = vmatprep.subr.bf16.mxu0 0
    %1360 = vmatpush1.bf16.msra.mxu0 0
    %1361 = vmatprep.subr.bf16.mxu0 0
    %1362 = vmatpush1.bf16.msra.mxu0 0
    %1363 = vmatprep.subr.bf16.mxu0 0
    %1364 = vmatpush1.bf16.msra.mxu0 0
    %1365 = vmatprep.subr.bf16.mxu0 0
    %1366 = vmatpush1.bf16.msra.mxu0 0
    %1367 = vmatprep.subr.bf16.mxu0 0
    %1368 = vmatpush1.bf16.msra.mxu0 0
    %1369 = vmatprep.subr.bf16.mxu0 0
    %1370 = vmatpush1.bf16.msra.mxu0 0
    %1371 = vmatprep.subr.bf16.mxu0 0
    %1372 = vmatpush1.bf16.msra.mxu0 0
    %1373 = vmatprep.subr.bf16.mxu0 0
    %1374 = vmatpush1.bf16.msra.mxu0 %v1355
    %1375 = vmatprep.subr.bf16.mxu0 0
    %1376 = vmatpush2.bf16.msra.mxu0 0
    %1377 = vmatprep.subr.bf16.mxu0 0
    %1378 = vmatpush2.bf16.msra.mxu0 0
    %1379 = vmatprep.subr.bf16.mxu0 0
    %1380 = vmatpush2.bf16.msra.mxu0 0
    %1381 = vmatprep.subr.bf16.mxu0 0
    %1382 = vmatpush2.bf16.msra.mxu0 0
    %1383 = vmatprep.subr.bf16.mxu0 0
    %1384 = vmatpush2.bf16.msra.mxu0 0
    %1385 = vmatprep.subr.bf16.mxu0 0
    %1386 = vmatpush2.bf16.msra.mxu0 0
    %1387 = vmatprep.subr.bf16.mxu0 0
    %1388 = vmatpush2.bf16.msra.mxu0 0
    %1389 = vmatprep.subr.bf16.mxu0 0
    %1390 = vmatpush2.bf16.msra.mxu0 0
    %1391 = vmatprep.mubr.bf16.mxu0 0
    %1392 = vmatmul.mubr.bf16.gmra.mxu0 %v1357
    %v1393 = vpop.f32.mrf.mxu0
    %v1394 = vadd.f32 0.0, %v1393
    %v1395 = vpop.f32.mrf.mxu0
    %v1396 = vpop.f32.mrf.mxu0
    %v1397 = vadd.f32 0.0, %v1396
    %v1398 = vpop.f32.mrf.mxu0
    %1399 = vdwg.mxu0
    %s1400 = scalar_lea.vmem %s9, 24
    %v1401 = vld [vmem:[%s1400] sm:$0xff]
    %v1402 = vpack.c.bf16 %v1397, %v1394
    %v1403 = vpack.c.bf16 %v1401, %v1401
    %v1405 = vsel %vm257, %v1402, 0
    %v1408 = vsel %vm677, %v1403, 0
    %1410 = vmatprep.subr.bf16.mxu0 0
    %1411 = vmatpush1.bf16.msra.mxu0 0
    %1412 = vmatprep.subr.bf16.mxu0 0
    %1413 = vmatpush1.bf16.msra.mxu0 0
    %1414 = vmatprep.subr.bf16.mxu0 0
    %1415 = vmatpush1.bf16.msra.mxu0 0
    %1416 = vmatprep.subr.bf16.mxu0 0
    %1417 = vmatpush1.bf16.msra.mxu0 0
    %1418 = vmatprep.subr.bf16.mxu0 0
    %1419 = vmatpush1.bf16.msra.mxu0 0
    %1420 = vmatprep.subr.bf16.mxu0 0
    %1421 = vmatpush1.bf16.msra.mxu0 0
    %1422 = vmatprep.subr.bf16.mxu0 0
    %1423 = vmatpush1.bf16.msra.mxu0 0
    %1424 = vmatprep.subr.bf16.mxu0 0
    %1425 = vmatpush1.bf16.msra.mxu0 %v1408
    %1426 = vmatprep.subr.bf16.mxu0 0
    %1427 = vmatpush2.bf16.msra.mxu0 0
    %1428 = vmatprep.subr.bf16.mxu0 0
    %1429 = vmatpush2.bf16.msra.mxu0 0
    %1430 = vmatprep.subr.bf16.mxu0 0
    %1431 = vmatpush2.bf16.msra.mxu0 0
    %1432 = vmatprep.subr.bf16.mxu0 0
    %1433 = vmatpush2.bf16.msra.mxu0 0
    %1434 = vmatprep.subr.bf16.mxu0 0
    %1435 = vmatpush2.bf16.msra.mxu0 0
    %1436 = vmatprep.subr.bf16.mxu0 0
    %1437 = vmatpush2.bf16.msra.mxu0 0
    %1438 = vmatprep.subr.bf16.mxu0 0
    %1439 = vmatpush2.bf16.msra.mxu0 0
    %1440 = vmatprep.subr.bf16.mxu0 0
    %1441 = vmatpush2.bf16.msra.mxu0 0
    %1442 = vmatprep.mubr.bf16.mxu0 0
    %1443 = vmatmul.mubr.bf16.gmra.mxu0 %v1405
    %v1444 = vpop.f32.mrf.mxu0
    %v1445 = vadd.f32 0.0, %v1444
    %v1446 = vpop.f32.mrf.mxu0
    %v1447 = vpop.f32.mrf.mxu0
    %v1448 = vadd.f32 0.0, %v1447
    %v1449 = vpop.f32.mrf.mxu0
    %1450 = vdwg.mxu0
    %v1451 = vadd.f32 %v1109, %v1445
    %v1452 = vadd.f32 %v1110, %v1448
    %v1453 = vadd.f32 %v83, %v1451
    %v1454 = vadd.f32 %v84, %v1452
    %v1455 = vld [vmem:[%s10] sm:$0x1]
    %v1457 = vlaneseq
    %v1458 = vshrl.u32 %v1457, 7
    %v1459 = vsub.s32 0, %v1458
    %v1460 = vrot.slane %v1455, %v1459
    %v1462 = vadd.f32 %v1453, %v1460
    %v1463 = vadd.f32 %v1454, %v1460
    %v1464 = vld [vmem:[%s15] sm:$0x1]
    %v1465 = vld [vmem:[%s16] sm:$0x1]
    %v1466 = vsel %vm78, %v1462, 0.0
    %1467 = vadd.xlane.f32.xlu0 %v1466
    %v1468 = vpop.xlane.xlu0 %1467
    %v1469 = vsel %vm78, %v1463, 0.0
    %1470 = vadd.xlane.f32.xlu0 %v1469
    %v1471 = vpop.xlane.xlu0 %1470
    %v1472 = vrcp.pop 32.0
    %v1473 = vmul.f32 %v1468, %v1472
    %v1474 = vmul.f32 %v1471, %v1472
    %v1475 = vsub.f32 %v1462, %v1473
    %v1476 = vsub.f32 %v1463, %v1474
    %v1477 = vmul.f32 %v1475, %v1475
    %v1478 = vmul.f32 %v1476, %v1476
    %v1479 = vsel %vm78, %v1477, 0.0
    %1480 = vadd.xlane.f32.xlu0 %v1479
    %v1481 = vpop.xlane.xlu0 %1480
    %v1482 = vsel %vm78, %v1478, 0.0
    %1483 = vadd.xlane.f32.xlu0 %v1482
    %v1484 = vpop.xlane.xlu0 %1483
    %v1485 = vmul.f32 %v1481, %v1472
    %v1486 = vmul.f32 %v1484, %v1472
    %v1487 = vadd.f32 %v1485, 1e-05
    %v1488 = vadd.f32 %v1486, 1e-05
    %v1489 = vrsqrt.pop %v1487
    %v1490 = vrsqrt.pop %v1488
    %v1491 = vmul.f32 %v1475, %v1489
    %v1492 = vmul.f32 %v1476, %v1490
    %v1494 = vlaneseq
    %v1495 = vshrl.u32 %v1494, 7
    %v1496 = vsub.s32 0, %v1495
    %v1497 = vrot.slane %v1464, %v1496
    %v1499 = vmul.f32 %v1491, %v1497
    %v1500 = vmul.f32 %v1492, %v1497
    %v1502 = vlaneseq
    %v1503 = vshrl.u32 %v1502, 7
    %v1504 = vsub.s32 0, %v1503
    %v1505 = vrot.slane %v1465, %v1504
    %v1507 = vadd.f32 %v1499, %v1505
    %v1508 = vadd.f32 %v1500, %v1505
    %v1509 = vld [vmem:[%s11] sm:$0xff]
    %v1510 = vld [vmem:[%s11 + $0x8] sm:$0xff]
    %v1511 = vld [vmem:[%s11 + $0x10] sm:$0xff]
    %v1512 = vld [vmem:[%s11 + $0x18] sm:$0xff]
    %v1513 = vpack.c.bf16 %v1508, %v1507
    %v1514 = vpack.c.bf16 %v1510, %v1509
    %v1515 = vpack.c.bf16 %v1512, %v1511
    %v1516 = vld [vmem:[%s12] sm:$0x1]
    %v1518 = vlaneseq
    %v1519 = vshrl.u32 %v1518, 7
    %v1520 = vsub.s32 0, %v1519
    %v1521 = vrot.slane %v1516, %v1520
    %v1524 = vsel %vm78, %v1513, 0
    %1526 = vmatprep.subr.bf16.mxu0 0
    %1527 = vmatpush1.bf16.msra.mxu0 0
    %1528 = vmatprep.subr.bf16.mxu0 0
    %1529 = vmatpush1.bf16.msra.mxu0 0
    %1530 = vmatprep.subr.bf16.mxu0 0
    %1531 = vmatpush1.bf16.msra.mxu0 0
    %1532 = vmatprep.subr.bf16.mxu0 0
    %1533 = vmatpush1.bf16.msra.mxu0 0
    %1534 = vmatprep.subr.bf16.mxu0 0
    %1535 = vmatpush1.bf16.msra.mxu0 0
    %1536 = vmatprep.subr.bf16.mxu0 0
    %1537 = vmatpush1.bf16.msra.mxu0 0
    %1538 = vmatprep.subr.bf16.mxu0 0
    %1539 = vmatpush1.bf16.msra.mxu0 %v1515
    %1540 = vmatprep.subr.bf16.mxu0 0
    %1541 = vmatpush1.bf16.msra.mxu0 %v1514
    %1542 = vmatprep.subr.bf16.mxu0 0
    %1543 = vmatpush2.bf16.msra.mxu0 0
    %1544 = vmatprep.subr.bf16.mxu0 0
    %1545 = vmatpush2.bf16.msra.mxu0 0
    %1546 = vmatprep.subr.bf16.mxu0 0
    %1547 = vmatpush2.bf16.msra.mxu0 0
    %1548 = vmatprep.subr.bf16.mxu0 0
    %1549 = vmatpush2.bf16.msra.mxu0 0
    %1550 = vmatprep.subr.bf16.mxu0 0
    %1551 = vmatpush2.bf16.msra.mxu0 0
    %1552 = vmatprep.subr.bf16.mxu0 0
    %1553 = vmatpush2.bf16.msra.mxu0 0
    %1554 = vmatprep.subr.bf16.mxu0 0
    %1555 = vmatpush2.bf16.msra.mxu0 0
    %1556 = vmatprep.subr.bf16.mxu0 0
    %1557 = vmatpush2.bf16.msra.mxu0 0
    %1558 = vmatprep.mubr.bf16.mxu0 0
    %1559 = vmatmul.mubr.bf16.gmra.mxu0 %v1524
    %v1560 = vpop.f32.mrf.mxu0
    %v1561 = vadd.f32 %v1521, %v1560
    %v1562 = vpop.f32.mrf.mxu0
    %v1563 = vpop.f32.mrf.mxu0
    %v1564 = vadd.f32 %v1521, %v1563
    %v1565 = vpop.f32.mrf.mxu0
    %1566 = vdwg.mxu0
    %v1567 = vmax.f32 %v1561, 0.0
    %v1568 = vmax.f32 %v1564, 0.0
    %v1569 = vld [vmem:[%s13] sm:$0xff]
    %v1570 = vld [vmem:[%s13 + $0x8] sm:$0xff]
    %v1571 = vld [vmem:[%s13 + $0x10] sm:$0xff]
    %v1572 = vld [vmem:[%s13 + $0x18] sm:$0xff]
    %v1573 = vld [vmem:[%s13 + $0x20] sm:$0xff]
    %v1574 = vld [vmem:[%s13 + $0x28] sm:$0xff]
    %v1575 = vld [vmem:[%s13 + $0x30] sm:$0xff]
    %v1576 = vld [vmem:[%s13 + $0x38] sm:$0xff]
    %v1577 = vpack.c.bf16 %v1568, %v1567
    %v1578 = vpack.c.bf16 %v1570, %v1569
    %v1579 = vpack.c.bf16 %v1572, %v1571
    %v1580 = vpack.c.bf16 %v1574, %v1573
    %v1581 = vpack.c.bf16 %v1576, %v1575
    %v1582 = vld [vmem:[%s14] sm:$0x1]
    %v1584 = vlaneseq
    %v1585 = vshrl.u32 %v1584, 7
    %v1586 = vsub.s32 0, %v1585
    %v1587 = vrot.slane %v1582, %v1586
    %vm1589 = vcmask 523264
    %v1591 = vsel %vm1589, %v1577, 0
    %1593 = vmatprep.subr.bf16.mxu0 0
    %1594 = vmatpush1.bf16.msra.mxu0 0
    %1595 = vmatprep.subr.bf16.mxu0 0
    %1596 = vmatpush1.bf16.msra.mxu0 0
    %1597 = vmatprep.subr.bf16.mxu0 0
    %1598 = vmatpush1.bf16.msra.mxu0 0
    %1599 = vmatprep.subr.bf16.mxu0 0
    %1600 = vmatpush1.bf16.msra.mxu0 0
    %1601 = vmatprep.subr.bf16.mxu0 0
    %1602 = vmatpush1.bf16.msra.mxu0 %v1581
    %1603 = vmatprep.subr.bf16.mxu0 0
    %1604 = vmatpush1.bf16.msra.mxu0 %v1580
    %1605 = vmatprep.subr.bf16.mxu0 0
    %1606 = vmatpush1.bf16.msra.mxu0 %v1579
    %1607 = vmatprep.subr.bf16.mxu0 0
    %1608 = vmatpush1.bf16.msra.mxu0 %v1578
    %1609 = vmatprep.subr.bf16.mxu0 0
    %1610 = vmatpush2.bf16.msra.mxu0 0
    %1611 = vmatprep.subr.bf16.mxu0 0
    %1612 = vmatpush2.bf16.msra.mxu0 0
    %1613 = vmatprep.subr.bf16.mxu0 0
    %1614 = vmatpush2.bf16.msra.mxu0 0
    %1615 = vmatprep.subr.bf16.mxu0 0
    %1616 = vmatpush2.bf16.msra.mxu0 0
    %1617 = vmatprep.subr.bf16.mxu0 0
    %1618 = vmatpush2.bf16.msra.mxu0 0
    %1619 = vmatprep.subr.bf16.mxu0 0
    %1620 = vmatpush2.bf16.msra.mxu0 0
    %1621 = vmatprep.subr.bf16.mxu0 0
    %1622 = vmatpush2.bf16.msra.mxu0 0
    %1623 = vmatprep.subr.bf16.mxu0 0
    %1624 = vmatpush2.bf16.msra.mxu0 0
    %1625 = vmatprep.mubr.bf16.mxu0 0
    %1626 = vmatmul.mubr.bf16.gmra.mxu0 %v1591
    %v1627 = vpop.f32.mrf.mxu0
    %v1628 = vadd.f32 %v1587, %v1627
    %v1629 = vpop.f32.mrf.mxu0
    %v1630 = vpop.f32.mrf.mxu0
    %v1631 = vadd.f32 %v1587, %v1630
    %v1632 = vpop.f32.mrf.mxu0
    %1633 = vdwg.mxu0
    %v1634 = vadd.f32 %v1507, %v1628
    %v1635 = vadd.f32 %v1508, %v1631
    %v1636 = vld [vmem:[%s17] sm:$0x1]
    %v1637 = vld [vmem:[%s18] sm:$0x1]
    %v1638 = vsel %vm78, %v1634, 0.0
    %1639 = vadd.xlane.f32.xlu0 %v1638
    %v1640 = vpop.xlane.xlu0 %1639
    %v1641 = vsel %vm78, %v1635, 0.0
    %1642 = vadd.xlane.f32.xlu0 %v1641
    %v1643 = vpop.xlane.xlu0 %1642
    %v1644 = vmul.f32 %v1640, %v1472
    %v1645 = vmul.f32 %v1643, %v1472
    %v1646 = vsub.f32 %v1634, %v1644
    %v1647 = vsub.f32 %v1635, %v1645
    %v1648 = vmul.f32 %v1646, %v1646
    %v1649 = vmul.f32 %v1647, %v1647
    %v1650 = vsel %vm78, %v1648, 0.0
    %1651 = vadd.xlane.f32.xlu0 %v1650
    %v1652 = vpop.xlane.xlu0 %1651
    %v1653 = vsel %vm78, %v1649, 0.0
    %1654 = vadd.xlane.f32.xlu0 %v1653
    %v1655 = vpop.xlane.xlu0 %1654
    %v1656 = vmul.f32 %v1652, %v1472
    %v1657 = vmul.f32 %v1655, %v1472
    %v1658 = vadd.f32 %v1656, 1e-05
    %v1659 = vadd.f32 %v1657, 1e-05
    %v1660 = vrsqrt.pop %v1658
    %v1661 = vrsqrt.pop %v1659
    %v1662 = vmul.f32 %v1646, %v1660
    %v1663 = vmul.f32 %v1647, %v1661
    %v1665 = vlaneseq
    %v1666 = vshrl.u32 %v1665, 7
    %v1667 = vsub.s32 0, %v1666
    %v1668 = vrot.slane %v1636, %v1667
    %v1670 = vmul.f32 %v1662, %v1668
    %v1671 = vmul.f32 %v1663, %v1668
    %v1673 = vlaneseq
    %v1674 = vshrl.u32 %v1673, 7
    %v1675 = vsub.s32 0, %v1674
    %v1676 = vrot.slane %v1637, %v1675
    %v1678 = vadd.f32 %v1670, %v1676
    %v1679 = vadd.f32 %v1671, %v1676
    %s1680 = scalar_lea.vmem %s3, 128
    %v1681 = vld [vmem:[%s1680] sm:$0xff]
    %v1682 = vld [vmem:[%s1680 + $0x8] sm:$0xff]
    %v1683 = vld [vmem:[%s1680 + $0x10] sm:$0xff]
    %v1684 = vld [vmem:[%s1680 + $0x18] sm:$0xff]
    %v1685 = vpack.c.bf16 %v1679, %v1678
    %v1686 = vpack.c.bf16 %v1682, %v1681
    %v1687 = vpack.c.bf16 %v1684, %v1683
    %s1688 = scalar_lea.vmem %s4, 4
    %v1689 = vld [vmem:[%s1688] sm:$0x1]
    %v1691 = vlaneseq
    %v1692 = vshrl.u32 %v1691, 7
    %v1693 = vsub.s32 0, %v1692
    %v1694 = vrot.slane %v1689, %v1693
    %v1697 = vsel %vm78, %v1685, 0
    %1699 = vmatprep.subr.bf16.mxu0 0
    %1700 = vmatpush1.bf16.msra.mxu0 0
    %1701 = vmatprep.subr.bf16.mxu0 0
    %1702 = vmatpush1.bf16.msra.mxu0 0
    %1703 = vmatprep.subr.bf16.mxu0 0
    %1704 = vmatpush1.bf16.msra.mxu0 0
    %1705 = vmatprep.subr.bf16.mxu0 0
    %1706 = vmatpush1.bf16.msra.mxu0 0
    %1707 = vmatprep.subr.bf16.mxu0 0
    %1708 = vmatpush1.bf16.msra.mxu0 0
    %1709 = vmatprep.subr.bf16.mxu0 0
    %1710 = vmatpush1.bf16.msra.mxu0 0
    %1711 = vmatprep.subr.bf16.mxu0 0
    %1712 = vmatpush1.bf16.msra.mxu0 %v1687
    %1713 = vmatprep.subr.bf16.mxu0 0
    %1714 = vmatpush1.bf16.msra.mxu0 %v1686
    %1715 = vmatprep.subr.bf16.mxu0 0
    %1716 = vmatpush2.bf16.msra.mxu0 0
    %1717 = vmatprep.subr.bf16.mxu0 0
    %1718 = vmatpush2.bf16.msra.mxu0 0
    %1719 = vmatprep.subr.bf16.mxu0 0
    %1720 = vmatpush2.bf16.msra.mxu0 0
    %1721 = vmatprep.subr.bf16.mxu0 0
    %1722 = vmatpush2.bf16.msra.mxu0 0
    %1723 = vmatprep.subr.bf16.mxu0 0
    %1724 = vmatpush2.bf16.msra.mxu0 0
    %1725 = vmatprep.subr.bf16.mxu0 0
    %1726 = vmatpush2.bf16.msra.mxu0 0
    %1727 = vmatprep.subr.bf16.mxu0 0
    %1728 = vmatpush2.bf16.msra.mxu0 0
    %1729 = vmatprep.subr.bf16.mxu0 0
    %1730 = vmatpush2.bf16.msra.mxu0 0
    %1731 = vmatprep.mubr.bf16.mxu0 0
    %1732 = vmatmul.mubr.bf16.gmra.mxu0 %v1697
    %v1733 = vpop.f32.mrf.mxu0
    %v1734 = vadd.f32 %v1694, %v1733
    %v1735 = vpop.f32.mrf.mxu0
    %v1736 = vpop.f32.mrf.mxu0
    %v1737 = vadd.f32 %v1694, %v1736
    %v1738 = vpop.f32.mrf.mxu0
    %1739 = vdwg.mxu0
    %s1740 = scalar_lea.vmem %s5, 128
    %v1741 = vld [vmem:[%s1740] sm:$0xff]
    %v1742 = vld [vmem:[%s1740 + $0x8] sm:$0xff]
    %v1743 = vld [vmem:[%s1740 + $0x10] sm:$0xff]
    %v1744 = vld [vmem:[%s1740 + $0x18] sm:$0xff]
    %v1745 = vpack.c.bf16 %v1742, %v1741
    %v1746 = vpack.c.bf16 %v1744, %v1743
    %s1747 = scalar_lea.vmem %s6, 4
    %v1748 = vld [vmem:[%s1747] sm:$0x1]
    %v1750 = vlaneseq
    %v1751 = vshrl.u32 %v1750, 7
    %v1752 = vsub.s32 0, %v1751
    %v1753 = vrot.slane %v1748, %v1752
    %1755 = vmatprep.subr.bf16.mxu0 0
    %1756 = vmatpush1.bf16.msra.mxu0 0
    %1757 = vmatprep.subr.bf16.mxu0 0
    %1758 = vmatpush1.bf16.msra.mxu0 0
    %1759 = vmatprep.subr.bf16.mxu0 0
    %1760 = vmatpush1.bf16.msra.mxu0 0
    %1761 = vmatprep.subr.bf16.mxu0 0
    %1762 = vmatpush1.bf16.msra.mxu0 0
    %1763 = vmatprep.subr.bf16.mxu0 0
    %1764 = vmatpush1.bf16.msra.mxu0 0
    %1765 = vmatprep.subr.bf16.mxu0 0
    %1766 = vmatpush1.bf16.msra.mxu0 0
    %1767 = vmatprep.subr.bf16.mxu0 0
    %1768 = vmatpush1.bf16.msra.mxu0 %v1746
    %1769 = vmatprep.subr.bf16.mxu0 0
    %1770 = vmatpush1.bf16.msra.mxu0 %v1745
    %1771 = vmatprep.subr.bf16.mxu0 0
    %1772 = vmatpush2.bf16.msra.mxu0 0
    %1773 = vmatprep.subr.bf16.mxu0 0
    %1774 = vmatpush2.bf16.msra.mxu0 0
    %1775 = vmatprep.subr.bf16.mxu0 0
    %1776 = vmatpush2.bf16.msra.mxu0 0
    %1777 = vmatprep.subr.bf16.mxu0 0
    %1778 = vmatpush2.bf16.msra.mxu0 0
    %1779 = vmatprep.subr.bf16.mxu0 0
    %1780 = vmatpush2.bf16.msra.mxu0 0
    %1781 = vmatprep.subr.bf16.mxu0 0
    %1782 = vmatpush2.bf16.msra.mxu0 0
    %1783 = vmatprep.subr.bf16.mxu0 0
    %1784 = vmatpush2.bf16.msra.mxu0 0
    %1785 = vmatprep.subr.bf16.mxu0 0
    %1786 = vmatpush2.bf16.msra.mxu0 0
    %1787 = vmatprep.mubr.bf16.mxu0 0
    %1788 = vmatmul.mubr.bf16.gmra.mxu0 %v1697
    %v1789 = vpop.f32.mrf.mxu0
    %v1790 = vadd.f32 %v1753, %v1789
    %v1791 = vpop.f32.mrf.mxu0
    %v1792 = vpop.f32.mrf.mxu0
    %v1793 = vadd.f32 %v1753, %v1792
    %v1794 = vpop.f32.mrf.mxu0
    %1795 = vdwg.mxu0
    %s1796 = scalar_lea.vmem %s7, 128
    %v1797 = vld [vmem:[%s1796] sm:$0xff]
    %v1798 = vld [vmem:[%s1796 + $0x8] sm:$0xff]
    %v1799 = vld [vmem:[%s1796 + $0x10] sm:$0xff]
    %v1800 = vld [vmem:[%s1796 + $0x18] sm:$0xff]
    %v1801 = vpack.c.bf16 %v1798, %v1797
    %v1802 = vpack.c.bf16 %v1800, %v1799
    %s1803 = scalar_lea.vmem %s8, 4
    %v1804 = vld [vmem:[%s1803] sm:$0x1]
    %v1806 = vlaneseq
    %v1807 = vshrl.u32 %v1806, 7
    %v1808 = vsub.s32 0, %v1807
    %v1809 = vrot.slane %v1804, %v1808
    %1811 = vmatprep.subr.bf16.mxu0 0
    %1812 = vmatpush1.bf16.msra.mxu0 0
    %1813 = vmatprep.subr.bf16.mxu0 0
    %1814 = vmatpush1.bf16.msra.mxu0 0
    %1815 = vmatprep.subr.bf16.mxu0 0
    %1816 = vmatpush1.bf16.msra.mxu0 0
    %1817 = vmatprep.subr.bf16.mxu0 0
    %1818 = vmatpush1.bf16.msra.mxu0 0
    %1819 = vmatprep.subr.bf16.mxu0 0
    %1820 = vmatpush1.bf16.msra.mxu0 0
    %1821 = vmatprep.subr.bf16.mxu0 0
    %1822 = vmatpush1.bf16.msra.mxu0 0
    %1823 = vmatprep.subr.bf16.mxu0 0
    %1824 = vmatpush1.bf16.msra.mxu0 %v1802
    %1825 = vmatprep.subr.bf16.mxu0 0
    %1826 = vmatpush1.bf16.msra.mxu0 %v1801
    %1827 = vmatprep.subr.bf16.mxu0 0
    %1828 = vmatpush2.bf16.msra.mxu0 0
    %1829 = vmatprep.subr.bf16.mxu0 0
    %1830 = vmatpush2.bf16.msra.mxu0 0
    %1831 = vmatprep.subr.bf16.mxu0 0
    %1832 = vmatpush2.bf16.msra.mxu0 0
    %1833 = vmatprep.subr.bf16.mxu0 0
    %1834 = vmatpush2.bf16.msra.mxu0 0
    %1835 = vmatprep.subr.bf16.mxu0 0
    %1836 = vmatpush2.bf16.msra.mxu0 0
    %1837 = vmatprep.subr.bf16.mxu0 0
    %1838 = vmatpush2.bf16.msra.mxu0 0
    %1839 = vmatprep.subr.bf16.mxu0 0
    %1840 = vmatpush2.bf16.msra.mxu0 0
    %1841 = vmatprep.subr.bf16.mxu0 0
    %1842 = vmatpush2.bf16.msra.mxu0 0
    %1843 = vmatprep.mubr.bf16.mxu0 0
    %1844 = vmatmul.mubr.bf16.gmra.mxu0 %v1697
    %v1845 = vpop.f32.mrf.mxu0
    %v1846 = vadd.f32 %v1809, %v1845
    %v1847 = vpop.f32.mrf.mxu0
    %v1848 = vpop.f32.mrf.mxu0
    %v1849 = vadd.f32 %v1809, %v1848
    %v1850 = vpop.f32.mrf.mxu0
    %1851 = vdwg.mxu0
    %v1852 = vpack.c.bf16 %v1737, %v1734
    %v1853 = vpack.c.bf16 %v1793, %v1790
    %v1855 = vsel %vm257, %v1852, 0
    %v1858 = vsel %vm257, %v1853, 0
    %1860 = vmatprep.subr.bf16.mxu0 0
    %1861 = vmatpush1.bf16.xpose.msra.mxu0 0
    %1862 = vmatprep.subr.bf16.mxu0 0
    %1863 = vmatpush1.bf16.xpose.msra.mxu0 0
    %1864 = vmatprep.subr.bf16.mxu0 0
    %1865 = vmatpush1.bf16.xpose.msra.mxu0 0
    %1866 = vmatprep.subr.bf16.mxu0 0
    %1867 = vmatpush1.bf16.xpose.msra.mxu0 0
    %1868 = vmatprep.subr.bf16.mxu0 0
    %1869 = vmatpush1.bf16.xpose.msra.mxu0 0
    %1870 = vmatprep.subr.bf16.mxu0 0
    %1871 = vmatpush1.bf16.xpose.msra.mxu0 0
    %1872 = vmatprep.subr.bf16.mxu0 0
    %1873 = vmatpush1.bf16.xpose.msra.mxu0 0
    %1874 = vmatprep.subr.bf16.mxu0 0
    %1875 = vmatpush1.bf16.xpose.msra.mxu0 %v1858
    %1876 = vmatprep.subr.bf16.mxu0 0
    %1877 = vmatpush2.bf16.xpose.msra.mxu0 0
    %1878 = vmatprep.subr.bf16.mxu0 0
    %1879 = vmatpush2.bf16.xpose.msra.mxu0 0
    %1880 = vmatprep.subr.bf16.mxu0 0
    %1881 = vmatpush2.bf16.xpose.msra.mxu0 0
    %1882 = vmatprep.subr.bf16.mxu0 0
    %1883 = vmatpush2.bf16.xpose.msra.mxu0 0
    %1884 = vmatprep.subr.bf16.mxu0 0
    %1885 = vmatpush2.bf16.xpose.msra.mxu0 0
    %1886 = vmatprep.subr.bf16.mxu0 0
    %1887 = vmatpush2.bf16.xpose.msra.mxu0 0
    %1888 = vmatprep.subr.bf16.mxu0 0
    %1889 = vmatpush2.bf16.xpose.msra.mxu0 0
    %1890 = vmatprep.subr.bf16.mxu0 0
    %1891 = vmatpush2.bf16.xpose.msra.mxu0 0
    %1892 = vmatprep.mubr.bf16.mxu0 0
    %1893 = vmatmul.mubr.bf16.gmra.mxu0 %v1855
    %v1894 = vpop.f32.mrf.mxu0
    %v1895 = vadd.f32 0.0, %v1894
    %v1896 = vpop.f32.mrf.mxu0
    %v1897 = vpop.f32.mrf.mxu0
    %v1898 = vadd.f32 0.0, %v1897
    %v1899 = vpop.f32.mrf.mxu0
    %1900 = vdwg.mxu0
    %v1901 = vmul.f32 %v1895, 0.35355338
    %v1902 = vmul.f32 %v1898, 0.35355338
    %v1903 = vadd.f32 %v1901, %v87
    %v1904 = vadd.f32 %v1902, %v88
    %v1905 = vsel %vm309, %v1903, -inf
    %1906 = vmax.xlane.f32.xlu0 %v1905
    %v1907 = vpop.xlane.xlu0 %1906
    %v1908 = vsel %vm309, %v1904, -inf
    %1909 = vmax.xlane.f32.xlu0 %v1908
    %v1910 = vpop.xlane.xlu0 %1909
    %v1911 = vsub.f32 %v1903, %v1907
    %v1912 = vsub.f32 %v1904, %v1910
    %v1913 = vmul.f32 %v1911, 1.442695
    %v1914 = vpow.pop %v1913
    %v1915 = vmul.f32 %v1912, 1.442695
    %v1916 = vpow.pop %v1915
    %v1917 = vsel %vm309, %v1914, 0.0
    %1918 = vadd.xlane.f32.xlu0 %v1917
    %v1919 = vpop.xlane.xlu0 %1918
    %v1920 = vsel %vm309, %v1916, 0.0
    %1921 = vadd.xlane.f32.xlu0 %v1920
    %v1922 = vpop.xlane.xlu0 %1921
    %v1923 = vrcp.pop %v1919
    %v1924 = vrcp.pop %v1922
    %v1925 = vmul.f32 %v1914, %v1923
    %v1926 = vmul.f32 %v1916, %v1924
    %v1927 = vpack.c.bf16 %v1926, %v1925
    %v1928 = vpack.c.bf16 %v1849, %v1846
    %v1930 = vsel %vm309, %v1927, 0
    %1932 = vmatprep.subr.bf16.mxu0 0
    %1933 = vmatpush1.bf16.msra.mxu0 0
    %1934 = vmatprep.subr.bf16.mxu0 0
    %1935 = vmatpush1.bf16.msra.mxu0 0
    %1936 = vmatprep.subr.bf16.mxu0 0
    %1937 = vmatpush1.bf16.msra.mxu0 0
    %1938 = vmatprep.subr.bf16.mxu0 0
    %1939 = vmatpush1.bf16.msra.mxu0 0
    %1940 = vmatprep.subr.bf16.mxu0 0
    %1941 = vmatpush1.bf16.msra.mxu0 0
    %1942 = vmatprep.subr.bf16.mxu0 0
    %1943 = vmatpush1.bf16.msra.mxu0 0
    %1944 = vmatprep.subr.bf16.mxu0 0
    %1945 = vmatpush1.bf16.msra.mxu0 0
    %1946 = vmatprep.subr.bf16.mxu0 0
    %1947 = vmatpush1.bf16.msra.mxu0 %v1928
    %1948 = vmatprep.subr.bf16.mxu0 0
    %1949 = vmatpush2.bf16.msra.mxu0 0
    %1950 = vmatprep.subr.bf16.mxu0 0
    %1951 = vmatpush2.bf16.msra.mxu0 0
    %1952 = vmatprep.subr.bf16.mxu0 0
    %1953 = vmatpush2.bf16.msra.mxu0 0
    %1954 = vmatprep.subr.bf16.mxu0 0
    %1955 = vmatpush2.bf16.msra.mxu0 0
    %1956 = vmatprep.subr.bf16.mxu0 0
    %1957 = vmatpush2.bf16.msra.mxu0 0
    %1958 = vmatprep.subr.bf16.mxu0 0
    %1959 = vmatpush2.bf16.msra.mxu0 0
    %1960 = vmatprep.subr.bf16.mxu0 0
    %1961 = vmatpush2.bf16.msra.mxu0 0
    %1962 = vmatprep.subr.bf16.mxu0 0
    %1963 = vmatpush2.bf16.msra.mxu0 0
    %1964 = vmatprep.mubr.bf16.mxu0 0
    %1965 = vmatmul.mubr.bf16.gmra.mxu0 %v1930
    %v1966 = vpop.f32.mrf.mxu0
    %v1967 = vadd.f32 0.0, %v1966
    %v1968 = vpop.f32.mrf.mxu0
    %v1969 = vpop.f32.mrf.mxu0
    %v1970 = vadd.f32 0.0, %v1969
    %v1971 = vpop.f32.mrf.mxu0
    %1972 = vdwg.mxu0
    %s1973 = scalar_lea.vmem %s9, 32
    %v1974 = vld [vmem:[%s1973] sm:$0xff]
    %v1975 = vpack.c.bf16 %v1970, %v1967
    %v1976 = vpack.c.bf16 %v1974, %v1974
    %s1977 = scalar_lea.vmem %s3, 160
    %v1978 = vld [vmem:[%s1977] sm:$0xff]
    %v1979 = vld [vmem:[%s1977 + $0x8] sm:$0xff]
    %v1980 = vld [vmem:[%s1977 + $0x10] sm:$0xff]
    %v1981 = vld [vmem:[%s1977 + $0x18] sm:$0xff]
    %v1982 = vpack.c.bf16 %v1979, %v1978
    %v1983 = vpack.c.bf16 %v1981, %v1980
    %s1984 = scalar_lea.vmem %s4, 5
    %v1985 = vld [vmem:[%s1984] sm:$0x1]
    %v1987 = vlaneseq
    %v1988 = vshrl.u32 %v1987, 7
    %v1989 = vsub.s32 0, %v1988
    %v1990 = vrot.slane %v1985, %v1989
    %1992 = vmatprep.subr.bf16.mxu0 0
    %1993 = vmatpush1.bf16.msra.mxu0 0
    %1994 = vmatprep.subr.bf16.mxu0 0
    %1995 = vmatpush1.bf16.msra.mxu0 0
    %1996 = vmatprep.subr.bf16.mxu0 0
    %1997 = vmatpush1.bf16.msra.mxu0 0
    %1998 = vmatprep.subr.bf16.mxu0 0
    %1999 = vmatpush1.bf16.msra.mxu0 0
    %2000 = vmatprep.subr.bf16.mxu0 0
    %2001 = vmatpush1.bf16.msra.mxu0 0
    %2002 = vmatprep.subr.bf16.mxu0 0
    %2003 = vmatpush1.bf16.msra.mxu0 0
    %2004 = vmatprep.subr.bf16.mxu0 0
    %2005 = vmatpush1.bf16.msra.mxu0 %v1983
    %2006 = vmatprep.subr.bf16.mxu0 0
    %2007 = vmatpush1.bf16.msra.mxu0 %v1982
    %2008 = vmatprep.subr.bf16.mxu0 0
    %2009 = vmatpush2.bf16.msra.mxu0 0
    %2010 = vmatprep.subr.bf16.mxu0 0
    %2011 = vmatpush2.bf16.msra.mxu0 0
    %2012 = vmatprep.subr.bf16.mxu0 0
    %2013 = vmatpush2.bf16.msra.mxu0 0
    %2014 = vmatprep.subr.bf16.mxu0 0
    %2015 = vmatpush2.bf16.msra.mxu0 0
    %2016 = vmatprep.subr.bf16.mxu0 0
    %2017 = vmatpush2.bf16.msra.mxu0 0
    %2018 = vmatprep.subr.bf16.mxu0 0
    %2019 = vmatpush2.bf16.msra.mxu0 0
    %2020 = vmatprep.subr.bf16.mxu0 0
    %2021 = vmatpush2.bf16.msra.mxu0 0
    %2022 = vmatprep.subr.bf16.mxu0 0
    %2023 = vmatpush2.bf16.msra.mxu0 0
    %2024 = vmatprep.mubr.bf16.mxu0 0
    %2025 = vmatmul.mubr.bf16.gmra.mxu0 %v1697
    %v2026 = vpop.f32.mrf.mxu0
    %v2027 = vadd.f32 %v1990, %v2026
    %v2028 = vpop.f32.mrf.mxu0
    %v2029 = vpop.f32.mrf.mxu0
    %v2030 = vadd.f32 %v1990, %v2029
    %v2031 = vpop.f32.mrf.mxu0
    %2032 = vdwg.mxu0
    %s2033 = scalar_lea.vmem %s5, 160
    %v2034 = vld [vmem:[%s2033] sm:$0xff]
    %v2035 = vld [vmem:[%s2033 + $0x8] sm:$0xff]
    %v2036 = vld [vmem:[%s2033 + $0x10] sm:$0xff]
    %v2037 = vld [vmem:[%s2033 + $0x18] sm:$0xff]
    %v2038 = vpack.c.bf16 %v2035, %v2034
    %v2039 = vpack.c.bf16 %v2037, %v2036
    %s2040 = scalar_lea.vmem %s6, 5
    %v2041 = vld [vmem:[%s2040] sm:$0x1]
    %v2043 = vlaneseq
    %v2044 = vshrl.u32 %v2043, 7
    %v2045 = vsub.s32 0, %v2044
    %v2046 = vrot.slane %v2041, %v2045
    %2048 = vmatprep.subr.bf16.mxu0 0
    %2049 = vmatpush1.bf16.msra.mxu0 0
    %2050 = vmatprep.subr.bf16.mxu0 0
    %2051 = vmatpush1.bf16.msra.mxu0 0
    %2052 = vmatprep.subr.bf16.mxu0 0
    %2053 = vmatpush1.bf16.msra.mxu0 0
    %2054 = vmatprep.subr.bf16.mxu0 0
    %2055 = vmatpush1.bf16.msra.mxu0 0
    %2056 = vmatprep.subr.bf16.mxu0 0
    %2057 = vmatpush1.bf16.msra.mxu0 0
    %2058 = vmatprep.subr.bf16.mxu0 0
    %2059 = vmatpush1.bf16.msra.mxu0 0
    %2060 = vmatprep.subr.bf16.mxu0 0
    %2061 = vmatpush1.bf16.msra.mxu0 %v2039
    %2062 = vmatprep.subr.bf16.mxu0 0
    %2063 = vmatpush1.bf16.msra.mxu0 %v2038
    %2064 = vmatprep.subr.bf16.mxu0 0
    %2065 = vmatpush2.bf16.msra.mxu0 0
    %2066 = vmatprep.subr.bf16.mxu0 0
    %2067 = vmatpush2.bf16.msra.mxu0 0
    %2068 = vmatprep.subr.bf16.mxu0 0
    %2069 = vmatpush2.bf16.msra.mxu0 0
    %2070 = vmatprep.subr.bf16.mxu0 0
    %2071 = vmatpush2.bf16.msra.mxu0 0
    %2072 = vmatprep.subr.bf16.mxu0 0
    %2073 = vmatpush2.bf16.msra.mxu0 0
    %2074 = vmatprep.subr.bf16.mxu0 0
    %2075 = vmatpush2.bf16.msra.mxu0 0
    %2076 = vmatprep.subr.bf16.mxu0 0
    %2077 = vmatpush2.bf16.msra.mxu0 0
    %2078 = vmatprep.subr.bf16.mxu0 0
    %2079 = vmatpush2.bf16.msra.mxu0 0
    %2080 = vmatprep.mubr.bf16.mxu0 0
    %2081 = vmatmul.mubr.bf16.gmra.mxu0 %v1697
    %v2082 = vpop.f32.mrf.mxu0
    %v2083 = vadd.f32 %v2046, %v2082
    %v2084 = vpop.f32.mrf.mxu0
    %v2085 = vpop.f32.mrf.mxu0
    %v2086 = vadd.f32 %v2046, %v2085
    %v2087 = vpop.f32.mrf.mxu0
    %2088 = vdwg.mxu0
    %s2089 = scalar_lea.vmem %s7, 160
    %v2090 = vld [vmem:[%s2089] sm:$0xff]
    %v2091 = vld [vmem:[%s2089 + $0x8] sm:$0xff]
    %v2092 = vld [vmem:[%s2089 + $0x10] sm:$0xff]
    %v2093 = vld [vmem:[%s2089 + $0x18] sm:$0xff]
    %v2094 = vpack.c.bf16 %v2091, %v2090
    %v2095 = vpack.c.bf16 %v2093, %v2092
    %s2096 = scalar_lea.vmem %s8, 5
    %v2097 = vld [vmem:[%s2096] sm:$0x1]
    %v2099 = vlaneseq
    %v2100 = vshrl.u32 %v2099, 7
    %v2101 = vsub.s32 0, %v2100
    %v2102 = vrot.slane %v2097, %v2101
    %2104 = vmatprep.subr.bf16.mxu0 0
    %2105 = vmatpush1.bf16.msra.mxu0 0
    %2106 = vmatprep.subr.bf16.mxu0 0
    %2107 = vmatpush1.bf16.msra.mxu0 0
    %2108 = vmatprep.subr.bf16.mxu0 0
    %2109 = vmatpush1.bf16.msra.mxu0 0
    %2110 = vmatprep.subr.bf16.mxu0 0
    %2111 = vmatpush1.bf16.msra.mxu0 0
    %2112 = vmatprep.subr.bf16.mxu0 0
    %2113 = vmatpush1.bf16.msra.mxu0 0
    %2114 = vmatprep.subr.bf16.mxu0 0
    %2115 = vmatpush1.bf16.msra.mxu0 0
    %2116 = vmatprep.subr.bf16.mxu0 0
    %2117 = vmatpush1.bf16.msra.mxu0 %v2095
    %2118 = vmatprep.subr.bf16.mxu0 0
    %2119 = vmatpush1.bf16.msra.mxu0 %v2094
    %2120 = vmatprep.subr.bf16.mxu0 0
    %2121 = vmatpush2.bf16.msra.mxu0 0
    %2122 = vmatprep.subr.bf16.mxu0 0
    %2123 = vmatpush2.bf16.msra.mxu0 0
    %2124 = vmatprep.subr.bf16.mxu0 0
    %2125 = vmatpush2.bf16.msra.mxu0 0
    %2126 = vmatprep.subr.bf16.mxu0 0
    %2127 = vmatpush2.bf16.msra.mxu0 0
    %2128 = vmatprep.subr.bf16.mxu0 0
    %2129 = vmatpush2.bf16.msra.mxu0 0
    %2130 = vmatprep.subr.bf16.mxu0 0
    %2131 = vmatpush2.bf16.msra.mxu0 0
    %2132 = vmatprep.subr.bf16.mxu0 0
    %2133 = vmatpush2.bf16.msra.mxu0 0
    %2134 = vmatprep.subr.bf16.mxu0 0
    %2135 = vmatpush2.bf16.msra.mxu0 0
    %2136 = vmatprep.mubr.bf16.mxu0 0
    %2137 = vmatmul.mubr.bf16.gmra.mxu0 %v1697
    %v2138 = vpop.f32.mrf.mxu0
    %v2139 = vadd.f32 %v2102, %v2138
    %v2140 = vpop.f32.mrf.mxu0
    %v2141 = vpop.f32.mrf.mxu0
    %v2142 = vadd.f32 %v2102, %v2141
    %v2143 = vpop.f32.mrf.mxu0
    %2144 = vdwg.mxu0
    %v2145 = vpack.c.bf16 %v2030, %v2027
    %v2146 = vpack.c.bf16 %v2086, %v2083
    %v2148 = vsel %vm257, %v2145, 0
    %v2151 = vsel %vm257, %v2146, 0
    %2153 = vmatprep.subr.bf16.mxu0 0
    %2154 = vmatpush1.bf16.xpose.msra.mxu0 0
    %2155 = vmatprep.subr.bf16.mxu0 0
    %2156 = vmatpush1.bf16.xpose.msra.mxu0 0
    %2157 = vmatprep.subr.bf16.mxu0 0
    %2158 = vmatpush1.bf16.xpose.msra.mxu0 0
    %2159 = vmatprep.subr.bf16.mxu0 0
    %2160 = vmatpush1.bf16.xpose.msra.mxu0 0
    %2161 = vmatprep.subr.bf16.mxu0 0
    %2162 = vmatpush1.bf16.xpose.msra.mxu0 0
    %2163 = vmatprep.subr.bf16.mxu0 0
    %2164 = vmatpush1.bf16.xpose.msra.mxu0 0
    %2165 = vmatprep.subr.bf16.mxu0 0
    %2166 = vmatpush1.bf16.xpose.msra.mxu0 0
    %2167 = vmatprep.subr.bf16.mxu0 0
    %2168 = vmatpush1.bf16.xpose.msra.mxu0 %v2151
    %2169 = vmatprep.subr.bf16.mxu0 0
    %2170 = vmatpush2.bf16.xpose.msra.mxu0 0
    %2171 = vmatprep.subr.bf16.mxu0 0
    %2172 = vmatpush2.bf16.xpose.msra.mxu0 0
    %2173 = vmatprep.subr.bf16.mxu0 0
    %2174 = vmatpush2.bf16.xpose.msra.mxu0 0
    %2175 = vmatprep.subr.bf16.mxu0 0
    %2176 = vmatpush2.bf16.xpose.msra.mxu0 0
    %2177 = vmatprep.subr.bf16.mxu0 0
    %2178 = vmatpush2.bf16.xpose.msra.mxu0 0
    %2179 = vmatprep.subr.bf16.mxu0 0
    %2180 = vmatpush2.bf16.xpose.msra.mxu0 0
    %2181 = vmatprep.subr.bf16.mxu0 0
    %2182 = vmatpush2.bf16.xpose.msra.mxu0 0
    %2183 = vmatprep.subr.bf16.mxu0 0
    %2184 = vmatpush2.bf16.xpose.msra.mxu0 0
    %2185 = vmatprep.mubr.bf16.mxu0 0
    %2186 = vmatmul.mubr.bf16.gmra.mxu0 %v2148
    %v2187 = vpop.f32.mrf.mxu0
    %v2188 = vadd.f32 0.0, %v2187
    %v2189 = vpop.f32.mrf.mxu0
    %v2190 = vpop.f32.mrf.mxu0
    %v2191 = vadd.f32 0.0, %v2190
    %v2192 = vpop.f32.mrf.mxu0
    %2193 = vdwg.mxu0
    %v2194 = vmul.f32 %v2188, 0.35355338
    %v2195 = vmul.f32 %v2191, 0.35355338
    %v2196 = vadd.f32 %v2194, %v87
    %v2197 = vadd.f32 %v2195, %v88
    %v2198 = vsel %vm309, %v2196, -inf
    %2199 = vmax.xlane.f32.xlu0 %v2198
    %v2200 = vpop.xlane.xlu0 %2199
    %v2201 = vsel %vm309, %v2197, -inf
    %2202 = vmax.xlane.f32.xlu0 %v2201
    %v2203 = vpop.xlane.xlu0 %2202
    %v2204 = vsub.f32 %v2196, %v2200
    %v2205 = vsub.f32 %v2197, %v2203
    %v2206 = vmul.f32 %v2204, 1.442695
    %v2207 = vpow.pop %v2206
    %v2208 = vmul.f32 %v2205, 1.442695
    %v2209 = vpow.pop %v2208
    %v2210 = vsel %vm309, %v2207, 0.0
    %2211 = vadd.xlane.f32.xlu0 %v2210
    %v2212 = vpop.xlane.xlu0 %2211
    %v2213 = vsel %vm309, %v2209, 0.0
    %2214 = vadd.xlane.f32.xlu0 %v2213
    %v2215 = vpop.xlane.xlu0 %2214
    %v2216 = vrcp.pop %v2212
    %v2217 = vrcp.pop %v2215
    %v2218 = vmul.f32 %v2207, %v2216
    %v2219 = vmul.f32 %v2209, %v2217
    %v2220 = vpack.c.bf16 %v2219, %v2218
    %v2221 = vpack.c.bf16 %v2142, %v2139
    %v2223 = vsel %vm309, %v2220, 0
    %2225 = vmatprep.subr.bf16.mxu0 0
    %2226 = vmatpush1.bf16.msra.mxu0 0
    %2227 = vmatprep.subr.bf16.mxu0 0
    %2228 = vmatpush1.bf16.msra.mxu0 0
    %2229 = vmatprep.subr.bf16.mxu0 0
    %2230 = vmatpush1.bf16.msra.mxu0 0
    %2231 = vmatprep.subr.bf16.mxu0 0
    %2232 = vmatpush1.bf16.msra.mxu0 0
    %2233 = vmatprep.subr.bf16.mxu0 0
    %2234 = vmatpush1.bf16.msra.mxu0 0
    %2235 = vmatprep.subr.bf16.mxu0 0
    %2236 = vmatpush1.bf16.msra.mxu0 0
    %2237 = vmatprep.subr.bf16.mxu0 0
    %2238 = vmatpush1.bf16.msra.mxu0 0
    %2239 = vmatprep.subr.bf16.mxu0 0
    %2240 = vmatpush1.bf16.msra.mxu0 %v2221
    %2241 = vmatprep.subr.bf16.mxu0 0
    %2242 = vmatpush2.bf16.msra.mxu0 0
    %2243 = vmatprep.subr.bf16.mxu0 0
    %2244 = vmatpush2.bf16.msra.mxu0 0
    %2245 = vmatprep.subr.bf16.mxu0 0
    %2246 = vmatpush2.bf16.msra.mxu0 0
    %2247 = vmatprep.subr.bf16.mxu0 0
    %2248 = vmatpush2.bf16.msra.mxu0 0
    %2249 = vmatprep.subr.bf16.mxu0 0
    %2250 = vmatpush2.bf16.msra.mxu0 0
    %2251 = vmatprep.subr.bf16.mxu0 0
    %2252 = vmatpush2.bf16.msra.mxu0 0
    %2253 = vmatprep.subr.bf16.mxu0 0
    %2254 = vmatpush2.bf16.msra.mxu0 0
    %2255 = vmatprep.subr.bf16.mxu0 0
    %2256 = vmatpush2.bf16.msra.mxu0 0
    %2257 = vmatprep.mubr.bf16.mxu0 0
    %2258 = vmatmul.mubr.bf16.gmra.mxu0 %v2223
    %v2259 = vpop.f32.mrf.mxu0
    %v2260 = vadd.f32 0.0, %v2259
    %v2261 = vpop.f32.mrf.mxu0
    %v2262 = vpop.f32.mrf.mxu0
    %v2263 = vadd.f32 0.0, %v2262
    %v2264 = vpop.f32.mrf.mxu0
    %2265 = vdwg.mxu0
    %s2266 = scalar_lea.vmem %s9, 40
    %v2267 = vld [vmem:[%s2266] sm:$0xff]
    %v2268 = vpack.c.bf16 %v2263, %v2260
    %v2269 = vpack.c.bf16 %v2267, %v2267
    %v2271 = vsel %vm257, %v2268, 0
    %v2274 = vsel %vm677, %v2269, 0
    %2276 = vmatprep.subr.bf16.mxu0 0
    %2277 = vmatpush1.bf16.msra.mxu0 0
    %2278 = vmatprep.subr.bf16.mxu0 0
    %2279 = vmatpush1.bf16.msra.mxu0 0
    %2280 = vmatprep.subr.bf16.mxu0 0
    %2281 = vmatpush1.bf16.msra.mxu0 0
    %2282 = vmatprep.subr.bf16.mxu0 0
    %2283 = vmatpush1.bf16.msra.mxu0 0
    %2284 = vmatprep.subr.bf16.mxu0 0
    %2285 = vmatpush1.bf16.msra.mxu0 0
    %2286 = vmatprep.subr.bf16.mxu0 0
    %2287 = vmatpush1.bf16.msra.mxu0 0
    %2288 = vmatprep.subr.bf16.mxu0 0
    %2289 = vmatpush1.bf16.msra.mxu0 0
    %2290 = vmatprep.subr.bf16.mxu0 0
    %2291 = vmatpush1.bf16.msra.mxu0 %v2274
    %2292 = vmatprep.subr.bf16.mxu0 0
    %2293 = vmatpush2.bf16.msra.mxu0 0
    %2294 = vmatprep.subr.bf16.mxu0 0
    %2295 = vmatpush2.bf16.msra.mxu0 0
    %2296 = vmatprep.subr.bf16.mxu0 0
    %2297 = vmatpush2.bf16.msra.mxu0 0
    %2298 = vmatprep.subr.bf16.mxu0 0
    %2299 = vmatpush2.bf16.msra.mxu0 0
    %2300 = vmatprep.subr.bf16.mxu0 0
    %2301 = vmatpush2.bf16.msra.mxu0 0
    %2302 = vmatprep.subr.bf16.mxu0 0
    %2303 = vmatpush2.bf16.msra.mxu0 0
    %2304 = vmatprep.subr.bf16.mxu0 0
    %2305 = vmatpush2.bf16.msra.mxu0 0
    %2306 = vmatprep.subr.bf16.mxu0 0
    %2307 = vmatpush2.bf16.msra.mxu0 0
    %2308 = vmatprep.mubr.bf16.mxu0 0
    %2309 = vmatmul.mubr.bf16.gmra.mxu0 %v2271
    %v2310 = vpop.f32.mrf.mxu0
    %v2311 = vadd.f32 0.0, %v2310
    %v2312 = vpop.f32.mrf.mxu0
    %v2313 = vpop.f32.mrf.mxu0
    %v2314 = vadd.f32 0.0, %v2313
    %v2315 = vpop.f32.mrf.mxu0
    %2316 = vdwg.mxu0
    %v2318 = vsel %vm257, %v1975, 0
    %v2321 = vsel %vm677, %v1976, 0
    %2323 = vmatprep.subr.bf16.mxu0 0
    %2324 = vmatpush1.bf16.msra.mxu0 0
    %2325 = vmatprep.subr.bf16.mxu0 0
    %2326 = vmatpush1.bf16.msra.mxu0 0
    %2327 = vmatprep.subr.bf16.mxu0 0
    %2328 = vmatpush1.bf16.msra.mxu0 0
    %2329 = vmatprep.subr.bf16.mxu0 0
    %2330 = vmatpush1.bf16.msra.mxu0 0
    %2331 = vmatprep.subr.bf16.mxu0 0
    %2332 = vmatpush1.bf16.msra.mxu0 0
    %2333 = vmatprep.subr.bf16.mxu0 0
    %2334 = vmatpush1.bf16.msra.mxu0 0
    %2335 = vmatprep.subr.bf16.mxu0 0
    %2336 = vmatpush1.bf16.msra.mxu0 0
    %2337 = vmatprep.subr.bf16.mxu0 0
    %2338 = vmatpush1.bf16.msra.mxu0 %v2321
    %2339 = vmatprep.subr.bf16.mxu0 0
    %2340 = vmatpush2.bf16.msra.mxu0 0
    %2341 = vmatprep.subr.bf16.mxu0 0
    %2342 = vmatpush2.bf16.msra.mxu0 0
    %2343 = vmatprep.subr.bf16.mxu0 0
    %2344 = vmatpush2.bf16.msra.mxu0 0
    %2345 = vmatprep.subr.bf16.mxu0 0
    %2346 = vmatpush2.bf16.msra.mxu0 0
    %2347 = vmatprep.subr.bf16.mxu0 0
    %2348 = vmatpush2.bf16.msra.mxu0 0
    %2349 = vmatprep.subr.bf16.mxu0 0
    %2350 = vmatpush2.bf16.msra.mxu0 0
    %2351 = vmatprep.subr.bf16.mxu0 0
    %2352 = vmatpush2.bf16.msra.mxu0 0
    %2353 = vmatprep.subr.bf16.mxu0 0
    %2354 = vmatpush2.bf16.msra.mxu0 0
    %2355 = vmatprep.mubr.bf16.mxu0 0
    %2356 = vmatmul.mubr.bf16.gmra.mxu0 %v2318
    %v2357 = vpop.f32.mrf.mxu0
    %v2358 = vadd.f32 %v2311, %v2357
    %v2359 = vpop.f32.mrf.mxu0
    %v2360 = vpop.f32.mrf.mxu0
    %v2361 = vadd.f32 %v2314, %v2360
    %v2362 = vpop.f32.mrf.mxu0
    %2363 = vdwg.mxu0
    %s2364 = scalar_lea.vmem %s3, 192
    %v2365 = vld [vmem:[%s2364] sm:$0xff]
    %v2366 = vld [vmem:[%s2364 + $0x8] sm:$0xff]
    %v2367 = vld [vmem:[%s2364 + $0x10] sm:$0xff]
    %v2368 = vld [vmem:[%s2364 + $0x18] sm:$0xff]
    %v2369 = vpack.c.bf16 %v2366, %v2365
    %v2370 = vpack.c.bf16 %v2368, %v2367
    %s2371 = scalar_lea.vmem %s4, 6
    %v2372 = vld [vmem:[%s2371] sm:$0x1]
    %v2374 = vlaneseq
    %v2375 = vshrl.u32 %v2374, 7
    %v2376 = vsub.s32 0, %v2375
    %v2377 = vrot.slane %v2372, %v2376
    %2379 = vmatprep.subr.bf16.mxu0 0
    %2380 = vmatpush1.bf16.msra.mxu0 0
    %2381 = vmatprep.subr.bf16.mxu0 0
    %2382 = vmatpush1.bf16.msra.mxu0 0
    %2383 = vmatprep.subr.bf16.mxu0 0
    %2384 = vmatpush1.bf16.msra.mxu0 0
    %2385 = vmatprep.subr.bf16.mxu0 0
    %2386 = vmatpush1.bf16.msra.mxu0 0
    %2387 = vmatprep.subr.bf16.mxu0 0
    %2388 = vmatpush1.bf16.msra.mxu0 0
    %2389 = vmatprep.subr.bf16.mxu0 0
    %2390 = vmatpush1.bf16.msra.mxu0 0
    %2391 = vmatprep.subr.bf16.mxu0 0
    %2392 = vmatpush1.bf16.msra.mxu0 %v2370
    %2393 = vmatprep.subr.bf16.mxu0 0
    %2394 = vmatpush1.bf16.msra.mxu0 %v2369
    %2395 = vmatprep.subr.bf16.mxu0 0
    %2396 = vmatpush2.bf16.msra.mxu0 0
    %2397 = vmatprep.subr.bf16.mxu0 0
    %2398 = vmatpush2.bf16.msra.mxu0 0
    %2399 = vmatprep.subr.bf16.mxu0 0
    %2400 = vmatpush2.bf16.msra.mxu0 0
    %2401 = vmatprep.subr.bf16.mxu0 0
    %2402 = vmatpush2.bf16.msra.mxu0 0
    %2403 = vmatprep.subr.bf16.mxu0 0
    %2404 = vmatpush2.bf16.msra.mxu0 0
    %2405 = vmatprep.subr.bf16.mxu0 0
    %2406 = vmatpush2.bf16.msra.mxu0 0
    %2407 = vmatprep.subr.bf16.mxu0 0
    %2408 = vmatpush2.bf16.msra.mxu0 0
    %2409 = vmatprep.subr.bf16.mxu0 0
    %2410 = vmatpush2.bf16.msra.mxu0 0
    %2411 = vmatprep.mubr.bf16.mxu0 0
    %2412 = vmatmul.mubr.bf16.gmra.mxu0 %v1697
    %v2413 = vpop.f32.mrf.mxu0
    %v2414 = vadd.f32 %v2377, %v2413
    %v2415 = vpop.f32.mrf.mxu0
    %v2416 = vpop.f32.mrf.mxu0
    %v2417 = vadd.f32 %v2377, %v2416
    %v2418 = vpop.f32.mrf.mxu0
    %2419 = vdwg.mxu0
    %s2420 = scalar_lea.vmem %s5, 192
    %v2421 = vld [vmem:[%s2420] sm:$0xff]
    %v2422 = vld [vmem:[%s2420 + $0x8] sm:$0xff]
    %v2423 = vld [vmem:[%s2420 + $0x10] sm:$0xff]
    %v2424 = vld [vmem:[%s2420 + $0x18] sm:$0xff]
    %v2425 = vpack.c.bf16 %v2422, %v2421
    %v2426 = vpack.c.bf16 %v2424, %v2423
    %s2427 = scalar_lea.vmem %s6, 6
    %v2428 = vld [vmem:[%s2427] sm:$0x1]
    %v2430 = vlaneseq
    %v2431 = vshrl.u32 %v2430, 7
    %v2432 = vsub.s32 0, %v2431
    %v2433 = vrot.slane %v2428, %v2432
    %2435 = vmatprep.subr.bf16.mxu0 0
    %2436 = vmatpush1.bf16.msra.mxu0 0
    %2437 = vmatprep.subr.bf16.mxu0 0
    %2438 = vmatpush1.bf16.msra.mxu0 0
    %2439 = vmatprep.subr.bf16.mxu0 0
    %2440 = vmatpush1.bf16.msra.mxu0 0
    %2441 = vmatprep.subr.bf16.mxu0 0
    %2442 = vmatpush1.bf16.msra.mxu0 0
    %2443 = vmatprep.subr.bf16.mxu0 0
    %2444 = vmatpush1.bf16.msra.mxu0 0
    %2445 = vmatprep.subr.bf16.mxu0 0
    %2446 = vmatpush1.bf16.msra.mxu0 0
    %2447 = vmatprep.subr.bf16.mxu0 0
    %2448 = vmatpush1.bf16.msra.mxu0 %v2426
    %2449 = vmatprep.subr.bf16.mxu0 0
    %2450 = vmatpush1.bf16.msra.mxu0 %v2425
    %2451 = vmatprep.subr.bf16.mxu0 0
    %2452 = vmatpush2.bf16.msra.mxu0 0
    %2453 = vmatprep.subr.bf16.mxu0 0
    %2454 = vmatpush2.bf16.msra.mxu0 0
    %2455 = vmatprep.subr.bf16.mxu0 0
    %2456 = vmatpush2.bf16.msra.mxu0 0
    %2457 = vmatprep.subr.bf16.mxu0 0
    %2458 = vmatpush2.bf16.msra.mxu0 0
    %2459 = vmatprep.subr.bf16.mxu0 0
    %2460 = vmatpush2.bf16.msra.mxu0 0
    %2461 = vmatprep.subr.bf16.mxu0 0
    %2462 = vmatpush2.bf16.msra.mxu0 0
    %2463 = vmatprep.subr.bf16.mxu0 0
    %2464 = vmatpush2.bf16.msra.mxu0 0
    %2465 = vmatprep.subr.bf16.mxu0 0
    %2466 = vmatpush2.bf16.msra.mxu0 0
    %2467 = vmatprep.mubr.bf16.mxu0 0
    %2468 = vmatmul.mubr.bf16.gmra.mxu0 %v1697
    %v2469 = vpop.f32.mrf.mxu0
    %v2470 = vadd.f32 %v2433, %v2469
    %v2471 = vpop.f32.mrf.mxu0
    %v2472 = vpop.f32.mrf.mxu0
    %v2473 = vadd.f32 %v2433, %v2472
    %v2474 = vpop.f32.mrf.mxu0
    %2475 = vdwg.mxu0
    %s2476 = scalar_lea.vmem %s7, 192
    %v2477 = vld [vmem:[%s2476] sm:$0xff]
    %v2478 = vld [vmem:[%s2476 + $0x8] sm:$0xff]
    %v2479 = vld [vmem:[%s2476 + $0x10] sm:$0xff]
    %v2480 = vld [vmem:[%s2476 + $0x18] sm:$0xff]
    %v2481 = vpack.c.bf16 %v2478, %v2477
    %v2482 = vpack.c.bf16 %v2480, %v2479
    %s2483 = scalar_lea.vmem %s8, 6
    %v2484 = vld [vmem:[%s2483] sm:$0x1]
    %v2486 = vlaneseq
    %v2487 = vshrl.u32 %v2486, 7
    %v2488 = vsub.s32 0, %v2487
    %v2489 = vrot.slane %v2484, %v2488
    %2491 = vmatprep.subr.bf16.mxu0 0
    %2492 = vmatpush1.bf16.msra.mxu0 0
    %2493 = vmatprep.subr.bf16.mxu0 0
    %2494 = vmatpush1.bf16.msra.mxu0 0
    %2495 = vmatprep.subr.bf16.mxu0 0
    %2496 = vmatpush1.bf16.msra.mxu0 0
    %2497 = vmatprep.subr.bf16.mxu0 0
    %2498 = vmatpush1.bf16.msra.mxu0 0
    %2499 = vmatprep.subr.bf16.mxu0 0
    %2500 = vmatpush1.bf16.msra.mxu0 0
    %2501 = vmatprep.subr.bf16.mxu0 0
    %2502 = vmatpush1.bf16.msra.mxu0 0
    %2503 = vmatprep.subr.bf16.mxu0 0
    %2504 = vmatpush1.bf16.msra.mxu0 %v2482
    %2505 = vmatprep.subr.bf16.mxu0 0
    %2506 = vmatpush1.bf16.msra.mxu0 %v2481
    %2507 = vmatprep.subr.bf16.mxu0 0
    %2508 = vmatpush2.bf16.msra.mxu0 0
    %2509 = vmatprep.subr.bf16.mxu0 0
    %2510 = vmatpush2.bf16.msra.mxu0 0
    %2511 = vmatprep.subr.bf16.mxu0 0
    %2512 = vmatpush2.bf16.msra.mxu0 0
    %2513 = vmatprep.subr.bf16.mxu0 0
    %2514 = vmatpush2.bf16.msra.mxu0 0
    %2515 = vmatprep.subr.bf16.mxu0 0
    %2516 = vmatpush2.bf16.msra.mxu0 0
    %2517 = vmatprep.subr.bf16.mxu0 0
    %2518 = vmatpush2.bf16.msra.mxu0 0
    %2519 = vmatprep.subr.bf16.mxu0 0
    %2520 = vmatpush2.bf16.msra.mxu0 0
    %2521 = vmatprep.subr.bf16.mxu0 0
    %2522 = vmatpush2.bf16.msra.mxu0 0
    %2523 = vmatprep.mubr.bf16.mxu0 0
    %2524 = vmatmul.mubr.bf16.gmra.mxu0 %v1697
    %v2525 = vpop.f32.mrf.mxu0
    %v2526 = vadd.f32 %v2489, %v2525
    %v2527 = vpop.f32.mrf.mxu0
    %v2528 = vpop.f32.mrf.mxu0
    %v2529 = vadd.f32 %v2489, %v2528
    %v2530 = vpop.f32.mrf.mxu0
    %2531 = vdwg.mxu0
    %v2532 = vpack.c.bf16 %v2417, %v2414
    %v2533 = vpack.c.bf16 %v2473, %v2470
    %v2535 = vsel %vm257, %v2532, 0
    %v2538 = vsel %vm257, %v2533, 0
    %2540 = vmatprep.subr.bf16.mxu0 0
    %2541 = vmatpush1.bf16.xpose.msra.mxu0 0
    %2542 = vmatprep.subr.bf16.mxu0 0
    %2543 = vmatpush1.bf16.xpose.msra.mxu0 0
    %2544 = vmatprep.subr.bf16.mxu0 0
    %2545 = vmatpush1.bf16.xpose.msra.mxu0 0
    %2546 = vmatprep.subr.bf16.mxu0 0
    %2547 = vmatpush1.bf16.xpose.msra.mxu0 0
    %2548 = vmatprep.subr.bf16.mxu0 0
    %2549 = vmatpush1.bf16.xpose.msra.mxu0 0
    %2550 = vmatprep.subr.bf16.mxu0 0
    %2551 = vmatpush1.bf16.xpose.msra.mxu0 0
    %2552 = vmatprep.subr.bf16.mxu0 0
    %2553 = vmatpush1.bf16.xpose.msra.mxu0 0
    %2554 = vmatprep.subr.bf16.mxu0 0
    %2555 = vmatpush1.bf16.xpose.msra.mxu0 %v2538
    %2556 = vmatprep.subr.bf16.mxu0 0
    %2557 = vmatpush2.bf16.xpose.msra.mxu0 0
    %2558 = vmatprep.subr.bf16.mxu0 0
    %2559 = vmatpush2.bf16.xpose.msra.mxu0 0
    %2560 = vmatprep.subr.bf16.mxu0 0
    %2561 = vmatpush2.bf16.xpose.msra.mxu0 0
    %2562 = vmatprep.subr.bf16.mxu0 0
    %2563 = vmatpush2.bf16.xpose.msra.mxu0 0
    %2564 = vmatprep.subr.bf16.mxu0 0
    %2565 = vmatpush2.bf16.xpose.msra.mxu0 0
    %2566 = vmatprep.subr.bf16.mxu0 0
    %2567 = vmatpush2.bf16.xpose.msra.mxu0 0
    %2568 = vmatprep.subr.bf16.mxu0 0
    %2569 = vmatpush2.bf16.xpose.msra.mxu0 0
    %2570 = vmatprep.subr.bf16.mxu0 0
    %2571 = vmatpush2.bf16.xpose.msra.mxu0 0
    %2572 = vmatprep.mubr.bf16.mxu0 0
    %2573 = vmatmul.mubr.bf16.gmra.mxu0 %v2535
    %v2574 = vpop.f32.mrf.mxu0
    %v2575 = vadd.f32 0.0, %v2574
    %v2576 = vpop.f32.mrf.mxu0
    %v2577 = vpop.f32.mrf.mxu0
    %v2578 = vadd.f32 0.0, %v2577
    %v2579 = vpop.f32.mrf.mxu0
    %2580 = vdwg.mxu0
    %v2581 = vmul.f32 %v2575, 0.35355338
    %v2582 = vmul.f32 %v2578, 0.35355338
    %v2583 = vadd.f32 %v2581, %v87
    %v2584 = vadd.f32 %v2582, %v88
    %v2585 = vsel %vm309, %v2583, -inf
    %2586 = vmax.xlane.f32.xlu0 %v2585
    %v2587 = vpop.xlane.xlu0 %2586
    %v2588 = vsel %vm309, %v2584, -inf
    %2589 = vmax.xlane.f32.xlu0 %v2588
    %v2590 = vpop.xlane.xlu0 %2589
    %v2591 = vsub.f32 %v2583, %v2587
    %v2592 = vsub.f32 %v2584, %v2590
    %v2593 = vmul.f32 %v2591, 1.442695
    %v2594 = vpow.pop %v2593
    %v2595 = vmul.f32 %v2592, 1.442695
    %v2596 = vpow.pop %v2595
    %v2597 = vsel %vm309, %v2594, 0.0
    %2598 = vadd.xlane.f32.xlu0 %v2597
    %v2599 = vpop.xlane.xlu0 %2598
    %v2600 = vsel %vm309, %v2596, 0.0
    %2601 = vadd.xlane.f32.xlu0 %v2600
    %v2602 = vpop.xlane.xlu0 %2601
    %v2603 = vrcp.pop %v2599
    %v2604 = vrcp.pop %v2602
    %v2605 = vmul.f32 %v2594, %v2603
    %v2606 = vmul.f32 %v2596, %v2604
    %v2607 = vpack.c.bf16 %v2606, %v2605
    %v2608 = vpack.c.bf16 %v2529, %v2526
    %v2610 = vsel %vm309, %v2607, 0
    %2612 = vmatprep.subr.bf16.mxu0 0
    %2613 = vmatpush1.bf16.msra.mxu0 0
    %2614 = vmatprep.subr.bf16.mxu0 0
    %2615 = vmatpush1.bf16.msra.mxu0 0
    %2616 = vmatprep.subr.bf16.mxu0 0
    %2617 = vmatpush1.bf16.msra.mxu0 0
    %2618 = vmatprep.subr.bf16.mxu0 0
    %2619 = vmatpush1.bf16.msra.mxu0 0
    %2620 = vmatprep.subr.bf16.mxu0 0
    %2621 = vmatpush1.bf16.msra.mxu0 0
    %2622 = vmatprep.subr.bf16.mxu0 0
    %2623 = vmatpush1.bf16.msra.mxu0 0
    %2624 = vmatprep.subr.bf16.mxu0 0
    %2625 = vmatpush1.bf16.msra.mxu0 0
    %2626 = vmatprep.subr.bf16.mxu0 0
    %2627 = vmatpush1.bf16.msra.mxu0 %v2608
    %2628 = vmatprep.subr.bf16.mxu0 0
    %2629 = vmatpush2.bf16.msra.mxu0 0
    %2630 = vmatprep.subr.bf16.mxu0 0
    %2631 = vmatpush2.bf16.msra.mxu0 0
    %2632 = vmatprep.subr.bf16.mxu0 0
    %2633 = vmatpush2.bf16.msra.mxu0 0
    %2634 = vmatprep.subr.bf16.mxu0 0
    %2635 = vmatpush2.bf16.msra.mxu0 0
    %2636 = vmatprep.subr.bf16.mxu0 0
    %2637 = vmatpush2.bf16.msra.mxu0 0
    %2638 = vmatprep.subr.bf16.mxu0 0
    %2639 = vmatpush2.bf16.msra.mxu0 0
    %2640 = vmatprep.subr.bf16.mxu0 0
    %2641 = vmatpush2.bf16.msra.mxu0 0
    %2642 = vmatprep.subr.bf16.mxu0 0
    %2643 = vmatpush2.bf16.msra.mxu0 0
    %2644 = vmatprep.mubr.bf16.mxu0 0
    %2645 = vmatmul.mubr.bf16.gmra.mxu0 %v2610
    %v2646 = vpop.f32.mrf.mxu0
    %v2647 = vadd.f32 0.0, %v2646
    %v2648 = vpop.f32.mrf.mxu0
    %v2649 = vpop.f32.mrf.mxu0
    %v2650 = vadd.f32 0.0, %v2649
    %v2651 = vpop.f32.mrf.mxu0
    %2652 = vdwg.mxu0
    %s2653 = scalar_lea.vmem %s9, 48
    %v2654 = vld [vmem:[%s2653] sm:$0xff]
    %v2655 = vpack.c.bf16 %v2650, %v2647
    %v2656 = vpack.c.bf16 %v2654, %v2654
    %v2658 = vsel %vm257, %v2655, 0
    %v2661 = vsel %vm677, %v2656, 0
    %2663 = vmatprep.subr.bf16.mxu0 0
    %2664 = vmatpush1.bf16.msra.mxu0 0
    %2665 = vmatprep.subr.bf16.mxu0 0
    %2666 = vmatpush1.bf16.msra.mxu0 0
    %2667 = vmatprep.subr.bf16.mxu0 0
    %2668 = vmatpush1.bf16.msra.mxu0 0
    %2669 = vmatprep.subr.bf16.mxu0 0
    %2670 = vmatpush1.bf16.msra.mxu0 0
    %2671 = vmatprep.subr.bf16.mxu0 0
    %2672 = vmatpush1.bf16.msra.mxu0 0
    %2673 = vmatprep.subr.bf16.mxu0 0
    %2674 = vmatpush1.bf16.msra.mxu0 0
    %2675 = vmatprep.subr.bf16.mxu0 0
    %2676 = vmatpush1.bf16.msra.mxu0 0
    %2677 = vmatprep.subr.bf16.mxu0 0
    %2678 = vmatpush1.bf16.msra.mxu0 %v2661
    %2679 = vmatprep.subr.bf16.mxu0 0
    %2680 = vmatpush2.bf16.msra.mxu0 0
    %2681 = vmatprep.subr.bf16.mxu0 0
    %2682 = vmatpush2.bf16.msra.mxu0 0
    %2683 = vmatprep.subr.bf16.mxu0 0
    %2684 = vmatpush2.bf16.msra.mxu0 0
    %2685 = vmatprep.subr.bf16.mxu0 0
    %2686 = vmatpush2.bf16.msra.mxu0 0
    %2687 = vmatprep.subr.bf16.mxu0 0
    %2688 = vmatpush2.bf16.msra.mxu0 0
    %2689 = vmatprep.subr.bf16.mxu0 0
    %2690 = vmatpush2.bf16.msra.mxu0 0
    %2691 = vmatprep.subr.bf16.mxu0 0
    %2692 = vmatpush2.bf16.msra.mxu0 0
    %2693 = vmatprep.subr.bf16.mxu0 0
    %2694 = vmatpush2.bf16.msra.mxu0 0
    %2695 = vmatprep.mubr.bf16.mxu0 0
    %2696 = vmatmul.mubr.bf16.gmra.mxu0 %v2658
    %v2697 = vpop.f32.mrf.mxu0
    %v2698 = vadd.f32 0.0, %v2697
    %v2699 = vpop.f32.mrf.mxu0
    %v2700 = vpop.f32.mrf.mxu0
    %v2701 = vadd.f32 0.0, %v2700
    %v2702 = vpop.f32.mrf.mxu0
    %2703 = vdwg.mxu0
    %v2704 = vadd.f32 %v2358, %v2698
    %v2705 = vadd.f32 %v2361, %v2701
    %s2706 = scalar_lea.vmem %s3, 224
    %v2707 = vld [vmem:[%s2706] sm:$0xff]
    %v2708 = vld [vmem:[%s2706 + $0x8] sm:$0xff]
    %v2709 = vld [vmem:[%s2706 + $0x10] sm:$0xff]
    %v2710 = vld [vmem:[%s2706 + $0x18] sm:$0xff]
    %v2711 = vpack.c.bf16 %v2708, %v2707
    %v2712 = vpack.c.bf16 %v2710, %v2709
    %s2713 = scalar_lea.vmem %s4, 7
    %v2714 = vld [vmem:[%s2713] sm:$0x1]
    %v2716 = vlaneseq
    %v2717 = vshrl.u32 %v2716, 7
    %v2718 = vsub.s32 0, %v2717
    %v2719 = vrot.slane %v2714, %v2718
    %2721 = vmatprep.subr.bf16.mxu0 0
    %2722 = vmatpush1.bf16.msra.mxu0 0
    %2723 = vmatprep.subr.bf16.mxu0 0
    %2724 = vmatpush1.bf16.msra.mxu0 0
    %2725 = vmatprep.subr.bf16.mxu0 0
    %2726 = vmatpush1.bf16.msra.mxu0 0
    %2727 = vmatprep.subr.bf16.mxu0 0
    %2728 = vmatpush1.bf16.msra.mxu0 0
    %2729 = vmatprep.subr.bf16.mxu0 0
    %2730 = vmatpush1.bf16.msra.mxu0 0
    %2731 = vmatprep.subr.bf16.mxu0 0
    %2732 = vmatpush1.bf16.msra.mxu0 0
    %2733 = vmatprep.subr.bf16.mxu0 0
    %2734 = vmatpush1.bf16.msra.mxu0 %v2712
    %2735 = vmatprep.subr.bf16.mxu0 0
    %2736 = vmatpush1.bf16.msra.mxu0 %v2711
    %2737 = vmatprep.subr.bf16.mxu0 0
    %2738 = vmatpush2.bf16.msra.mxu0 0
    %2739 = vmatprep.subr.bf16.mxu0 0
    %2740 = vmatpush2.bf16.msra.mxu0 0
    %2741 = vmatprep.subr.bf16.mxu0 0
    %2742 = vmatpush2.bf16.msra.mxu0 0
    %2743 = vmatprep.subr.bf16.mxu0 0
    %2744 = vmatpush2.bf16.msra.mxu0 0
    %2745 = vmatprep.subr.bf16.mxu0 0
    %2746 = vmatpush2.bf16.msra.mxu0 0
    %2747 = vmatprep.subr.bf16.mxu0 0
    %2748 = vmatpush2.bf16.msra.mxu0 0
    %2749 = vmatprep.subr.bf16.mxu0 0
    %2750 = vmatpush2.bf16.msra.mxu0 0
    %2751 = vmatprep.subr.bf16.mxu0 0
    %2752 = vmatpush2.bf16.msra.mxu0 0
    %2753 = vmatprep.mubr.bf16.mxu0 0
    %2754 = vmatmul.mubr.bf16.gmra.mxu0 %v1697
    %v2755 = vpop.f32.mrf.mxu0
    %v2756 = vadd.f32 %v2719, %v2755
    %v2757 = vpop.f32.mrf.mxu0
    %v2758 = vpop.f32.mrf.mxu0
    %v2759 = vadd.f32 %v2719, %v2758
    %v2760 = vpop.f32.mrf.mxu0
    %2761 = vdwg.mxu0
    %s2762 = scalar_lea.vmem %s5, 224
    %v2763 = vld [vmem:[%s2762] sm:$0xff]
    %v2764 = vld [vmem:[%s2762 + $0x8] sm:$0xff]
    %v2765 = vld [vmem:[%s2762 + $0x10] sm:$0xff]
    %v2766 = vld [vmem:[%s2762 + $0x18] sm:$0xff]
    %v2767 = vpack.c.bf16 %v2764, %v2763
    %v2768 = vpack.c.bf16 %v2766, %v2765
    %s2769 = scalar_lea.vmem %s6, 7
    %v2770 = vld [vmem:[%s2769] sm:$0x1]
    %v2772 = vlaneseq
    %v2773 = vshrl.u32 %v2772, 7
    %v2774 = vsub.s32 0, %v2773
    %v2775 = vrot.slane %v2770, %v2774
    %2777 = vmatprep.subr.bf16.mxu0 0
    %2778 = vmatpush1.bf16.msra.mxu0 0
    %2779 = vmatprep.subr.bf16.mxu0 0
    %2780 = vmatpush1.bf16.msra.mxu0 0
    %2781 = vmatprep.subr.bf16.mxu0 0
    %2782 = vmatpush1.bf16.msra.mxu0 0
    %2783 = vmatprep.subr.bf16.mxu0 0
    %2784 = vmatpush1.bf16.msra.mxu0 0
    %2785 = vmatprep.subr.bf16.mxu0 0
    %2786 = vmatpush1.bf16.msra.mxu0 0
    %2787 = vmatprep.subr.bf16.mxu0 0
    %2788 = vmatpush1.bf16.msra.mxu0 0
    %2789 = vmatprep.subr.bf16.mxu0 0
    %2790 = vmatpush1.bf16.msra.mxu0 %v2768
    %2791 = vmatprep.subr.bf16.mxu0 0
    %2792 = vmatpush1.bf16.msra.mxu0 %v2767
    %2793 = vmatprep.subr.bf16.mxu0 0
    %2794 = vmatpush2.bf16.msra.mxu0 0
    %2795 = vmatprep.subr.bf16.mxu0 0
    %2796 = vmatpush2.bf16.msra.mxu0 0
    %2797 = vmatprep.subr.bf16.mxu0 0
    %2798 = vmatpush2.bf16.msra.mxu0 0
    %2799 = vmatprep.subr.bf16.mxu0 0
    %2800 = vmatpush2.bf16.msra.mxu0 0
    %2801 = vmatprep.subr.bf16.mxu0 0
    %2802 = vmatpush2.bf16.msra.mxu0 0
    %2803 = vmatprep.subr.bf16.mxu0 0
    %2804 = vmatpush2.bf16.msra.mxu0 0
    %2805 = vmatprep.subr.bf16.mxu0 0
    %2806 = vmatpush2.bf16.msra.mxu0 0
    %2807 = vmatprep.subr.bf16.mxu0 0
    %2808 = vmatpush2.bf16.msra.mxu0 0
    %2809 = vmatprep.mubr.bf16.mxu0 0
    %2810 = vmatmul.mubr.bf16.gmra.mxu0 %v1697
    %v2811 = vpop.f32.mrf.mxu0
    %v2812 = vadd.f32 %v2775, %v2811
    %v2813 = vpop.f32.mrf.mxu0
    %v2814 = vpop.f32.mrf.mxu0
    %v2815 = vadd.f32 %v2775, %v2814
    %v2816 = vpop.f32.mrf.mxu0
    %2817 = vdwg.mxu0
    %s2818 = scalar_lea.vmem %s7, 224
    %v2819 = vld [vmem:[%s2818] sm:$0xff]
    %v2820 = vld [vmem:[%s2818 + $0x8] sm:$0xff]
    %v2821 = vld [vmem:[%s2818 + $0x10] sm:$0xff]
    %v2822 = vld [vmem:[%s2818 + $0x18] sm:$0xff]
    %v2823 = vpack.c.bf16 %v2820, %v2819
    %v2824 = vpack.c.bf16 %v2822, %v2821
    %s2825 = scalar_lea.vmem %s8, 7
    %v2826 = vld [vmem:[%s2825] sm:$0x1]
    %v2828 = vlaneseq
    %v2829 = vshrl.u32 %v2828, 7
    %v2830 = vsub.s32 0, %v2829
    %v2831 = vrot.slane %v2826, %v2830
    %2833 = vmatprep.subr.bf16.mxu0 0
    %2834 = vmatpush1.bf16.msra.mxu0 0
    %2835 = vmatprep.subr.bf16.mxu0 0
    %2836 = vmatpush1.bf16.msra.mxu0 0
    %2837 = vmatprep.subr.bf16.mxu0 0
    %2838 = vmatpush1.bf16.msra.mxu0 0
    %2839 = vmatprep.subr.bf16.mxu0 0
    %2840 = vmatpush1.bf16.msra.mxu0 0
    %2841 = vmatprep.subr.bf16.mxu0 0
    %2842 = vmatpush1.bf16.msra.mxu0 0
    %2843 = vmatprep.subr.bf16.mxu0 0
    %2844 = vmatpush1.bf16.msra.mxu0 0
    %2845 = vmatprep.subr.bf16.mxu0 0
    %2846 = vmatpush1.bf16.msra.mxu0 %v2824
    %2847 = vmatprep.subr.bf16.mxu0 0
    %2848 = vmatpush1.bf16.msra.mxu0 %v2823
    %2849 = vmatprep.subr.bf16.mxu0 0
    %2850 = vmatpush2.bf16.msra.mxu0 0
    %2851 = vmatprep.subr.bf16.mxu0 0
    %2852 = vmatpush2.bf16.msra.mxu0 0
    %2853 = vmatprep.subr.bf16.mxu0 0
    %2854 = vmatpush2.bf16.msra.mxu0 0
    %2855 = vmatprep.subr.bf16.mxu0 0
    %2856 = vmatpush2.bf16.msra.mxu0 0
    %2857 = vmatprep.subr.bf16.mxu0 0
    %2858 = vmatpush2.bf16.msra.mxu0 0
    %2859 = vmatprep.subr.bf16.mxu0 0
    %2860 = vmatpush2.bf16.msra.mxu0 0
    %2861 = vmatprep.subr.bf16.mxu0 0
    %2862 = vmatpush2.bf16.msra.mxu0 0
    %2863 = vmatprep.subr.bf16.mxu0 0
    %2864 = vmatpush2.bf16.msra.mxu0 0
    %2865 = vmatprep.mubr.bf16.mxu0 0
    %2866 = vmatmul.mubr.bf16.gmra.mxu0 %v1697
    %v2867 = vpop.f32.mrf.mxu0
    %v2868 = vadd.f32 %v2831, %v2867
    %v2869 = vpop.f32.mrf.mxu0
    %v2870 = vpop.f32.mrf.mxu0
    %v2871 = vadd.f32 %v2831, %v2870
    %v2872 = vpop.f32.mrf.mxu0
    %2873 = vdwg.mxu0
    %v2874 = vpack.c.bf16 %v2759, %v2756
    %v2875 = vpack.c.bf16 %v2815, %v2812
    %v2877 = vsel %vm257, %v2874, 0
    %v2880 = vsel %vm257, %v2875, 0
    %2882 = vmatprep.subr.bf16.mxu0 0
    %2883 = vmatpush1.bf16.xpose.msra.mxu0 0
    %2884 = vmatprep.subr.bf16.mxu0 0
    %2885 = vmatpush1.bf16.xpose.msra.mxu0 0
    %2886 = vmatprep.subr.bf16.mxu0 0
    %2887 = vmatpush1.bf16.xpose.msra.mxu0 0
    %2888 = vmatprep.subr.bf16.mxu0 0
    %2889 = vmatpush1.bf16.xpose.msra.mxu0 0
    %2890 = vmatprep.subr.bf16.mxu0 0
    %2891 = vmatpush1.bf16.xpose.msra.mxu0 0
    %2892 = vmatprep.subr.bf16.mxu0 0
    %2893 = vmatpush1.bf16.xpose.msra.mxu0 0
    %2894 = vmatprep.subr.bf16.mxu0 0
    %2895 = vmatpush1.bf16.xpose.msra.mxu0 0
    %2896 = vmatprep.subr.bf16.mxu0 0
    %2897 = vmatpush1.bf16.xpose.msra.mxu0 %v2880
    %2898 = vmatprep.subr.bf16.mxu0 0
    %2899 = vmatpush2.bf16.xpose.msra.mxu0 0
    %2900 = vmatprep.subr.bf16.mxu0 0
    %2901 = vmatpush2.bf16.xpose.msra.mxu0 0
    %2902 = vmatprep.subr.bf16.mxu0 0
    %2903 = vmatpush2.bf16.xpose.msra.mxu0 0
    %2904 = vmatprep.subr.bf16.mxu0 0
    %2905 = vmatpush2.bf16.xpose.msra.mxu0 0
    %2906 = vmatprep.subr.bf16.mxu0 0
    %2907 = vmatpush2.bf16.xpose.msra.mxu0 0
    %2908 = vmatprep.subr.bf16.mxu0 0
    %2909 = vmatpush2.bf16.xpose.msra.mxu0 0
    %2910 = vmatprep.subr.bf16.mxu0 0
    %2911 = vmatpush2.bf16.xpose.msra.mxu0 0
    %2912 = vmatprep.subr.bf16.mxu0 0
    %2913 = vmatpush2.bf16.xpose.msra.mxu0 0
    %2914 = vmatprep.mubr.bf16.mxu0 0
    %2915 = vmatmul.mubr.bf16.gmra.mxu0 %v2877
    %v2916 = vpop.f32.mrf.mxu0
    %v2917 = vadd.f32 0.0, %v2916
    %v2918 = vpop.f32.mrf.mxu0
    %v2919 = vpop.f32.mrf.mxu0
    %v2920 = vadd.f32 0.0, %v2919
    %v2921 = vpop.f32.mrf.mxu0
    %2922 = vdwg.mxu0
    %v2923 = vmul.f32 %v2917, 0.35355338
    %v2924 = vmul.f32 %v2920, 0.35355338
    %v2925 = vadd.f32 %v2923, %v87
    %v2926 = vadd.f32 %v2924, %v88
    %v2927 = vsel %vm309, %v2925, -inf
    %2928 = vmax.xlane.f32.xlu0 %v2927
    %v2929 = vpop.xlane.xlu0 %2928
    %v2930 = vsel %vm309, %v2926, -inf
    %2931 = vmax.xlane.f32.xlu0 %v2930
    %v2932 = vpop.xlane.xlu0 %2931
    %v2933 = vsub.f32 %v2925, %v2929
    %v2934 = vsub.f32 %v2926, %v2932
    %v2935 = vmul.f32 %v2933, 1.442695
    %v2936 = vpow.pop %v2935
    %v2937 = vmul.f32 %v2934, 1.442695
    %v2938 = vpow.pop %v2937
    %v2939 = vsel %vm309, %v2936, 0.0
    %2940 = vadd.xlane.f32.xlu0 %v2939
    %v2941 = vpop.xlane.xlu0 %2940
    %v2942 = vsel %vm309, %v2938, 0.0
    %2943 = vadd.xlane.f32.xlu0 %v2942
    %v2944 = vpop.xlane.xlu0 %2943
    %v2945 = vrcp.pop %v2941
    %v2946 = vrcp.pop %v2944
    %v2947 = vmul.f32 %v2936, %v2945
    %v2948 = vmul.f32 %v2938, %v2946
    %v2949 = vpack.c.bf16 %v2948, %v2947
    %v2950 = vpack.c.bf16 %v2871, %v2868
    %v2952 = vsel %vm309, %v2949, 0
    %2954 = vmatprep.subr.bf16.mxu0 0
    %2955 = vmatpush1.bf16.msra.mxu0 0
    %2956 = vmatprep.subr.bf16.mxu0 0
    %2957 = vmatpush1.bf16.msra.mxu0 0
    %2958 = vmatprep.subr.bf16.mxu0 0
    %2959 = vmatpush1.bf16.msra.mxu0 0
    %2960 = vmatprep.subr.bf16.mxu0 0
    %2961 = vmatpush1.bf16.msra.mxu0 0
    %2962 = vmatprep.subr.bf16.mxu0 0
    %2963 = vmatpush1.bf16.msra.mxu0 0
    %2964 = vmatprep.subr.bf16.mxu0 0
    %2965 = vmatpush1.bf16.msra.mxu0 0
    %2966 = vmatprep.subr.bf16.mxu0 0
    %2967 = vmatpush1.bf16.msra.mxu0 0
    %2968 = vmatprep.subr.bf16.mxu0 0
    %2969 = vmatpush1.bf16.msra.mxu0 %v2950
    %2970 = vmatprep.subr.bf16.mxu0 0
    %2971 = vmatpush2.bf16.msra.mxu0 0
    %2972 = vmatprep.subr.bf16.mxu0 0
    %2973 = vmatpush2.bf16.msra.mxu0 0
    %2974 = vmatprep.subr.bf16.mxu0 0
    %2975 = vmatpush2.bf16.msra.mxu0 0
    %2976 = vmatprep.subr.bf16.mxu0 0
    %2977 = vmatpush2.bf16.msra.mxu0 0
    %2978 = vmatprep.subr.bf16.mxu0 0
    %2979 = vmatpush2.bf16.msra.mxu0 0
    %2980 = vmatprep.subr.bf16.mxu0 0
    %2981 = vmatpush2.bf16.msra.mxu0 0
    %2982 = vmatprep.subr.bf16.mxu0 0
    %2983 = vmatpush2.bf16.msra.mxu0 0
    %2984 = vmatprep.subr.bf16.mxu0 0
    %2985 = vmatpush2.bf16.msra.mxu0 0
    %2986 = vmatprep.mubr.bf16.mxu0 0
    %2987 = vmatmul.mubr.bf16.gmra.mxu0 %v2952
    %v2988 = vpop.f32.mrf.mxu0
    %v2989 = vadd.f32 0.0, %v2988
    %v2990 = vpop.f32.mrf.mxu0
    %v2991 = vpop.f32.mrf.mxu0
    %v2992 = vadd.f32 0.0, %v2991
    %v2993 = vpop.f32.mrf.mxu0
    %2994 = vdwg.mxu0
    %s2995 = scalar_lea.vmem %s9, 56
    %v2996 = vld [vmem:[%s2995] sm:$0xff]
    %v2997 = vpack.c.bf16 %v2992, %v2989
    %v2998 = vpack.c.bf16 %v2996, %v2996
    %v3000 = vsel %vm257, %v2997, 0
    %v3003 = vsel %vm677, %v2998, 0
    %3005 = vmatprep.subr.bf16.mxu0 0
    %3006 = vmatpush1.bf16.msra.mxu0 0
    %3007 = vmatprep.subr.bf16.mxu0 0
    %3008 = vmatpush1.bf16.msra.mxu0 0
    %3009 = vmatprep.subr.bf16.mxu0 0
    %3010 = vmatpush1.bf16.msra.mxu0 0
    %3011 = vmatprep.subr.bf16.mxu0 0
    %3012 = vmatpush1.bf16.msra.mxu0 0
    %3013 = vmatprep.subr.bf16.mxu0 0
    %3014 = vmatpush1.bf16.msra.mxu0 0
    %3015 = vmatprep.subr.bf16.mxu0 0
    %3016 = vmatpush1.bf16.msra.mxu0 0
    %3017 = vmatprep.subr.bf16.mxu0 0
    %3018 = vmatpush1.bf16.msra.mxu0 0
    %3019 = vmatprep.subr.bf16.mxu0 0
    %3020 = vmatpush1.bf16.msra.mxu0 %v3003
    %3021 = vmatprep.subr.bf16.mxu0 0
    %3022 = vmatpush2.bf16.msra.mxu0 0
    %3023 = vmatprep.subr.bf16.mxu0 0
    %3024 = vmatpush2.bf16.msra.mxu0 0
    %3025 = vmatprep.subr.bf16.mxu0 0
    %3026 = vmatpush2.bf16.msra.mxu0 0
    %3027 = vmatprep.subr.bf16.mxu0 0
    %3028 = vmatpush2.bf16.msra.mxu0 0
    %3029 = vmatprep.subr.bf16.mxu0 0
    %3030 = vmatpush2.bf16.msra.mxu0 0
    %3031 = vmatprep.subr.bf16.mxu0 0
    %3032 = vmatpush2.bf16.msra.mxu0 0
    %3033 = vmatprep.subr.bf16.mxu0 0
    %3034 = vmatpush2.bf16.msra.mxu0 0
    %3035 = vmatprep.subr.bf16.mxu0 0
    %3036 = vmatpush2.bf16.msra.mxu0 0
    %3037 = vmatprep.mubr.bf16.mxu0 0
    %3038 = vmatmul.mubr.bf16.gmra.mxu0 %v3000
    %v3039 = vpop.f32.mrf.mxu0
    %v3040 = vadd.f32 0.0, %v3039
    %v3041 = vpop.f32.mrf.mxu0
    %v3042 = vpop.f32.mrf.mxu0
    %v3043 = vadd.f32 0.0, %v3042
    %v3044 = vpop.f32.mrf.mxu0
    %3045 = vdwg.mxu0
    %v3046 = vadd.f32 %v2704, %v3040
    %v3047 = vadd.f32 %v2705, %v3043
    %v3048 = vadd.f32 %v1678, %v3046
    %v3049 = vadd.f32 %v1679, %v3047
    %s3050 = scalar_lea.vmem %s10, 1
    %v3051 = vld [vmem:[%s3050] sm:$0x1]
    %v3053 = vlaneseq
    %v3054 = vshrl.u32 %v3053, 7
    %v3055 = vsub.s32 0, %v3054
    %v3056 = vrot.slane %v3051, %v3055
    %v3058 = vadd.f32 %v3048, %v3056
    %v3059 = vadd.f32 %v3049, %v3056
    %s3060 = scalar_lea.vmem %s15, 1
    %v3061 = vld [vmem:[%s3060] sm:$0x1]
    %s3062 = scalar_lea.vmem %s16, 1
    %v3063 = vld [vmem:[%s3062] sm:$0x1]
    %v3064 = vsel %vm78, %v3058, 0.0
    %3065 = vadd.xlane.f32.xlu0 %v3064
    %v3066 = vpop.xlane.xlu0 %3065
    %v3067 = vsel %vm78, %v3059, 0.0
    %3068 = vadd.xlane.f32.xlu0 %v3067
    %v3069 = vpop.xlane.xlu0 %3068
    %v3070 = vmul.f32 %v3066, %v1472
    %v3071 = vmul.f32 %v3069, %v1472
    %v3072 = vsub.f32 %v3058, %v3070
    %v3073 = vsub.f32 %v3059, %v3071
    %v3074 = vmul.f32 %v3072, %v3072
    %v3075 = vmul.f32 %v3073, %v3073
    %v3076 = vsel %vm78, %v3074, 0.0
    %3077 = vadd.xlane.f32.xlu0 %v3076
    %v3078 = vpop.xlane.xlu0 %3077
    %v3079 = vsel %vm78, %v3075, 0.0
    %3080 = vadd.xlane.f32.xlu0 %v3079
    %v3081 = vpop.xlane.xlu0 %3080
    %v3082 = vmul.f32 %v3078, %v1472
    %v3083 = vmul.f32 %v3081, %v1472
    %v3084 = vadd.f32 %v3082, 1e-05
    %v3085 = vadd.f32 %v3083, 1e-05
    %v3086 = vrsqrt.pop %v3084
    %v3087 = vrsqrt.pop %v3085
    %v3088 = vmul.f32 %v3072, %v3086
    %v3089 = vmul.f32 %v3073, %v3087
    %v3091 = vlaneseq
    %v3092 = vshrl.u32 %v3091, 7
    %v3093 = vsub.s32 0, %v3092
    %v3094 = vrot.slane %v3061, %v3093
    %v3096 = vmul.f32 %v3088, %v3094
    %v3097 = vmul.f32 %v3089, %v3094
    %v3099 = vlaneseq
    %v3100 = vshrl.u32 %v3099, 7
    %v3101 = vsub.s32 0, %v3100
    %v3102 = vrot.slane %v3063, %v3101
    %v3104 = vadd.f32 %v3096, %v3102
    %v3105 = vadd.f32 %v3097, %v3102
    %s3106 = scalar_lea.vmem %s11, 32
    %v3107 = vld [vmem:[%s3106] sm:$0xff]
    %v3108 = vld [vmem:[%s3106 + $0x8] sm:$0xff]
    %v3109 = vld [vmem:[%s3106 + $0x10] sm:$0xff]
    %v3110 = vld [vmem:[%s3106 + $0x18] sm:$0xff]
    %v3111 = vpack.c.bf16 %v3105, %v3104
    %v3112 = vpack.c.bf16 %v3108, %v3107
    %v3113 = vpack.c.bf16 %v3110, %v3109
    %s3114 = scalar_lea.vmem %s12, 1
    %v3115 = vld [vmem:[%s3114] sm:$0x1]
    %v3117 = vlaneseq
    %v3118 = vshrl.u32 %v3117, 7
    %v3119 = vsub.s32 0, %v3118
    %v3120 = vrot.slane %v3115, %v3119
    %v3123 = vsel %vm78, %v3111, 0
    %3125 = vmatprep.subr.bf16.mxu0 0
    %3126 = vmatpush1.bf16.msra.mxu0 0
    %3127 = vmatprep.subr.bf16.mxu0 0
    %3128 = vmatpush1.bf16.msra.mxu0 0
    %3129 = vmatprep.subr.bf16.mxu0 0
    %3130 = vmatpush1.bf16.msra.mxu0 0
    %3131 = vmatprep.subr.bf16.mxu0 0
    %3132 = vmatpush1.bf16.msra.mxu0 0
    %3133 = vmatprep.subr.bf16.mxu0 0
    %3134 = vmatpush1.bf16.msra.mxu0 0
    %3135 = vmatprep.subr.bf16.mxu0 0
    %3136 = vmatpush1.bf16.msra.mxu0 0
    %3137 = vmatprep.subr.bf16.mxu0 0
    %3138 = vmatpush1.bf16.msra.mxu0 %v3113
    %3139 = vmatprep.subr.bf16.mxu0 0
    %3140 = vmatpush1.bf16.msra.mxu0 %v3112
    %3141 = vmatprep.subr.bf16.mxu0 0
    %3142 = vmatpush2.bf16.msra.mxu0 0
    %3143 = vmatprep.subr.bf16.mxu0 0
    %3144 = vmatpush2.bf16.msra.mxu0 0
    %3145 = vmatprep.subr.bf16.mxu0 0
    %3146 = vmatpush2.bf16.msra.mxu0 0
    %3147 = vmatprep.subr.bf16.mxu0 0
    %3148 = vmatpush2.bf16.msra.mxu0 0
    %3149 = vmatprep.subr.bf16.mxu0 0
    %3150 = vmatpush2.bf16.msra.mxu0 0
    %3151 = vmatprep.subr.bf16.mxu0 0
    %3152 = vmatpush2.bf16.msra.mxu0 0
    %3153 = vmatprep.subr.bf16.mxu0 0
    %3154 = vmatpush2.bf16.msra.mxu0 0
    %3155 = vmatprep.subr.bf16.mxu0 0
    %3156 = vmatpush2.bf16.msra.mxu0 0
    %3157 = vmatprep.mubr.bf16.mxu0 0
    %3158 = vmatmul.mubr.bf16.gmra.mxu0 %v3123
    %v3159 = vpop.f32.mrf.mxu0
    %v3160 = vadd.f32 %v3120, %v3159
    %v3161 = vpop.f32.mrf.mxu0
    %v3162 = vpop.f32.mrf.mxu0
    %v3163 = vadd.f32 %v3120, %v3162
    %v3164 = vpop.f32.mrf.mxu0
    %3165 = vdwg.mxu0
    %v3166 = vmax.f32 %v3160, 0.0
    %v3167 = vmax.f32 %v3163, 0.0
    %s3168 = scalar_lea.vmem %s13, 64
    %v3169 = vld [vmem:[%s3168] sm:$0xff]
    %v3170 = vld [vmem:[%s3168 + $0x8] sm:$0xff]
    %v3171 = vld [vmem:[%s3168 + $0x10] sm:$0xff]
    %v3172 = vld [vmem:[%s3168 + $0x18] sm:$0xff]
    %v3173 = vld [vmem:[%s3168 + $0x20] sm:$0xff]
    %v3174 = vld [vmem:[%s3168 + $0x28] sm:$0xff]
    %v3175 = vld [vmem:[%s3168 + $0x30] sm:$0xff]
    %v3176 = vld [vmem:[%s3168 + $0x38] sm:$0xff]
    %v3177 = vpack.c.bf16 %v3167, %v3166
    %v3178 = vpack.c.bf16 %v3170, %v3169
    %v3179 = vpack.c.bf16 %v3172, %v3171
    %v3180 = vpack.c.bf16 %v3174, %v3173
    %v3181 = vpack.c.bf16 %v3176, %v3175
    %s3182 = scalar_lea.vmem %s14, 1
    %v3183 = vld [vmem:[%s3182] sm:$0x1]
    %v3185 = vlaneseq
    %v3186 = vshrl.u32 %v3185, 7
    %v3187 = vsub.s32 0, %v3186
    %v3188 = vrot.slane %v3183, %v3187
    %v3191 = vsel %vm1589, %v3177, 0
    %3193 = vmatprep.subr.bf16.mxu0 0
    %3194 = vmatpush1.bf16.msra.mxu0 0
    %3195 = vmatprep.subr.bf16.mxu0 0
    %3196 = vmatpush1.bf16.msra.mxu0 0
    %3197 = vmatprep.subr.bf16.mxu0 0
    %3198 = vmatpush1.bf16.msra.mxu0 0
    %3199 = vmatprep.subr.bf16.mxu0 0
    %3200 = vmatpush1.bf16.msra.mxu0 0
    %3201 = vmatprep.subr.bf16.mxu0 0
    %3202 = vmatpush1.bf16.msra.mxu0 %v3181
    %3203 = vmatprep.subr.bf16.mxu0 0
    %3204 = vmatpush1.bf16.msra.mxu0 %v3180
    %3205 = vmatprep.subr.bf16.mxu0 0
    %3206 = vmatpush1.bf16.msra.mxu0 %v3179
    %3207 = vmatprep.subr.bf16.mxu0 0
    %3208 = vmatpush1.bf16.msra.mxu0 %v3178
    %3209 = vmatprep.subr.bf16.mxu0 0
    %3210 = vmatpush2.bf16.msra.mxu0 0
    %3211 = vmatprep.subr.bf16.mxu0 0
    %3212 = vmatpush2.bf16.msra.mxu0 0
    %3213 = vmatprep.subr.bf16.mxu0 0
    %3214 = vmatpush2.bf16.msra.mxu0 0
    %3215 = vmatprep.subr.bf16.mxu0 0
    %3216 = vmatpush2.bf16.msra.mxu0 0
    %3217 = vmatprep.subr.bf16.mxu0 0
    %3218 = vmatpush2.bf16.msra.mxu0 0
    %3219 = vmatprep.subr.bf16.mxu0 0
    %3220 = vmatpush2.bf16.msra.mxu0 0
    %3221 = vmatprep.subr.bf16.mxu0 0
    %3222 = vmatpush2.bf16.msra.mxu0 0
    %3223 = vmatprep.subr.bf16.mxu0 0
    %3224 = vmatpush2.bf16.msra.mxu0 0
    %3225 = vmatprep.mubr.bf16.mxu0 0
    %3226 = vmatmul.mubr.bf16.gmra.mxu0 %v3191
    %v3227 = vpop.f32.mrf.mxu0
    %v3228 = vadd.f32 %v3188, %v3227
    %v3229 = vpop.f32.mrf.mxu0
    %v3230 = vpop.f32.mrf.mxu0
    %v3231 = vadd.f32 %v3188, %v3230
    %v3232 = vpop.f32.mrf.mxu0
    %3233 = vdwg.mxu0
    %v3234 = vadd.f32 %v3104, %v3228
    %v3235 = vadd.f32 %v3105, %v3231
    %s3236 = scalar_lea.vmem %s17, 1
    %v3237 = vld [vmem:[%s3236] sm:$0x1]
    %s3238 = scalar_lea.vmem %s18, 1
    %v3239 = vld [vmem:[%s3238] sm:$0x1]
    %v3240 = vsel %vm78, %v3234, 0.0
    %3241 = vadd.xlane.f32.xlu0 %v3240
    %v3242 = vpop.xlane.xlu0 %3241
    %v3243 = vsel %vm78, %v3235, 0.0
    %3244 = vadd.xlane.f32.xlu0 %v3243
    %v3245 = vpop.xlane.xlu0 %3244
    %v3246 = vmul.f32 %v3242, %v1472
    %v3247 = vmul.f32 %v3245, %v1472
    %v3248 = vsub.f32 %v3234, %v3246
    %v3249 = vsub.f32 %v3235, %v3247
    %v3250 = vmul.f32 %v3248, %v3248
    %v3251 = vmul.f32 %v3249, %v3249
    %v3252 = vsel %vm78, %v3250, 0.0
    %3253 = vadd.xlane.f32.xlu0 %v3252
    %v3254 = vpop.xlane.xlu0 %3253
    %v3255 = vsel %vm78, %v3251, 0.0
    %3256 = vadd.xlane.f32.xlu0 %v3255
    %v3257 = vpop.xlane.xlu0 %3256
    %v3258 = vmul.f32 %v3254, %v1472
    %v3259 = vmul.f32 %v3257, %v1472
    %v3260 = vadd.f32 %v3258, 1e-05
    %v3261 = vadd.f32 %v3259, 1e-05
    %v3262 = vrsqrt.pop %v3260
    %v3263 = vrsqrt.pop %v3261
    %v3264 = vmul.f32 %v3248, %v3262
    %v3265 = vmul.f32 %v3249, %v3263
    %v3267 = vlaneseq
    %v3268 = vshrl.u32 %v3267, 7
    %v3269 = vsub.s32 0, %v3268
    %v3270 = vrot.slane %v3237, %v3269
    %v3272 = vmul.f32 %v3264, %v3270
    %v3273 = vmul.f32 %v3265, %v3270
    %v3275 = vlaneseq
    %v3276 = vshrl.u32 %v3275, 7
    %v3277 = vsub.s32 0, %v3276
    %v3278 = vrot.slane %v3239, %v3277
    %v3280 = vadd.f32 %v3272, %v3278
    %v3281 = vadd.f32 %v3273, %v3278
    %v3282 = vld [vmem:[%s19] sm:$0x1]
    %v3283 = vld [vmem:[%s20] sm:$0x1]
    %v3284 = vsel %vm78, %v3280, 0.0
    %3285 = vadd.xlane.f32.xlu0 %v3284
    %v3286 = vpop.xlane.xlu0 %3285
    %v3287 = vsel %vm78, %v3281, 0.0
    %3288 = vadd.xlane.f32.xlu0 %v3287
    %v3289 = vpop.xlane.xlu0 %3288
    %v3290 = vmul.f32 %v3286, %v1472
    %v3291 = vmul.f32 %v3289, %v1472
    %v3292 = vsub.f32 %v3280, %v3290
    %v3293 = vsub.f32 %v3281, %v3291
    %v3294 = vmul.f32 %v3292, %v3292
    %v3295 = vmul.f32 %v3293, %v3293
    %v3296 = vsel %vm78, %v3294, 0.0
    %3297 = vadd.xlane.f32.xlu0 %v3296
    %v3298 = vpop.xlane.xlu0 %3297
    %v3299 = vsel %vm78, %v3295, 0.0
    %3300 = vadd.xlane.f32.xlu0 %v3299
    %v3301 = vpop.xlane.xlu0 %3300
    %v3302 = vmul.f32 %v3298, %v1472
    %v3303 = vmul.f32 %v3301, %v1472
    %v3304 = vadd.f32 %v3302, 1e-05
    %v3305 = vadd.f32 %v3303, 1e-05
    %v3306 = vrsqrt.pop %v3304
    %v3307 = vrsqrt.pop %v3305
    %v3308 = vmul.f32 %v3292, %v3306
    %v3309 = vmul.f32 %v3293, %v3307
    %v3311 = vlaneseq
    %v3312 = vshrl.u32 %v3311, 7
    %v3313 = vsub.s32 0, %v3312
    %v3314 = vrot.slane %v3282, %v3313
    %v3316 = vmul.f32 %v3308, %v3314
    %v3317 = vmul.f32 %v3309, %v3314
    %v3319 = vlaneseq
    %v3320 = vshrl.u32 %v3319, 7
    %v3321 = vsub.s32 0, %v3320
    %v3322 = vrot.slane %v3283, %v3321
    %v3324 = vadd.f32 %v3316, %v3322
    %v3325 = vadd.f32 %v3317, %v3322
    %3326 = vst.msk [vmem:[#allocation6] sm:$0xff] %vm78, %v3324
    %3327 = vst.msk [vmem:[#allocation6 + $0x8] sm:$0xff] %vm78, %v3325
    // Predicated region
    $region86: #{tpu_custom_call.1} parent=1 // pred_check
      _
    $region87: #{tpu_custom_call.1} parent=1 // pred_check_branch
      %3329 = sbr.rel (0) target = $region89
    $region88: #{tpu_custom_call.1} parent=1 // pred_region
      %s3331 = ssub.s32 256, 256
      %3332 = vsyncadd [#allocation3], %s3331
      %s3333 = sshll.u32 [#allocation2], 4
      %s3334 = int_to_ptr.vmem [resolvable:$true] %s3333
      %3339 = dma.vmem_to_hbm [thread:$0]  %s3334, 256, %s21, [#allocation3], 128, 128, 8
    $region89: #{tpu_custom_call.1} parent=1 // pred_fallthru
      _
    // Predicated region
    $region90: #{tpu_custom_call.1} parent=1 // pred_check
      _
    $region91: #{tpu_custom_call.1} parent=1 // pred_check_branch
      %3341 = sbr.rel (0) target = $region93
    $region92: #{tpu_custom_call.1} parent=1 // pred_region
      %s3343 = ssub.s32 256, 256
      %3344 = vsyncadd [#allocation5], %s3343
      %s3345 = sshll.u32 [#allocation4], 4
      %s3346 = int_to_ptr.vmem [resolvable:$true] %s3345
      %3351 = dma.vmem_to_hbm [thread:$0]  %s3346, 256, %s22, [#allocation5], 128, 128, 8
    $region93: #{tpu_custom_call.1} parent=1 // pred_fallthru
      _
    // Predicated region
    $region94: #{tpu_custom_call.1} parent=1 // pred_check
      _
    $region95: #{tpu_custom_call.1} parent=1 // pred_check_branch
      %3353 = sbr.rel (0) target = $region97
    $region96: #{tpu_custom_call.1} parent=1 // pred_region
      %s3355 = ssub.s32 256, 256
      %3356 = vsyncadd [#allocation5], %s3355
      %s3357 = sshll.u32 [#allocation6], 4
      %s3358 = int_to_ptr.vmem [resolvable:$true] %s3357
      %3363 = dma.vmem_to_hbm [thread:$0]  %s3358, 256, %s23, [#allocation5], 128, 128, 8
    $region97: #{tpu_custom_call.1} parent=1 // pred_fallthru
      _
    // Predicated region
    $region98: #{tpu_custom_call.1} parent=1 // pred_check
      _
    $region99: #{tpu_custom_call.1} parent=1 // pred_check_branch
      %3365 = sbr.rel (0) target = $region101
    $region100: #{tpu_custom_call.1} parent=1 // pred_region
      %3366 = dma.done [#allocation3], 256
    $region101: #{tpu_custom_call.1} parent=1 // pred_fallthru
      _
    // Predicated region
    $region102: #{tpu_custom_call.1} parent=1 // pred_check
      _
    $region103: #{tpu_custom_call.1} parent=1 // pred_check_branch
      %3368 = sbr.rel (0) target = $region105
    $region104: #{tpu_custom_call.1} parent=1 // pred_region
      %3369 = dma.done [#allocation5], 256
    $region105: #{tpu_custom_call.1} parent=1 // pred_fallthru
      _
    // Predicated region
    $region106: #{tpu_custom_call.1} parent=1 // pred_check
      _
    $region107: #{tpu_custom_call.1} parent=1 // pred_check_branch
      %3371 = sbr.rel (0) target = $region109
    $region108: #{tpu_custom_call.1} parent=1 // pred_region
      %3372 = dma.done [#allocation5], 256
    $region109: #{tpu_custom_call.1} parent=1 // pred_fallthru
      _
    %3373 = vsyncpa [#allocation3], 1
    %3374 = vsyncpa [#allocation5], 1

</llo_original>
